<compile_context>
chip_gen: v7x
topology: tpu7x:2x2x1
jax: 0.10.0
libtpu: 0.0.40
codegen_flags: <defaults>
</compile_context>

<pallas_src>
import math

import jax
import jax.numpy as jnp
from jax.experimental import pallas as pl
from jax.experimental.pallas import tpu as pltpu

_MASK_VALUE = -0.7 * float(jnp.finfo(jnp.float32).max)


def _pick_tile(dim, cap, align):
    """Largest `align`-multiple <= cap dividing dim; full dim if dim <= cap."""
    if dim <= cap:
        return dim
    t = (min(cap, dim) // align) * align
    while t >= align:
        if dim % t == 0:
            return t
        t -= align
    return dim  # full extent is always legal


def _lane_broadcast(x, width):
    """(rows, 128) with all lanes equal per row -> (rows, width)."""
    reps = width // x.shape[-1]
    if reps == 1:
        return x
    return jnp.concatenate([x] * reps, axis=-1)


# ---------------------------------------------------------------------------
# Tiled linear: y = x @ w + b   (bf16 MXU, f32 accumulation)
# ---------------------------------------------------------------------------
def _linear_kernel(x_ref, w_ref, b_ref, o_ref, acc_ref):
    @pl.when(pl.program_id(2) == 0)
    def _init():
        acc_ref[...] = jnp.zeros(acc_ref.shape, jnp.float32)

    acc_ref[...] += jnp.dot(x_ref[...].astype(jnp.bfloat16),
                            w_ref[...].astype(jnp.bfloat16),
                            preferred_element_type=jnp.float32)

    @pl.when(pl.program_id(2) == pl.num_programs(2) - 1)
    def _finalize():
        o_ref[...] = (acc_ref[...] + b_ref[...].astype(jnp.float32)
                      ).astype(o_ref.dtype)


def linear(x2d, w, b, *, out_dtype=None, block_m=512, block_n=512, block_k=512):
    M, K = x2d.shape
    Kw, N = w.shape
    assert Kw == K
    if out_dtype is None:
        out_dtype = x2d.dtype
    # 128-aligned tiles keep the 256-wide MXU full and blocks lane-dense.
    tm = _pick_tile(M, block_m, 128)
    tn = _pick_tile(N, block_n, 128)
    tk = _pick_tile(K, block_k, 128)

    out_isz = jnp.dtype(out_dtype).itemsize
    cost = pl.CostEstimate(
        flops=2 * M * N * K,
        transcendentals=0,
        bytes_accessed=int(M * K * x2d.dtype.itemsize + K * N * w.dtype.itemsize
                           + M * N * out_isz + N * 4))

    return pl.pallas_call(
        _linear_kernel,
        out_shape=jax.ShapeDtypeStruct((M, N), out_dtype),
        grid=(M // tm, N // tn, K // tk),
        in_specs=[
            pl.BlockSpec((tm, tk), lambda i, j, k: (i, k)),
            pl.BlockSpec((tk, tn), lambda i, j, k: (k, j)),
            pl.BlockSpec((1, tn), lambda i, j, k: (0, j)),
        ],
        out_specs=pl.BlockSpec((tm, tn), lambda i, j, k: (i, j)),
        scratch_shapes=[pltpu.VMEM((tm, tn), jnp.float32)],
        compiler_params=pltpu.CompilerParams(
            dimension_semantics=("parallel", "parallel", "arbitrary")),
        cost_estimate=cost,
    )(x2d, w, b.reshape(1, N))


# ---------------------------------------------------------------------------
# Flash causal attention over a packed (B, T, 3C) qkv tensor
# (lower-triangular grid via scalar prefetch; bf16 MXU; f32 online softmax)
# ---------------------------------------------------------------------------
def _flash_attn_kernel(qi_tbl, ki_tbl, q_ref, k_ref, v_ref, o_ref,
                       m_sc, l_sc, acc_sc):
    _, tq, hd = q_ref.shape
    tk = k_ref.shape[1]
    m_ratio = tq // tk            # kv tiles per q tile along the diagonal band

    s_idx = pl.program_id(2)
    qi = qi_tbl[s_idx]            # q-tile index for this step (SMEM scalar)
    ki = ki_tbl[s_idx]            # kv-tile index for this step

    @pl.when(ki == 0)
    def _init():
        m_sc[...] = jnp.full(m_sc.shape, _MASK_VALUE, jnp.float32)
        l_sc[...] = jnp.zeros(l_sc.shape, jnp.float32)
        acc_sc[...] = jnp.zeros(acc_sc.shape, jnp.float32)

    def _update(apply_mask):
        # 1/sqrt(hd) is pre-folded into the q columns of w_attn (param prep),
        # so q is used as-is. bf16 operands, f32 accumulation.
        q = q_ref[0].astype(jnp.bfloat16)          # (tq, hd)
        k = k_ref[0].astype(jnp.bfloat16)          # (tk, hd)
        v = v_ref[0].astype(jnp.bfloat16)          # (tk, hd)

        # QK^T as a contraction over hd (no explicit transpose of the K tile).
        s = jax.lax.dot_general(q, k, (((1,), (1,)), ((), ())),
                                preferred_element_type=jnp.float32)  # (tq, tk)

        if apply_mask:
            # Tile overlaps the diagonal: query row (qi*tq + r) may attend key
            # col (ki*tk + c) iff c <= r + offset, offset = qi*tq - ki*tk <= 0.
            offset = qi * tq - ki * tk
            row = jax.lax.broadcasted_iota(jnp.int32, (tq, tk), 0)
            col = jax.lax.broadcasted_iota(jnp.int32, (tq, tk), 1)
            s = jnp.where(col <= row + offset, s, _MASK_VALUE)

        # Online softmax; stats kept lane-dense (tq, 128), all lanes equal.
        m_prev = m_sc[...]                                        # (tq, 128)
        m_new = jnp.maximum(m_prev, jnp.max(s, axis=-1, keepdims=True))
        alpha = jnp.exp(m_prev - m_new)                           # (tq, 128)
        p = jnp.exp(s - _lane_broadcast(m_new, tk))               # (tq, tk)
        l_sc[...] = alpha * l_sc[...] + jnp.sum(p, axis=-1, keepdims=True)
        acc_sc[...] = _lane_broadcast(alpha, hd) * acc_sc[...] + \
            jax.lax.dot_general(p.astype(jnp.bfloat16), v,
                                (((1,), (0,)), ((), ())),
                                preferred_element_type=jnp.float32)
        m_sc[...] = m_new

    # Fully-visible KV tiles: no iota / no where (mask is a no-op there).
    @pl.when(ki < qi * m_ratio)
    def _no_mask():
        _update(apply_mask=False)

    # Tiles overlapping the diagonal. (The triangular grid never emits tiles
    # strictly above the diagonal, so no work is wasted on fully-masked tiles.)
    @pl.when(ki >= qi * m_ratio)
    def _with_mask():
        _update(apply_mask=True)

    # Last KV tile contributing to this q tile -> normalize and write out.
    @pl.when(ki == (qi + 1) * m_ratio - 1)
    def _finalize():
        l = _lane_broadcast(l_sc[...], hd)
        # Exact divide: runs once per q tile, negligible vs. per-step work.
        o_ref[0] = (acc_sc[...] / l).astype(o_ref.dtype)


def flash_causal_attention(qkv, n_head, *, block_q=512, block_k=256):
    """qkv: (B, T, 3C) packed projections -> (B, T, C) head-merged attention."""
    B, T, C3 = qkv.shape
    C = C3 // 3
    H = n_head
    assert C % H == 0
    hd = C // H
    # TODO(synk): for hd < 128 (e.g. GPT-2's hd=64), pack Hc heads per grid step
    # (Hc*hd = 128) to keep loads/stores lane-dense; this kernel requires
    # hd % 128 == 0 and T % 128 == 0.
    assert hd % 128 == 0, "head_dim must be a multiple of 128 for this kernel"
    assert T % 128 == 0, "sequence length must be a multiple of 128"

    tk = _pick_tile(T, block_k, 128)          # kv tile (lane/MXU aligned)
    tq = _pick_tile(T, block_q, tk)           # q tile, multiple of tk
    assert T % tq == 0 and tq % tk == 0
    nq = T // tq
    m_ratio = tq // tk

    # Lower-triangular step tables: for each q tile, only the kv tiles at or
    # below the diagonal.  Consumed by the index_maps via scalar prefetch.
    qi_list, ki_list = [], []
    for qi in range(nq):
        for ki in range((qi + 1) * m_ratio):
            qi_list.append(qi)
            ki_list.append(ki)
    n_steps = len(qi_list)
    qi_of = jnp.asarray(qi_list, dtype=jnp.int32)
    ki_of = jnp.asarray(ki_list, dtype=jnp.int32)

    # q / k / v for head h live at hd-wide column blocks h, H+h, 2H+h of qkv.
    # q and the output keep the same block index across a q row, so Pallas only
    # DMAs them once per row; k/v blocks change every step (and never fetch
    # tiles above the diagonal).
    q_spec = pl.BlockSpec((1, tq, hd), lambda b, h, s, qt, kt: (b, qt[s], h))
    k_spec = pl.BlockSpec((1, tk, hd), lambda b, h, s, qt, kt: (b, kt[s], H + h))
    v_spec = pl.BlockSpec((1, tk, hd), lambda b, h, s, qt, kt: (b, kt[s], 2 * H + h))
    o_spec = pl.BlockSpec((1, tq, hd), lambda b, h, s, qt, kt: (b, qt[s], h))

    isz = qkv.dtype.itemsize
    cost = pl.CostEstimate(
        flops=int(4 * B * H * n_steps * tq * tk * hd),          # QK^T + PV (causal)
        transcendentals=int(B * H * n_steps * tq * tk),
        bytes_accessed=int(B * H * isz * hd * (2 * nq * tq + 2 * n_steps * tk)))

    grid_spec = pltpu.PrefetchScalarGridSpec(
        num_scalar_prefetch=2,
        grid=(B, H, n_steps),
        in_specs=[q_spec, k_spec, v_spec],
        out_specs=o_spec,
        scratch_shapes=[
            pltpu.VMEM((tq, 128), jnp.float32),   # running max m (lane-dense)
            pltpu.VMEM((tq, 128), jnp.float32),   # running denom l (lane-dense)
            pltpu.VMEM((tq, hd), jnp.float32),    # unnormalized output acc
        ])

    return pl.pallas_call(
        _flash_attn_kernel,
        grid_spec=grid_spec,
        out_shape=jax.ShapeDtypeStruct((B, T, C), qkv.dtype),
        compiler_params=pltpu.CompilerParams(
            dimension_semantics=("parallel", "parallel", "arbitrary")),
        cost_estimate=cost,
    )(qi_of, ki_of, qkv, qkv, qkv)


# ---------------------------------------------------------------------------
# Parameter prep + module forward
# ---------------------------------------------------------------------------
def prepare_params(raw_params, n_head, compute_dtype=jnp.bfloat16):
    """Fold 1/sqrt(head_dim) into the q columns of w_attn / b_attn (done once,
    at parameter-prep time) and store the weights in the MXU compute dtype."""
    C = raw_params["w_proj"].shape[0]
    hd = C // n_head
    scale = 1.0 / math.sqrt(hd)
    col_scale = jnp.concatenate(
        [jnp.full((C,), scale, jnp.float32), jnp.ones((2 * C,), jnp.float32)])
    w_attn = raw_params["w_attn"].astype(jnp.float32) * col_scale[None, :]
    b_attn = raw_params["b_attn"].astype(jnp.float32) * col_scale
    return {
        "w_attn": w_attn.astype(compute_dtype),
        "b_attn": b_attn,                                        # bias stays f32
        "w_proj": raw_params["w_proj"].astype(compute_dtype),
        "b_proj": raw_params["b_proj"].astype(jnp.float32),
    }


def causal_self_attention_forward(x, params, n_head):
    """Expects params produced by prepare_params (scale pre-folded)."""
    B, T, C = x.shape
    assert C % n_head == 0

    # fused qkv projection (tiled bf16-MXU Pallas matmul); qkv kept in bf16.
    qkv = linear(x.reshape(B * T, C), params["w_attn"], params["b_attn"],
                 out_dtype=jnp.bfloat16)
    qkv = qkv.reshape(B, T, 3 * C)

    # flash causal attention: reads q/k/v straight from the packed qkv tensor,
    # writes a head-merged (B, T, C) bf16 output -- no split/merge transposes.
    y = flash_causal_attention(qkv, n_head)

    # output projection back to x.dtype.
    y = linear(y.reshape(B * T, C), params["w_proj"], params["b_proj"],
               out_dtype=x.dtype)
    return y.reshape(B, T, C)


# Pure-JAX f32 reference (uses the raw, un-folded parameters).
def _reference_forward(x, raw_params, n_head):
    B, T, C = x.shape
    hd = C // n_head
    qkv = x @ raw_params["w_attn"] + raw_params["b_attn"]
    q, k, v = jnp.split(qkv, 3, axis=2)
    q = q.reshape(B, T, n_head, hd).transpose(0, 2, 1, 3)
    k = k.reshape(B, T, n_head, hd).transpose(0, 2, 1, 3)
    v = v.reshape(B, T, n_head, hd).transpose(0, 2, 1, 3)
    s = jnp.einsum("bhqd,bhkd->bhqk", q, k) / math.sqrt(hd)
    mask = jnp.tril(jnp.ones((T, T), dtype=bool))
    s = jnp.where(mask[None, None], s, -jnp.inf)
    p = jax.nn.softmax(s, axis=-1)
    y = jnp.einsum("bhqk,bhkd->bhqd", p, v)
    y = y.transpose(0, 2, 1, 3).reshape(B, T, C)
    return y @ raw_params["w_proj"] + raw_params["b_proj"]


if __name__ == "__main__":
    # hd = 128 (lane-aligned head blocks), T = 1024 -> tq=512/tk=256 gives a
    # 2-row triangular grid per (b, h): exercises masked + unmasked branches,
    # init/finalize transitions and multi-block linears, while staying small.
    B, T, C, n_head = 2, 1024, 256, 2

    key = jax.random.PRNGKey(0)
    k_x, k_wa, k_ba, k_wp, k_bp = jax.random.split(key, 5)

    x = jax.random.normal(k_x, (B, T, C), dtype=jnp.float32)
    raw_params = {
        # stored (in, out); equivalent to torch Linear(weight=(out,in)).T
        "w_attn": 0.02 * jax.random.normal(k_wa, (C, 3 * C), dtype=jnp.float32),
        "b_attn": 0.02 * jax.random.normal(k_ba, (3 * C,), dtype=jnp.float32),
        "w_proj": 0.02 * jax.random.normal(k_wp, (C, C), dtype=jnp.float32),
        "b_proj": 0.02 * jax.random.normal(k_bp, (C,), dtype=jnp.float32),
    }
    params = prepare_params(raw_params, n_head)

    out = causal_self_attention_forward(x, params, n_head)
    out = jax.block_until_ready(out)

    ref = _reference_forward(x, raw_params, n_head)
    assert out.shape == (B, T, C)
    assert out.dtype == x.dtype
    # bf16 MXU operands (f32 accumulation) => looser tolerance than pure f32.
    assert jnp.allclose(out, ref, atol=2e-2, rtol=2e-2), "mismatch vs reference"

    print("KERNEL_OK")
</pallas_src>

<mosaic_0001>
module attributes {stable_mosaic.version = 11 : i64} {
  func.func @_linear_kernel(%arg0: i32, %arg1: i32, %arg2: i32, %arg3: memref<512x256xf32, #tpu.memory_space<vmem>>, %arg4: memref<256x384xbf16, #tpu.memory_space<vmem>>, %arg5: memref<1x384xf32, #tpu.memory_space<vmem>>, %arg6: memref<512x384xbf16, #tpu.memory_space<vmem>>, %arg7: memref<512x384xf32, #tpu.memory_space<vmem>>) attributes {dimension_semantics = [#tpu.dimension_semantics<parallel>, #tpu.dimension_semantics<parallel>, #tpu.dimension_semantics<arbitrary>], iteration_bounds = array<i64: 4, 2, 1>, scalar_prefetch = 0 : i64, scratch_operands = 1 : i64, tpu.core_type = #tpu.core_type<tc>, window_params = [{transform_indices = @transform_0, window_bounds = array<i64: 512, 256>}, {transform_indices = @transform_1, window_bounds = array<i64: 256, 384>}, {transform_indices = @transform_2, window_bounds = array<i64: 1, 384>}, {transform_indices = @transform_3, window_bounds = array<i64: 512, 384>}]} {
    %c0_i32 = arith.constant 0 : i32
    %0 = arith.cmpi eq, %arg2, %c0_i32 : i32
    %1 = arith.extui %0 : i1 to i32
    %c0_i32_0 = arith.constant 0 : i32
    %2 = arith.cmpi ne, %1, %c0_i32_0 : i32
    scf.if %2 {
      %cst_10 = arith.constant 0.000000e+00 : f32
      %13 = vector.broadcast %cst_10 : f32 to vector<512x384xf32>
      %c0_11 = arith.constant 0 : index
      %c0_12 = arith.constant 0 : index
      %14 = vector.load %arg7[%c0_11, %c0_12] : memref<512x384xf32, #tpu.memory_space<vmem>>, vector<512x384xf32>
      tpu.vector_store %arg7[%c0_11, %c0_12], %13 {strides = array<i32>} : memref<512x384xf32, #tpu.memory_space<vmem>>, vector<512x384xf32>,
    } else {
    }
    %c0 = arith.constant 0 : index
    %c0_1 = arith.constant 0 : index
    %3 = vector.load %arg7[%c0, %c0_1] : memref<512x384xf32, #tpu.memory_space<vmem>>, vector<512x384xf32>
    %c0_2 = arith.constant 0 : index
    %c0_3 = arith.constant 0 : index
    %4 = vector.load %arg3[%c0_2, %c0_3] : memref<512x256xf32, #tpu.memory_space<vmem>>, vector<512x256xf32>
    %5 = arith.truncf %4 : vector<512x256xf32> to vector<512x256xbf16>
    %c0_4 = arith.constant 0 : index
    %c0_5 = arith.constant 0 : index
    %6 = vector.load %arg4[%c0_4, %c0_5] : memref<256x384xbf16, #tpu.memory_space<vmem>>, vector<256x384xbf16>
    %cst = arith.constant dense<0.000000e+00> : vector<512x384xf32>
    %7 = tpu.matmul %5, %6, %cst {dimension_numbers = #tpu.dot_dimension_numbers<[1], [0], [0], [1], [0, 0, 1, 1], [], []>} : vector<512x256xbf16>, vector<256x384xbf16>, vector<512x384xf32> -> vector<512x384xf32>
    %8 = arith.addf %3, %7 : vector<512x384xf32>
    %c0_6 = arith.constant 0 : index
    %c0_7 = arith.constant 0 : index
    %9 = vector.load %arg7[%c0_6, %c0_7] : memref<512x384xf32, #tpu.memory_space<vmem>>, vector<512x384xf32>
    tpu.vector_store %arg7[%c0_6, %c0_7], %8 {strides = array<i32>} : memref<512x384xf32, #tpu.memory_space<vmem>>, vector<512x384xf32>,
    %c0_i32_8 = arith.constant 0 : i32
    %10 = arith.cmpi eq, %arg2, %c0_i32_8 : i32
    %11 = arith.extui %10 : i1 to i32
    %c0_i32_9 = arith.constant 0 : i32
    %12 = arith.cmpi ne, %11, %c0_i32_9 : i32
    scf.if %12 {
      %c0_10 = arith.constant 0 : index
      %c0_11 = arith.constant 0 : index
      %13 = vector.load %arg7[%c0_10, %c0_11] : memref<512x384xf32, #tpu.memory_space<vmem>>, vector<512x384xf32>
      %c0_12 = arith.constant 0 : index
      %c0_13 = arith.constant 0 : index
      %14 = vector.load %arg5[%c0_12, %c0_13] : memref<1x384xf32, #tpu.memory_space<vmem>>, vector<1x384xf32>
      %15 = vector.broadcast %14 : vector<1x384xf32> to vector<512x384xf32>
      %16 = arith.addf %13, %15 : vector<512x384xf32>
      %17 = arith.truncf %16 : vector<512x384xf32> to vector<512x384xbf16>
      %c0_14 = arith.constant 0 : index
      %c0_15 = arith.constant 0 : index
      %18 = vector.load %arg6[%c0_14, %c0_15] : memref<512x384xbf16, #tpu.memory_space<vmem>>, vector<512x384xbf16>
      tpu.vector_store %arg6[%c0_14, %c0_15], %17 {strides = array<i32>} : memref<512x384xbf16, #tpu.memory_space<vmem>>, vector<512x384xbf16>,
    } else {
    }
    return
  }
  func.func @transform_0(%arg0: i32, %arg1: i32, %arg2: i32) -> (i32, i32) {
    %c0_i32 = arith.constant 0 : i32
    return %arg0, %arg2 : i32, i32
  }
  func.func @transform_1(%arg0: i32, %arg1: i32, %arg2: i32) -> (i32, i32) {
    %c0_i32 = arith.constant 0 : i32
    return %arg2, %arg1 : i32, i32
  }
  func.func @transform_2(%arg0: i32, %arg1: i32, %arg2: i32) -> (i32, i32) {
    %c0_i32 = arith.constant 0 : i32
    %c0_i32_0 = arith.constant 0 : i32
    return %c0_i32, %arg1 : i32, i32
  }
  func.func @transform_3(%arg0: i32, %arg1: i32, %arg2: i32) -> (i32, i32) {
    %c0_i32 = arith.constant 0 : i32
    return %arg0, %arg1 : i32, i32
  }
}

</mosaic_0001>

<llo_original>
// kernel: tpu_custom_call.1
$region0: #{tpu_custom_call.1}
  #allocation0 [shape = 'u32[]', space=smem, size = 0x4, offset = 0x4, fixed_abs, tag = 'smem constant byte address 0x4 - core index']
  #allocation1 [shape = 'u32[144,128]{1,0:T(1,128)}', space=vmem, size = 0x12000, scoped, tag = 'internal scratch']
  #allocation2 [shape = 'f32[512,384]{1,0:T(8,128)}', space=vmem, size = 0xc0000, scoped, tag = 'scratch operand']
  %s0 = inlined_call_operand.hbm [shape: f32[2048,256], index: 0, kind: input, shape index: {}]
  %s1 = inlined_call_operand.hbm [shape: bf16[256,768], index: 1, kind: input, shape index: {}]
  %s2 = inlined_call_operand.hbm [shape: f32[1,768], index: 2, kind: input, shape index: {}]
  %s3 = inlined_call_operand.hbm [shape: bf16[2048,768], index: 3, kind: output, shape index: {}]
  %s4 = sld [smem:[#allocation0]]
  $region65: #{tpu_custom_call.1} parent=0
    _
  %s6 = ssub.s32 1, %s4
  %s7 = scalar_select 0, %s6, %s4
  $region1: #{tpu_custom_call.1} parent=0
    #allocation3 [shape = 'u8[1048576]{0}', space=vmem, size = 0x100000, scoped, tag = 'input window, operand 0']
    #allocation4 [shape = 's32[2]{0}', space=sflag, size = 0x8, scoped, tag = 'scoped memory for tpu_custom_call.1']
    #allocation5 [shape = 's32[2]{0}', space=sflag, size = 0x8, scoped, tag = 'scoped memory for tpu_custom_call.1']
    #allocation6 [shape = 'u8[393216]{0}', space=vmem, size = 0x60000, scoped, tag = 'input window, operand 1']
    #allocation7 [shape = 's32[2]{0}', space=sflag, size = 0x8, scoped, tag = 'scoped memory for tpu_custom_call.1']
    #allocation8 [shape = 'u8[3072]{0}', space=vmem, size = 0xc00, scoped, tag = 'input window, operand 2']
    #allocation9 [shape = 'u8[786432]{0}', space=vmem, size = 0xc0000, scoped, tag = 'output window, operand 0']
    %8 = vsyncpa [#allocation4], 0
    %s9 = scalar_lea.sflag [#allocation4], 1
    %10 = vsyncpa %s9, 0
    %11 = vsyncpa [#allocation7], 0
    %s12 = scalar_lea.sflag [#allocation7], 1
    %13 = vsyncpa %s12, 0
    %14 = vsyncpa [#allocation5], 0
    %s15 = scalar_lea.sflag [#allocation5], 1
    %16 = vsyncpa %s15, 0
    loop: start=0, step=1, limit=10
    $region2: #{tpu_custom_call.1} parent=1 // loop_pre_header
      _
    $region3: #{tpu_custom_call.1} parent=1 // loop_header
      %s18 = sphi 0, %s22
      %p19 = scmp.ge.s32.totalorder %s18, 10
      %s25 = sphi 0, %s44
      %s26 = sphi 0, %s40
      %s27 = sphi 0, %s36
      %s28 = sphi 0, %s25
      %s29 = sphi 0, %s26
      %s30 = sphi 0, %s27
      %s31 = sphi 0, %s28
      %s32 = sphi 0, %s29
      %s33 = sphi 0, %s30
      %s49 = sphi 0, %s51
      %s52 = sphi 0, %s49
      %s53 = sphi 0, %s52
      %s69 = sphi 0, %s53
      %s77 = sphi 0, %s79
      %s80 = sphi 0, %s77
      %s81 = sphi 0, %s80
      %s97 = sphi 0, %s81
      %s103 = sphi 0, %s105
      %s106 = sphi 0, %s103
      %s107 = sphi 0, %s106
      %s123 = sphi 0, %s107
      %s131 = sphi 0, %s133
      %s134 = sphi 0, %s131
      %s135 = sphi 0, %s134
      %s151 = sphi 0, %s135
    $region4: #{tpu_custom_call.1} parent=1 // loop_header_branch
      %21 = sbr.rel (%p19) target = $region8
    $region5: #{tpu_custom_call.1} parent=1 // loop_body
      %s23 = ssub.s32 %s18, 1
      %s24 = ssub.s32 %s18, 2
      %s34 = sadd.s32 1, %s27
      %p35 = scmp.ge.s32.totalorder %s34, 1
      %s36 = scalar_select %p35, 0, %s34
      %s37 = sadd.s32 1, %s26
      %s38 = scalar_select %p35, %s37, %s26
      %p39 = scmp.ge.s32.totalorder %s38, 2
      %s40 = scalar_select %p39, 0, %s38
      %s41 = sadd.s32 1, %s25
      %s42 = scalar_select %p39, %s41, %s25
      %p43 = scmp.ge.s32.totalorder %s42, 4
      %s44 = scalar_select %p43, 0, %s42
      %s45 = ssub.s32 %s25, %s44
      %s46 = ssub.s32 %s27, %s36
      %s47 = sor.u32 %s45, %s46
      %p48 = scmp.eq.s32.totalorder %s47, 0
      %s50 = sadd.s32 %s49, 1
      %s51 = scalar_select %p48, %s49, %s50
      %p54 = pneg %p48
      %p55 = scmp.eq.s32.totalorder %s18, 7
      %p56 = por %p54, %p55
      %p57 = scmp.ne.s32.totalorder %s49, %s52
      %p58 = scmp.eq.s32.totalorder %s18, 0
      %p59 = por %p57, %p58
      %p60 = scmp.ne.s32.totalorder %s49, %s52
      %p61 = scmp.eq.s32.totalorder %s23, 7
      %p62 = por %p60, %p61
      %p63 = scmp.ne.s32.totalorder %s52, %s53
      %p64 = scmp.eq.s32.totalorder %s23, 0
      %p65 = por %p63, %p64
      %p66 = scmp.ne.s32.totalorder %s52, %s53
      %p67 = scmp.eq.s32.totalorder %s24, 7
      %p68 = por %p66, %p67
      %p70 = scmp.ne.s32.totalorder %s53, %s69
      %p71 = scmp.eq.s32.totalorder %s24, 0
      %p72 = por %p70, %p71
      %s73 = ssub.s32 %s27, %s36
      %s74 = ssub.s32 %s26, %s40
      %s75 = sor.u32 %s73, %s74
      %p76 = scmp.eq.s32.totalorder %s75, 0
      %s78 = sadd.s32 %s77, 1
      %s79 = scalar_select %p76, %s77, %s78
      %p82 = pneg %p76
      %p83 = scmp.eq.s32.totalorder %s18, 7
      %p84 = por %p82, %p83
      %p85 = scmp.ne.s32.totalorder %s77, %s80
      %p86 = scmp.eq.s32.totalorder %s18, 0
      %p87 = por %p85, %p86
      %p88 = scmp.ne.s32.totalorder %s77, %s80
      %p89 = scmp.eq.s32.totalorder %s23, 7
      %p90 = por %p88, %p89
      %p91 = scmp.ne.s32.totalorder %s80, %s81
      %p92 = scmp.eq.s32.totalorder %s23, 0
      %p93 = por %p91, %p92
      %p94 = scmp.ne.s32.totalorder %s80, %s81
      %p95 = scmp.eq.s32.totalorder %s24, 7
      %p96 = por %p94, %p95
      %p98 = scmp.ne.s32.totalorder %s81, %s97
      %p99 = scmp.eq.s32.totalorder %s24, 0
      %p100 = por %p98, %p99
      %s101 = ssub.s32 %s26, %s40
      %p102 = scmp.eq.s32.totalorder %s101, 0
      %s104 = sadd.s32 %s103, 1
      %s105 = scalar_select %p102, %s103, %s104
      %p108 = pneg %p102
      %p109 = scmp.eq.s32.totalorder %s18, 7
      %p110 = por %p108, %p109
      %p111 = scmp.ne.s32.totalorder %s103, %s106
      %p112 = scmp.eq.s32.totalorder %s18, 0
      %p113 = por %p111, %p112
      %p114 = scmp.ne.s32.totalorder %s103, %s106
      %p115 = scmp.eq.s32.totalorder %s23, 7
      %p116 = por %p114, %p115
      %p117 = scmp.ne.s32.totalorder %s106, %s107
      %p118 = scmp.eq.s32.totalorder %s23, 0
      %p119 = por %p117, %p118
      %p120 = scmp.ne.s32.totalorder %s106, %s107
      %p121 = scmp.eq.s32.totalorder %s24, 7
      %p122 = por %p120, %p121
      %p124 = scmp.ne.s32.totalorder %s107, %s123
      %p125 = scmp.eq.s32.totalorder %s24, 0
      %p126 = por %p124, %p125
      %s127 = ssub.s32 %s25, %s44
      %s128 = ssub.s32 %s26, %s40
      %s129 = sor.u32 %s127, %s128
      %p130 = scmp.eq.s32.totalorder %s129, 0
      %s132 = sadd.s32 %s131, 1
      %s133 = scalar_select %p130, %s131, %s132
      %p136 = pneg %p130
      %p137 = scmp.eq.s32.totalorder %s18, 7
      %p138 = por %p136, %p137
      %p139 = scmp.ne.s32.totalorder %s131, %s134
      %p140 = scmp.eq.s32.totalorder %s18, 0
      %p141 = por %p139, %p140
      %p142 = scmp.ne.s32.totalorder %s131, %s134
      %p143 = scmp.eq.s32.totalorder %s23, 7
      %p144 = por %p142, %p143
      %p145 = scmp.ne.s32.totalorder %s134, %s135
      %p146 = scmp.eq.s32.totalorder %s23, 0
      %p147 = por %p145, %p146
      %p148 = scmp.ne.s32.totalorder %s134, %s135
      %p149 = scmp.eq.s32.totalorder %s24, 7
      %p150 = por %p148, %p149
      %p152 = scmp.ne.s32.totalorder %s135, %s151
      %p153 = scmp.eq.s32.totalorder %s24, 0
      %p154 = por %p152, %p153
      %p155 = scmp.le.s32.totalorder 1, %s18
      %p156 = scmp.lt.s32.totalorder %s18, 9
      %p157 = pnand %p155, %p156
      %p158 = pneg %p157
      // Predicated region
      $region9: #{tpu_custom_call.1} parent=5 // pred_check
        _
      $region10: #{tpu_custom_call.1} parent=5 // pred_check_branch
        %160 = sbr.rel (%p157) target = $region12
      $region11: #{tpu_custom_call.1} parent=5 // pred_region
        %s161 = ssub.s32 %s18, 1
      $region12: #{tpu_custom_call.1} parent=5 // pred_fallthru
        _
      %p162 = scmp.lt.s32.totalorder %s18, 8
      // Predicated region
      $region13: #{tpu_custom_call.1} parent=5 // pred_check
        %p163 = pneg %p162
      $region14: #{tpu_custom_call.1} parent=5 // pred_check_branch
        %165 = sbr.rel (%p163) target = $region16
      $region15: #{tpu_custom_call.1} parent=5 // pred_region
        // Predicated region
        $region17: #{tpu_custom_call.1} parent=15 // pred_check
          %p166 = pneg %p59
        $region18: #{tpu_custom_call.1} parent=15 // pred_check_branch
          %168 = sbr.rel (%p166) target = $region20
        $region19: #{tpu_custom_call.1} parent=15 // pred_region
          %s169 = sand.u32 %s49, 1
          %s170 = scalar_lea.sflag [#allocation4], %s169
          %s171 = sand.u32 %s49, 1
          %s172 = smul.addr %s171, 1024
          %s173 = scalar_lea.vmem [#allocation3], %s172
          %s174 = smul.u32 64, %s25
          %s175 = smul.u32 2, %s27
          %s177 = ssub.s32 16384, 16384
          %178 = vsyncadd %s170, %s177
          %s179 = smul.addr %s174, 2
          %s180 = sadd.s32 %s175, %s179
          %s181 = smul.addr %s180, 128
          %s182 = scalar_lea.hbm %s0, %s181
          %s183 = sshll.u32 %s173, 4
          %s184 = int_to_ptr.vmem [resolvable:$true] %s183
          %189 = dma.hbm_to_vmem [thread:$0]  %s182, 16384, %s184, %s170, 256, 256, 16
        $region20: #{tpu_custom_call.1} parent=15 // pred_fallthru
          _
        // Predicated region
        $region21: #{tpu_custom_call.1} parent=15 // pred_check
          %p190 = pneg %p87
        $region22: #{tpu_custom_call.1} parent=15 // pred_check_branch
          %192 = sbr.rel (%p190) target = $region24
        $region23: #{tpu_custom_call.1} parent=15 // pred_region
          %s193 = sand.u32 %s18, 1
          %s194 = scalar_lea.sflag [#allocation7], %s193
          %s195 = sand.u32 %s77, 1
          %s196 = smul.addr %s195, 384
          %s197 = scalar_lea.vmem [#allocation6], %s196
          %s198 = smul.u32 32, %s27
          %s199 = smul.u32 3, %s26
          %s201 = ssub.s32 6144, 6144
          %202 = vsyncadd %s194, %s201
          %s203 = smul.addr %s198, 6
          %s204 = sadd.s32 %s199, %s203
          %s205 = smul.addr %s204, 64
          %s206 = scalar_lea.hbm %s1, %s205
          %s207 = sshll.u32 %s197, 4
          %s208 = int_to_ptr.vmem [resolvable:$true] %s207
          %213 = dma.hbm_to_vmem [thread:$0]  %s206, 6144, %s208, %s194, 384, 192, 12
        $region24: #{tpu_custom_call.1} parent=15 // pred_fallthru
          _
        // Predicated region
        $region25: #{tpu_custom_call.1} parent=15 // pred_check
          %p214 = pneg %p113
        $region26: #{tpu_custom_call.1} parent=15 // pred_check_branch
          %216 = sbr.rel (%p214) target = $region28
        $region27: #{tpu_custom_call.1} parent=15 // pred_region
          %s217 = sand.u32 %s18, 1
          %s218 = scalar_lea.sflag [#allocation7], %s217
          %s219 = sand.u32 %s103, 1
          %s220 = smul.addr %s219, 3
          %s221 = scalar_lea.vmem [#allocation8], %s220
          %s222 = smul.u32 3, %s26
          %s224 = ssub.s32 48, 48
          %225 = vsyncadd %s218, %s224
          %s226 = smul.addr %s222, 16
          %s227 = scalar_lea.hbm %s2, %s226
          %s229 = sshll.u32 %s221, 4
          %s230 = int_to_ptr.vmem [resolvable:$true] %s229
          %232 = dma.hbm_to_vmem [thread:$0]  %s227, 48, %s230, %s218
        $region28: #{tpu_custom_call.1} parent=15 // pred_fallthru
          _
      $region16: #{tpu_custom_call.1} parent=5 // pred_fallthru
        _
      %p233 = scmp.le.s32.totalorder 1, %s18
      %p234 = scmp.lt.s32.totalorder %s18, 9
      %p235 = pnand %p233, %p234
      %p236 = pneg %p235
      // Predicated region
      $region29: #{tpu_custom_call.1} parent=5 // pred_check
        _
      $region30: #{tpu_custom_call.1} parent=5 // pred_check_branch
        %238 = sbr.rel (%p235) target = $region32
      $region31: #{tpu_custom_call.1} parent=5 // pred_region
        %s239 = ssub.s32 %s18, 1
        %s240 = sand.u32 %s52, 1
        %s241 = scalar_lea.sflag [#allocation4], %s240
        %s242 = sand.u32 %s52, 1
        %s243 = smul.addr %s242, 1024
        %s244 = scalar_lea.vmem [#allocation3], %s243
        // Predicated region
        $region33: #{tpu_custom_call.1} parent=31 // pred_check
          %p245 = pneg %p65
        $region34: #{tpu_custom_call.1} parent=31 // pred_check_branch
          %247 = sbr.rel (%p245) target = $region36
        $region35: #{tpu_custom_call.1} parent=31 // pred_region
          %248 = dma.done %s241, 16384
        $region36: #{tpu_custom_call.1} parent=31 // pred_fallthru
          _
        %s249 = sand.u32 %s23, 1
        %s250 = scalar_lea.sflag [#allocation7], %s249
        %s251 = sand.u32 %s80, 1
        %s252 = smul.addr %s251, 384
        %s253 = scalar_lea.vmem [#allocation6], %s252
        // Predicated region
        $region37: #{tpu_custom_call.1} parent=31 // pred_check
          %p254 = pneg %p93
        $region38: #{tpu_custom_call.1} parent=31 // pred_check_branch
          %256 = sbr.rel (%p254) target = $region40
        $region39: #{tpu_custom_call.1} parent=31 // pred_region
          %257 = dma.done %s250, 6144
        $region40: #{tpu_custom_call.1} parent=31 // pred_fallthru
          _
        %s258 = sand.u32 %s23, 1
        %s259 = scalar_lea.sflag [#allocation7], %s258
        %s260 = sand.u32 %s106, 1
        %s261 = smul.addr %s260, 3
        %s262 = scalar_lea.vmem [#allocation8], %s261
        // Predicated region
        $region41: #{tpu_custom_call.1} parent=31 // pred_check
          %p263 = pneg %p119
        $region42: #{tpu_custom_call.1} parent=31 // pred_check_branch
          %265 = sbr.rel (%p263) target = $region44
        $region43: #{tpu_custom_call.1} parent=31 // pred_region
          %266 = dma.done %s259, 48
        $region44: #{tpu_custom_call.1} parent=31 // pred_fallthru
          _
        %s267 = sand.u32 %s52, 1
        %s268 = scalar_lea.sflag [#allocation4], %s267
        %s269 = sand.u32 %s52, 1
        %s270 = smul.addr %s269, 1024
        %s271 = scalar_lea.vmem [#allocation3], %s270
        %p272 = pneg %p65
        %p273 = pneg %p62
        %s274 = sand.u32 %s23, 1
        %s275 = scalar_lea.sflag [#allocation7], %s274
        %s276 = sand.u32 %s80, 1
        %s277 = smul.addr %s276, 384
        %s278 = scalar_lea.vmem [#allocation6], %s277
        %p279 = pneg %p93
        %p280 = pneg %p90
        %s281 = sand.u32 %s23, 1
        %s282 = scalar_lea.sflag [#allocation7], %s281
        %s283 = sand.u32 %s106, 1
        %s284 = smul.addr %s283, 3
        %s285 = scalar_lea.vmem [#allocation8], %s284
        %p286 = pneg %p119
        %p287 = pneg %p116
        %p288 = pneg %p147
        %p289 = pneg %p144
        %s290 = sand.u32 %s134, 1
        %s291 = scalar_lea.sflag [#allocation5], %s290
        %s292 = sand.u32 %s134, 1
        %s293 = smul.addr %s292, 768
        %s294 = scalar_lea.vmem [#allocation9], %s293
        %s295 = smul.u32 64, %s28
        %s296 = smul.u32 2, %s30
        %s297 = smul.u32 32, %s30
        %s298 = smul.u32 3, %s29
        %s299 = smul.u32 3, %s29
        %s300 = smul.u32 64, %s28
        %s301 = smul.u32 3, %s29
        %p303 = scmp.eq.s32.totalorder %s30, 0
        // Predicated region
        $region45: #{tpu_custom_call.1} parent=31 // pred_check
          %p304 = pneg %p303
        $region46: #{tpu_custom_call.1} parent=31 // pred_check_branch
          %306 = sbr.rel (%p304) target = $region48
        $region47: #{tpu_custom_call.1} parent=31 // pred_region
          %307 = vst [vmem:[#allocation2] sm:$0xff] 0.0
          %308 = vst [vmem:[#allocation2 + $0x8] sm:$0xff] 0.0
          %309 = vst [vmem:[#allocation2 + $0x10] sm:$0xff] 0.0
          %310 = vst [vmem:[#allocation2 + $0x18] sm:$0xff] 0.0
          %311 = vst [vmem:[#allocation2 + $0x20] sm:$0xff] 0.0
          %312 = vst [vmem:[#allocation2 + $0x28] sm:$0xff] 0.0
          %313 = vst [vmem:[#allocation2 + $0x30] sm:$0xff] 0.0
          %314 = vst [vmem:[#allocation2 + $0x38] sm:$0xff] 0.0
          %315 = vst [vmem:[#allocation2 + $0x40] sm:$0xff] 0.0
          %316 = vst [vmem:[#allocation2 + $0x48] sm:$0xff] 0.0
          %317 = vst [vmem:[#allocation2 + $0x50] sm:$0xff] 0.0
          %318 = vst [vmem:[#allocation2 + $0x58] sm:$0xff] 0.0
          %319 = vst [vmem:[#allocation2 + $0x60] sm:$0xff] 0.0
          %320 = vst [vmem:[#allocation2 + $0x68] sm:$0xff] 0.0
          %321 = vst [vmem:[#allocation2 + $0x70] sm:$0xff] 0.0
          %322 = vst [vmem:[#allocation2 + $0x78] sm:$0xff] 0.0
          %323 = vst [vmem:[#allocation2 + $0x80] sm:$0xff] 0.0
          %324 = vst [vmem:[#allocation2 + $0x88] sm:$0xff] 0.0
          %325 = vst [vmem:[#allocation2 + $0x90] sm:$0xff] 0.0
          %326 = vst [vmem:[#allocation2 + $0x98] sm:$0xff] 0.0
          %327 = vst [vmem:[#allocation2 + $0xa0] sm:$0xff] 0.0
          %328 = vst [vmem:[#allocation2 + $0xa8] sm:$0xff] 0.0
          %329 = vst [vmem:[#allocation2 + $0xb0] sm:$0xff] 0.0
          %330 = vst [vmem:[#allocation2 + $0xb8] sm:$0xff] 0.0
          %331 = vst [vmem:[#allocation2 + $0xc0] sm:$0xff] 0.0
          %332 = vst [vmem:[#allocation2 + $0xc8] sm:$0xff] 0.0
          %333 = vst [vmem:[#allocation2 + $0xd0] sm:$0xff] 0.0
          %334 = vst [vmem:[#allocation2 + $0xd8] sm:$0xff] 0.0
          %335 = vst [vmem:[#allocation2 + $0xe0] sm:$0xff] 0.0
          %336 = vst [vmem:[#allocation2 + $0xe8] sm:$0xff] 0.0
          %337 = vst [vmem:[#allocation2 + $0xf0] sm:$0xff] 0.0
          %338 = vst [vmem:[#allocation2 + $0xf8] sm:$0xff] 0.0
          %339 = vst [vmem:[#allocation2 + $0x100] sm:$0xff] 0.0
          %340 = vst [vmem:[#allocation2 + $0x108] sm:$0xff] 0.0
          %341 = vst [vmem:[#allocation2 + $0x110] sm:$0xff] 0.0
          %342 = vst [vmem:[#allocation2 + $0x118] sm:$0xff] 0.0
          %343 = vst [vmem:[#allocation2 + $0x120] sm:$0xff] 0.0
          %344 = vst [vmem:[#allocation2 + $0x128] sm:$0xff] 0.0
          %345 = vst [vmem:[#allocation2 + $0x130] sm:$0xff] 0.0
          %346 = vst [vmem:[#allocation2 + $0x138] sm:$0xff] 0.0
          %347 = vst [vmem:[#allocation2 + $0x140] sm:$0xff] 0.0
          %348 = vst [vmem:[#allocation2 + $0x148] sm:$0xff] 0.0
          %349 = vst [vmem:[#allocation2 + $0x150] sm:$0xff] 0.0
          %350 = vst [vmem:[#allocation2 + $0x158] sm:$0xff] 0.0
          %351 = vst [vmem:[#allocation2 + $0x160] sm:$0xff] 0.0
          %352 = vst [vmem:[#allocation2 + $0x168] sm:$0xff] 0.0
          %353 = vst [vmem:[#allocation2 + $0x170] sm:$0xff] 0.0
          %354 = vst [vmem:[#allocation2 + $0x178] sm:$0xff] 0.0
          %355 = vst [vmem:[#allocation2 + $0x180] sm:$0xff] 0.0
          %356 = vst [vmem:[#allocation2 + $0x188] sm:$0xff] 0.0
          %357 = vst [vmem:[#allocation2 + $0x190] sm:$0xff] 0.0
          %358 = vst [vmem:[#allocation2 + $0x198] sm:$0xff] 0.0
          %359 = vst [vmem:[#allocation2 + $0x1a0] sm:$0xff] 0.0
          %360 = vst [vmem:[#allocation2 + $0x1a8] sm:$0xff] 0.0
          %361 = vst [vmem:[#allocation2 + $0x1b0] sm:$0xff] 0.0
          %362 = vst [vmem:[#allocation2 + $0x1b8] sm:$0xff] 0.0
          %363 = vst [vmem:[#allocation2 + $0x1c0] sm:$0xff] 0.0
          %364 = vst [vmem:[#allocation2 + $0x1c8] sm:$0xff] 0.0
          %365 = vst [vmem:[#allocation2 + $0x1d0] sm:$0xff] 0.0
          %366 = vst [vmem:[#allocation2 + $0x1d8] sm:$0xff] 0.0
          %367 = vst [vmem:[#allocation2 + $0x1e0] sm:$0xff] 0.0
          %368 = vst [vmem:[#allocation2 + $0x1e8] sm:$0xff] 0.0
          %369 = vst [vmem:[#allocation2 + $0x1f0] sm:$0xff] 0.0
          %370 = vst [vmem:[#allocation2 + $0x1f8] sm:$0xff] 0.0
          %371 = vst [vmem:[#allocation2 + $0x200] sm:$0xff] 0.0
          %372 = vst [vmem:[#allocation2 + $0x208] sm:$0xff] 0.0
          %373 = vst [vmem:[#allocation2 + $0x210] sm:$0xff] 0.0
          %374 = vst [vmem:[#allocation2 + $0x218] sm:$0xff] 0.0
          %375 = vst [vmem:[#allocation2 + $0x220] sm:$0xff] 0.0
          %376 = vst [vmem:[#allocation2 + $0x228] sm:$0xff] 0.0
          %377 = vst [vmem:[#allocation2 + $0x230] sm:$0xff] 0.0
          %378 = vst [vmem:[#allocation2 + $0x238] sm:$0xff] 0.0
          %379 = vst [vmem:[#allocation2 + $0x240] sm:$0xff] 0.0
          %380 = vst [vmem:[#allocation2 + $0x248] sm:$0xff] 0.0
          %381 = vst [vmem:[#allocation2 + $0x250] sm:$0xff] 0.0
          %382 = vst [vmem:[#allocation2 + $0x258] sm:$0xff] 0.0
          %383 = vst [vmem:[#allocation2 + $0x260] sm:$0xff] 0.0
          %384 = vst [vmem:[#allocation2 + $0x268] sm:$0xff] 0.0
          %385 = vst [vmem:[#allocation2 + $0x270] sm:$0xff] 0.0
          %386 = vst [vmem:[#allocation2 + $0x278] sm:$0xff] 0.0
          %387 = vst [vmem:[#allocation2 + $0x280] sm:$0xff] 0.0
          %388 = vst [vmem:[#allocation2 + $0x288] sm:$0xff] 0.0
          %389 = vst [vmem:[#allocation2 + $0x290] sm:$0xff] 0.0
          %390 = vst [vmem:[#allocation2 + $0x298] sm:$0xff] 0.0
          %391 = vst [vmem:[#allocation2 + $0x2a0] sm:$0xff] 0.0
          %392 = vst [vmem:[#allocation2 + $0x2a8] sm:$0xff] 0.0
          %393 = vst [vmem:[#allocation2 + $0x2b0] sm:$0xff] 0.0
          %394 = vst [vmem:[#allocation2 + $0x2b8] sm:$0xff] 0.0
          %395 = vst [vmem:[#allocation2 + $0x2c0] sm:$0xff] 0.0
          %396 = vst [vmem:[#allocation2 + $0x2c8] sm:$0xff] 0.0
          %397 = vst [vmem:[#allocation2 + $0x2d0] sm:$0xff] 0.0
          %398 = vst [vmem:[#allocation2 + $0x2d8] sm:$0xff] 0.0
          %399 = vst [vmem:[#allocation2 + $0x2e0] sm:$0xff] 0.0
          %400 = vst [vmem:[#allocation2 + $0x2e8] sm:$0xff] 0.0
          %401 = vst [vmem:[#allocation2 + $0x2f0] sm:$0xff] 0.0
          %402 = vst [vmem:[#allocation2 + $0x2f8] sm:$0xff] 0.0
          %403 = vst [vmem:[#allocation2 + $0x300] sm:$0xff] 0.0
          %404 = vst [vmem:[#allocation2 + $0x308] sm:$0xff] 0.0
          %405 = vst [vmem:[#allocation2 + $0x310] sm:$0xff] 0.0
          %406 = vst [vmem:[#allocation2 + $0x318] sm:$0xff] 0.0
          %407 = vst [vmem:[#allocation2 + $0x320] sm:$0xff] 0.0
          %408 = vst [vmem:[#allocation2 + $0x328] sm:$0xff] 0.0
          %409 = vst [vmem:[#allocation2 + $0x330] sm:$0xff] 0.0
          %410 = vst [vmem:[#allocation2 + $0x338] sm:$0xff] 0.0
          %411 = vst [vmem:[#allocation2 + $0x340] sm:$0xff] 0.0
          %412 = vst [vmem:[#allocation2 + $0x348] sm:$0xff] 0.0
          %413 = vst [vmem:[#allocation2 + $0x350] sm:$0xff] 0.0
          %414 = vst [vmem:[#allocation2 + $0x358] sm:$0xff] 0.0
          %415 = vst [vmem:[#allocation2 + $0x360] sm:$0xff] 0.0
          %416 = vst [vmem:[#allocation2 + $0x368] sm:$0xff] 0.0
          %417 = vst [vmem:[#allocation2 + $0x370] sm:$0xff] 0.0
          %418 = vst [vmem:[#allocation2 + $0x378] sm:$0xff] 0.0
          %419 = vst [vmem:[#allocation2 + $0x380] sm:$0xff] 0.0
          %420 = vst [vmem:[#allocation2 + $0x388] sm:$0xff] 0.0
          %421 = vst [vmem:[#allocation2 + $0x390] sm:$0xff] 0.0
          %422 = vst [vmem:[#allocation2 + $0x398] sm:$0xff] 0.0
          %423 = vst [vmem:[#allocation2 + $0x3a0] sm:$0xff] 0.0
          %424 = vst [vmem:[#allocation2 + $0x3a8] sm:$0xff] 0.0
          %425 = vst [vmem:[#allocation2 + $0x3b0] sm:$0xff] 0.0
          %426 = vst [vmem:[#allocation2 + $0x3b8] sm:$0xff] 0.0
          %427 = vst [vmem:[#allocation2 + $0x3c0] sm:$0xff] 0.0
          %428 = vst [vmem:[#allocation2 + $0x3c8] sm:$0xff] 0.0
          %429 = vst [vmem:[#allocation2 + $0x3d0] sm:$0xff] 0.0
          %430 = vst [vmem:[#allocation2 + $0x3d8] sm:$0xff] 0.0
          %431 = vst [vmem:[#allocation2 + $0x3e0] sm:$0xff] 0.0
          %432 = vst [vmem:[#allocation2 + $0x3e8] sm:$0xff] 0.0
          %433 = vst [vmem:[#allocation2 + $0x3f0] sm:$0xff] 0.0
          %434 = vst [vmem:[#allocation2 + $0x3f8] sm:$0xff] 0.0
          %435 = vst [vmem:[#allocation2 + $0x400] sm:$0xff] 0.0
          %436 = vst [vmem:[#allocation2 + $0x408] sm:$0xff] 0.0
          %437 = vst [vmem:[#allocation2 + $0x410] sm:$0xff] 0.0
          %438 = vst [vmem:[#allocation2 + $0x418] sm:$0xff] 0.0
          %439 = vst [vmem:[#allocation2 + $0x420] sm:$0xff] 0.0
          %440 = vst [vmem:[#allocation2 + $0x428] sm:$0xff] 0.0
          %441 = vst [vmem:[#allocation2 + $0x430] sm:$0xff] 0.0
          %442 = vst [vmem:[#allocation2 + $0x438] sm:$0xff] 0.0
          %443 = vst [vmem:[#allocation2 + $0x440] sm:$0xff] 0.0
          %444 = vst [vmem:[#allocation2 + $0x448] sm:$0xff] 0.0
          %445 = vst [vmem:[#allocation2 + $0x450] sm:$0xff] 0.0
          %446 = vst [vmem:[#allocation2 + $0x458] sm:$0xff] 0.0
          %447 = vst [vmem:[#allocation2 + $0x460] sm:$0xff] 0.0
          %448 = vst [vmem:[#allocation2 + $0x468] sm:$0xff] 0.0
          %449 = vst [vmem:[#allocation2 + $0x470] sm:$0xff] 0.0
          %450 = vst [vmem:[#allocation2 + $0x478] sm:$0xff] 0.0
          %451 = vst [vmem:[#allocation2 + $0x480] sm:$0xff] 0.0
          %452 = vst [vmem:[#allocation2 + $0x488] sm:$0xff] 0.0
          %453 = vst [vmem:[#allocation2 + $0x490] sm:$0xff] 0.0
          %454 = vst [vmem:[#allocation2 + $0x498] sm:$0xff] 0.0
          %455 = vst [vmem:[#allocation2 + $0x4a0] sm:$0xff] 0.0
          %456 = vst [vmem:[#allocation2 + $0x4a8] sm:$0xff] 0.0
          %457 = vst [vmem:[#allocation2 + $0x4b0] sm:$0xff] 0.0
          %458 = vst [vmem:[#allocation2 + $0x4b8] sm:$0xff] 0.0
          %459 = vst [vmem:[#allocation2 + $0x4c0] sm:$0xff] 0.0
          %460 = vst [vmem:[#allocation2 + $0x4c8] sm:$0xff] 0.0
          %461 = vst [vmem:[#allocation2 + $0x4d0] sm:$0xff] 0.0
          %462 = vst [vmem:[#allocation2 + $0x4d8] sm:$0xff] 0.0
          %463 = vst [vmem:[#allocation2 + $0x4e0] sm:$0xff] 0.0
          %464 = vst [vmem:[#allocation2 + $0x4e8] sm:$0xff] 0.0
          %465 = vst [vmem:[#allocation2 + $0x4f0] sm:$0xff] 0.0
          %466 = vst [vmem:[#allocation2 + $0x4f8] sm:$0xff] 0.0
          %467 = vst [vmem:[#allocation2 + $0x500] sm:$0xff] 0.0
          %468 = vst [vmem:[#allocation2 + $0x508] sm:$0xff] 0.0
          %469 = vst [vmem:[#allocation2 + $0x510] sm:$0xff] 0.0
          %470 = vst [vmem:[#allocation2 + $0x518] sm:$0xff] 0.0
          %471 = vst [vmem:[#allocation2 + $0x520] sm:$0xff] 0.0
          %472 = vst [vmem:[#allocation2 + $0x528] sm:$0xff] 0.0
          %473 = vst [vmem:[#allocation2 + $0x530] sm:$0xff] 0.0
          %474 = vst [vmem:[#allocation2 + $0x538] sm:$0xff] 0.0
          %475 = vst [vmem:[#allocation2 + $0x540] sm:$0xff] 0.0
          %476 = vst [vmem:[#allocation2 + $0x548] sm:$0xff] 0.0
          %477 = vst [vmem:[#allocation2 + $0x550] sm:$0xff] 0.0
          %478 = vst [vmem:[#allocation2 + $0x558] sm:$0xff] 0.0
          %479 = vst [vmem:[#allocation2 + $0x560] sm:$0xff] 0.0
          %480 = vst [vmem:[#allocation2 + $0x568] sm:$0xff] 0.0
          %481 = vst [vmem:[#allocation2 + $0x570] sm:$0xff] 0.0
          %482 = vst [vmem:[#allocation2 + $0x578] sm:$0xff] 0.0
          %483 = vst [vmem:[#allocation2 + $0x580] sm:$0xff] 0.0
          %484 = vst [vmem:[#allocation2 + $0x588] sm:$0xff] 0.0
          %485 = vst [vmem:[#allocation2 + $0x590] sm:$0xff] 0.0
          %486 = vst [vmem:[#allocation2 + $0x598] sm:$0xff] 0.0
          %487 = vst [vmem:[#allocation2 + $0x5a0] sm:$0xff] 0.0
          %488 = vst [vmem:[#allocation2 + $0x5a8] sm:$0xff] 0.0
          %489 = vst [vmem:[#allocation2 + $0x5b0] sm:$0xff] 0.0
          %490 = vst [vmem:[#allocation2 + $0x5b8] sm:$0xff] 0.0
          %491 = vst [vmem:[#allocation2 + $0x5c0] sm:$0xff] 0.0
          %492 = vst [vmem:[#allocation2 + $0x5c8] sm:$0xff] 0.0
          %493 = vst [vmem:[#allocation2 + $0x5d0] sm:$0xff] 0.0
          %494 = vst [vmem:[#allocation2 + $0x5d8] sm:$0xff] 0.0
          %495 = vst [vmem:[#allocation2 + $0x5e0] sm:$0xff] 0.0
          %496 = vst [vmem:[#allocation2 + $0x5e8] sm:$0xff] 0.0
          %497 = vst [vmem:[#allocation2 + $0x5f0] sm:$0xff] 0.0
          %498 = vst [vmem:[#allocation2 + $0x5f8] sm:$0xff] 0.0
        $region48: #{tpu_custom_call.1} parent=31 // pred_fallthru
          _
        %v499 = vld [vmem:[#allocation2] sm:$0xff]
        %v500 = vld [vmem:[#allocation2 + $0x8] sm:$0xff]
        %v501 = vld [vmem:[#allocation2 + $0x10] sm:$0xff]
        %v502 = vld [vmem:[#allocation2 + $0x18] sm:$0xff]
        %v503 = vld [vmem:[#allocation2 + $0x20] sm:$0xff]
        %v504 = vld [vmem:[#allocation2 + $0x28] sm:$0xff]
        %v505 = vld [vmem:[#allocation2 + $0x30] sm:$0xff]
        %v506 = vld [vmem:[#allocation2 + $0x38] sm:$0xff]
        %v507 = vld [vmem:[#allocation2 + $0x40] sm:$0xff]
        %v508 = vld [vmem:[#allocation2 + $0x48] sm:$0xff]
        %v509 = vld [vmem:[#allocation2 + $0x50] sm:$0xff]
        %v510 = vld [vmem:[#allocation2 + $0x58] sm:$0xff]
        %v511 = vld [vmem:[#allocation2 + $0x60] sm:$0xff]
        %v512 = vld [vmem:[#allocation2 + $0x68] sm:$0xff]
        %v513 = vld [vmem:[#allocation2 + $0x70] sm:$0xff]
        %v514 = vld [vmem:[#allocation2 + $0x78] sm:$0xff]
        %v515 = vld [vmem:[#allocation2 + $0x80] sm:$0xff]
        %v516 = vld [vmem:[#allocation2 + $0x88] sm:$0xff]
        %v517 = vld [vmem:[#allocation2 + $0x90] sm:$0xff]
        %v518 = vld [vmem:[#allocation2 + $0x98] sm:$0xff]
        %v519 = vld [vmem:[#allocation2 + $0xa0] sm:$0xff]
        %v520 = vld [vmem:[#allocation2 + $0xa8] sm:$0xff]
        %v521 = vld [vmem:[#allocation2 + $0xb0] sm:$0xff]
        %v522 = vld [vmem:[#allocation2 + $0xb8] sm:$0xff]
        %v523 = vld [vmem:[#allocation2 + $0xc0] sm:$0xff]
        %v524 = vld [vmem:[#allocation2 + $0xc8] sm:$0xff]
        %v525 = vld [vmem:[#allocation2 + $0xd0] sm:$0xff]
        %v526 = vld [vmem:[#allocation2 + $0xd8] sm:$0xff]
        %v527 = vld [vmem:[#allocation2 + $0xe0] sm:$0xff]
        %v528 = vld [vmem:[#allocation2 + $0xe8] sm:$0xff]
        %v529 = vld [vmem:[#allocation2 + $0xf0] sm:$0xff]
        %v530 = vld [vmem:[#allocation2 + $0xf8] sm:$0xff]
        %v531 = vld [vmem:[#allocation2 + $0x100] sm:$0xff]
        %v532 = vld [vmem:[#allocation2 + $0x108] sm:$0xff]
        %v533 = vld [vmem:[#allocation2 + $0x110] sm:$0xff]
        %v534 = vld [vmem:[#allocation2 + $0x118] sm:$0xff]
        %v535 = vld [vmem:[#allocation2 + $0x120] sm:$0xff]
        %v536 = vld [vmem:[#allocation2 + $0x128] sm:$0xff]
        %v537 = vld [vmem:[#allocation2 + $0x130] sm:$0xff]
        %v538 = vld [vmem:[#allocation2 + $0x138] sm:$0xff]
        %v539 = vld [vmem:[#allocation2 + $0x140] sm:$0xff]
        %v540 = vld [vmem:[#allocation2 + $0x148] sm:$0xff]
        %v541 = vld [vmem:[#allocation2 + $0x150] sm:$0xff]
        %v542 = vld [vmem:[#allocation2 + $0x158] sm:$0xff]
        %v543 = vld [vmem:[#allocation2 + $0x160] sm:$0xff]
        %v544 = vld [vmem:[#allocation2 + $0x168] sm:$0xff]
        %v545 = vld [vmem:[#allocation2 + $0x170] sm:$0xff]
        %v546 = vld [vmem:[#allocation2 + $0x178] sm:$0xff]
        %v547 = vld [vmem:[#allocation2 + $0x180] sm:$0xff]
        %v548 = vld [vmem:[#allocation2 + $0x188] sm:$0xff]
        %v549 = vld [vmem:[#allocation2 + $0x190] sm:$0xff]
        %v550 = vld [vmem:[#allocation2 + $0x198] sm:$0xff]
        %v551 = vld [vmem:[#allocation2 + $0x1a0] sm:$0xff]
        %v552 = vld [vmem:[#allocation2 + $0x1a8] sm:$0xff]
        %v553 = vld [vmem:[#allocation2 + $0x1b0] sm:$0xff]
        %v554 = vld [vmem:[#allocation2 + $0x1b8] sm:$0xff]
        %v555 = vld [vmem:[#allocation2 + $0x1c0] sm:$0xff]
        %v556 = vld [vmem:[#allocation2 + $0x1c8] sm:$0xff]
        %v557 = vld [vmem:[#allocation2 + $0x1d0] sm:$0xff]
        %v558 = vld [vmem:[#allocation2 + $0x1d8] sm:$0xff]
        %v559 = vld [vmem:[#allocation2 + $0x1e0] sm:$0xff]
        %v560 = vld [vmem:[#allocation2 + $0x1e8] sm:$0xff]
        %v561 = vld [vmem:[#allocation2 + $0x1f0] sm:$0xff]
        %v562 = vld [vmem:[#allocation2 + $0x1f8] sm:$0xff]
        %v563 = vld [vmem:[#allocation2 + $0x200] sm:$0xff]
        %v564 = vld [vmem:[#allocation2 + $0x208] sm:$0xff]
        %v565 = vld [vmem:[#allocation2 + $0x210] sm:$0xff]
        %v566 = vld [vmem:[#allocation2 + $0x218] sm:$0xff]
        %v567 = vld [vmem:[#allocation2 + $0x220] sm:$0xff]
        %v568 = vld [vmem:[#allocation2 + $0x228] sm:$0xff]
        %v569 = vld [vmem:[#allocation2 + $0x230] sm:$0xff]
        %v570 = vld [vmem:[#allocation2 + $0x238] sm:$0xff]
        %v571 = vld [vmem:[#allocation2 + $0x240] sm:$0xff]
        %v572 = vld [vmem:[#allocation2 + $0x248] sm:$0xff]
        %v573 = vld [vmem:[#allocation2 + $0x250] sm:$0xff]
        %v574 = vld [vmem:[#allocation2 + $0x258] sm:$0xff]
        %v575 = vld [vmem:[#allocation2 + $0x260] sm:$0xff]
        %v576 = vld [vmem:[#allocation2 + $0x268] sm:$0xff]
        %v577 = vld [vmem:[#allocation2 + $0x270] sm:$0xff]
        %v578 = vld [vmem:[#allocation2 + $0x278] sm:$0xff]
        %v579 = vld [vmem:[#allocation2 + $0x280] sm:$0xff]
        %v580 = vld [vmem:[#allocation2 + $0x288] sm:$0xff]
        %v581 = vld [vmem:[#allocation2 + $0x290] sm:$0xff]
        %v582 = vld [vmem:[#allocation2 + $0x298] sm:$0xff]
        %v583 = vld [vmem:[#allocation2 + $0x2a0] sm:$0xff]
        %v584 = vld [vmem:[#allocation2 + $0x2a8] sm:$0xff]
        %v585 = vld [vmem:[#allocation2 + $0x2b0] sm:$0xff]
        %v586 = vld [vmem:[#allocation2 + $0x2b8] sm:$0xff]
        %v587 = vld [vmem:[#allocation2 + $0x2c0] sm:$0xff]
        %v588 = vld [vmem:[#allocation2 + $0x2c8] sm:$0xff]
        %v589 = vld [vmem:[#allocation2 + $0x2d0] sm:$0xff]
        %v590 = vld [vmem:[#allocation2 + $0x2d8] sm:$0xff]
        %v591 = vld [vmem:[#allocation2 + $0x2e0] sm:$0xff]
        %v592 = vld [vmem:[#allocation2 + $0x2e8] sm:$0xff]
        %v593 = vld [vmem:[#allocation2 + $0x2f0] sm:$0xff]
        %v594 = vld [vmem:[#allocation2 + $0x2f8] sm:$0xff]
        %v595 = vld [vmem:[#allocation2 + $0x300] sm:$0xff]
        %v596 = vld [vmem:[#allocation2 + $0x308] sm:$0xff]
        %v597 = vld [vmem:[#allocation2 + $0x310] sm:$0xff]
        %v598 = vld [vmem:[#allocation2 + $0x318] sm:$0xff]
        %v599 = vld [vmem:[#allocation2 + $0x320] sm:$0xff]
        %v600 = vld [vmem:[#allocation2 + $0x328] sm:$0xff]
        %v601 = vld [vmem:[#allocation2 + $0x330] sm:$0xff]
        %v602 = vld [vmem:[#allocation2 + $0x338] sm:$0xff]
        %v603 = vld [vmem:[#allocation2 + $0x340] sm:$0xff]
        %v604 = vld [vmem:[#allocation2 + $0x348] sm:$0xff]
        %v605 = vld [vmem:[#allocation2 + $0x350] sm:$0xff]
        %v606 = vld [vmem:[#allocation2 + $0x358] sm:$0xff]
        %v607 = vld [vmem:[#allocation2 + $0x360] sm:$0xff]
        %v608 = vld [vmem:[#allocation2 + $0x368] sm:$0xff]
        %v609 = vld [vmem:[#allocation2 + $0x370] sm:$0xff]
        %v610 = vld [vmem:[#allocation2 + $0x378] sm:$0xff]
        %v611 = vld [vmem:[#allocation2 + $0x380] sm:$0xff]
        %v612 = vld [vmem:[#allocation2 + $0x388] sm:$0xff]
        %v613 = vld [vmem:[#allocation2 + $0x390] sm:$0xff]
        %v614 = vld [vmem:[#allocation2 + $0x398] sm:$0xff]
        %v615 = vld [vmem:[#allocation2 + $0x3a0] sm:$0xff]
        %v616 = vld [vmem:[#allocation2 + $0x3a8] sm:$0xff]
        %v617 = vld [vmem:[#allocation2 + $0x3b0] sm:$0xff]
        %v618 = vld [vmem:[#allocation2 + $0x3b8] sm:$0xff]
        %v619 = vld [vmem:[#allocation2 + $0x3c0] sm:$0xff]
        %v620 = vld [vmem:[#allocation2 + $0x3c8] sm:$0xff]
        %v621 = vld [vmem:[#allocation2 + $0x3d0] sm:$0xff]
        %v622 = vld [vmem:[#allocation2 + $0x3d8] sm:$0xff]
        %v623 = vld [vmem:[#allocation2 + $0x3e0] sm:$0xff]
        %v624 = vld [vmem:[#allocation2 + $0x3e8] sm:$0xff]
        %v625 = vld [vmem:[#allocation2 + $0x3f0] sm:$0xff]
        %v626 = vld [vmem:[#allocation2 + $0x3f8] sm:$0xff]
        %v627 = vld [vmem:[#allocation2 + $0x400] sm:$0xff]
        %v628 = vld [vmem:[#allocation2 + $0x408] sm:$0xff]
        %v629 = vld [vmem:[#allocation2 + $0x410] sm:$0xff]
        %v630 = vld [vmem:[#allocation2 + $0x418] sm:$0xff]
        %v631 = vld [vmem:[#allocation2 + $0x420] sm:$0xff]
        %v632 = vld [vmem:[#allocation2 + $0x428] sm:$0xff]
        %v633 = vld [vmem:[#allocation2 + $0x430] sm:$0xff]
        %v634 = vld [vmem:[#allocation2 + $0x438] sm:$0xff]
        %v635 = vld [vmem:[#allocation2 + $0x440] sm:$0xff]
        %v636 = vld [vmem:[#allocation2 + $0x448] sm:$0xff]
        %v637 = vld [vmem:[#allocation2 + $0x450] sm:$0xff]
        %v638 = vld [vmem:[#allocation2 + $0x458] sm:$0xff]
        %v639 = vld [vmem:[#allocation2 + $0x460] sm:$0xff]
        %v640 = vld [vmem:[#allocation2 + $0x468] sm:$0xff]
        %v641 = vld [vmem:[#allocation2 + $0x470] sm:$0xff]
        %v642 = vld [vmem:[#allocation2 + $0x478] sm:$0xff]
        %v643 = vld [vmem:[#allocation2 + $0x480] sm:$0xff]
        %v644 = vld [vmem:[#allocation2 + $0x488] sm:$0xff]
        %v645 = vld [vmem:[#allocation2 + $0x490] sm:$0xff]
        %v646 = vld [vmem:[#allocation2 + $0x498] sm:$0xff]
        %v647 = vld [vmem:[#allocation2 + $0x4a0] sm:$0xff]
        %v648 = vld [vmem:[#allocation2 + $0x4a8] sm:$0xff]
        %v649 = vld [vmem:[#allocation2 + $0x4b0] sm:$0xff]
        %v650 = vld [vmem:[#allocation2 + $0x4b8] sm:$0xff]
        %v651 = vld [vmem:[#allocation2 + $0x4c0] sm:$0xff]
        %v652 = vld [vmem:[#allocation2 + $0x4c8] sm:$0xff]
        %v653 = vld [vmem:[#allocation2 + $0x4d0] sm:$0xff]
        %v654 = vld [vmem:[#allocation2 + $0x4d8] sm:$0xff]
        %v655 = vld [vmem:[#allocation2 + $0x4e0] sm:$0xff]
        %v656 = vld [vmem:[#allocation2 + $0x4e8] sm:$0xff]
        %v657 = vld [vmem:[#allocation2 + $0x4f0] sm:$0xff]
        %v658 = vld [vmem:[#allocation2 + $0x4f8] sm:$0xff]
        %v659 = vld [vmem:[#allocation2 + $0x500] sm:$0xff]
        %v660 = vld [vmem:[#allocation2 + $0x508] sm:$0xff]
        %v661 = vld [vmem:[#allocation2 + $0x510] sm:$0xff]
        %v662 = vld [vmem:[#allocation2 + $0x518] sm:$0xff]
        %v663 = vld [vmem:[#allocation2 + $0x520] sm:$0xff]
        %v664 = vld [vmem:[#allocation2 + $0x528] sm:$0xff]
        %v665 = vld [vmem:[#allocation2 + $0x530] sm:$0xff]
        %v666 = vld [vmem:[#allocation2 + $0x538] sm:$0xff]
        %v667 = vld [vmem:[#allocation2 + $0x540] sm:$0xff]
        %v668 = vld [vmem:[#allocation2 + $0x548] sm:$0xff]
        %v669 = vld [vmem:[#allocation2 + $0x550] sm:$0xff]
        %v670 = vld [vmem:[#allocation2 + $0x558] sm:$0xff]
        %v671 = vld [vmem:[#allocation2 + $0x560] sm:$0xff]
        %v672 = vld [vmem:[#allocation2 + $0x568] sm:$0xff]
        %v673 = vld [vmem:[#allocation2 + $0x570] sm:$0xff]
        %v674 = vld [vmem:[#allocation2 + $0x578] sm:$0xff]
        %v675 = vld [vmem:[#allocation2 + $0x580] sm:$0xff]
        %v676 = vld [vmem:[#allocation2 + $0x588] sm:$0xff]
        %v677 = vld [vmem:[#allocation2 + $0x590] sm:$0xff]
        %v678 = vld [vmem:[#allocation2 + $0x598] sm:$0xff]
        %v679 = vld [vmem:[#allocation2 + $0x5a0] sm:$0xff]
        %v680 = vld [vmem:[#allocation2 + $0x5a8] sm:$0xff]
        %v681 = vld [vmem:[#allocation2 + $0x5b0] sm:$0xff]
        %v682 = vld [vmem:[#allocation2 + $0x5b8] sm:$0xff]
        %v683 = vld [vmem:[#allocation2 + $0x5c0] sm:$0xff]
        %v684 = vld [vmem:[#allocation2 + $0x5c8] sm:$0xff]
        %v685 = vld [vmem:[#allocation2 + $0x5d0] sm:$0xff]
        %v686 = vld [vmem:[#allocation2 + $0x5d8] sm:$0xff]
        %v687 = vld [vmem:[#allocation2 + $0x5e0] sm:$0xff]
        %v688 = vld [vmem:[#allocation2 + $0x5e8] sm:$0xff]
        %v689 = vld [vmem:[#allocation2 + $0x5f0] sm:$0xff]
        %v690 = vld [vmem:[#allocation2 + $0x5f8] sm:$0xff]
        %v691 = vld [vmem:[%s244] sm:$0xff]
        %v692 = vld [vmem:[%s244 + $0x8] sm:$0xff]
        %v693 = vld [vmem:[%s244 + $0x10] sm:$0xff]
        %v694 = vld [vmem:[%s244 + $0x18] sm:$0xff]
        %v695 = vld [vmem:[%s244 + $0x20] sm:$0xff]
        %v696 = vld [vmem:[%s244 + $0x28] sm:$0xff]
        %v697 = vld [vmem:[%s244 + $0x30] sm:$0xff]
        %v698 = vld [vmem:[%s244 + $0x38] sm:$0xff]
        %v699 = vld [vmem:[%s244 + $0x40] sm:$0xff]
        %v700 = vld [vmem:[%s244 + $0x48] sm:$0xff]
        %v701 = vld [vmem:[%s244 + $0x50] sm:$0xff]
        %v702 = vld [vmem:[%s244 + $0x58] sm:$0xff]
        %v703 = vld [vmem:[%s244 + $0x60] sm:$0xff]
        %v704 = vld [vmem:[%s244 + $0x68] sm:$0xff]
        %v705 = vld [vmem:[%s244 + $0x70] sm:$0xff]
        %v706 = vld [vmem:[%s244 + $0x78] sm:$0xff]
        %v707 = vld [vmem:[%s244 + $0x80] sm:$0xff]
        %v708 = vld [vmem:[%s244 + $0x88] sm:$0xff]
        %v709 = vld [vmem:[%s244 + $0x90] sm:$0xff]
        %v710 = vld [vmem:[%s244 + $0x98] sm:$0xff]
        %v711 = vld [vmem:[%s244 + $0xa0] sm:$0xff]
        %v712 = vld [vmem:[%s244 + $0xa8] sm:$0xff]
        %v713 = vld [vmem:[%s244 + $0xb0] sm:$0xff]
        %v714 = vld [vmem:[%s244 + $0xb8] sm:$0xff]
        %v715 = vld [vmem:[%s244 + $0xc0] sm:$0xff]
        %v716 = vld [vmem:[%s244 + $0xc8] sm:$0xff]
        %v717 = vld [vmem:[%s244 + $0xd0] sm:$0xff]
        %v718 = vld [vmem:[%s244 + $0xd8] sm:$0xff]
        %v719 = vld [vmem:[%s244 + $0xe0] sm:$0xff]
        %v720 = vld [vmem:[%s244 + $0xe8] sm:$0xff]
        %v721 = vld [vmem:[%s244 + $0xf0] sm:$0xff]
        %v722 = vld [vmem:[%s244 + $0xf8] sm:$0xff]
        %v723 = vld [vmem:[%s244 + $0x100] sm:$0xff]
        %v724 = vld [vmem:[%s244 + $0x108] sm:$0xff]
        %v725 = vld [vmem:[%s244 + $0x110] sm:$0xff]
        %v726 = vld [vmem:[%s244 + $0x118] sm:$0xff]
        %v727 = vld [vmem:[%s244 + $0x120] sm:$0xff]
        %v728 = vld [vmem:[%s244 + $0x128] sm:$0xff]
        %v729 = vld [vmem:[%s244 + $0x130] sm:$0xff]
        %v730 = vld [vmem:[%s244 + $0x138] sm:$0xff]
        %v731 = vld [vmem:[%s244 + $0x140] sm:$0xff]
        %v732 = vld [vmem:[%s244 + $0x148] sm:$0xff]
        %v733 = vld [vmem:[%s244 + $0x150] sm:$0xff]
        %v734 = vld [vmem:[%s244 + $0x158] sm:$0xff]
        %v735 = vld [vmem:[%s244 + $0x160] sm:$0xff]
        %v736 = vld [vmem:[%s244 + $0x168] sm:$0xff]
        %v737 = vld [vmem:[%s244 + $0x170] sm:$0xff]
        %v738 = vld [vmem:[%s244 + $0x178] sm:$0xff]
        %v739 = vld [vmem:[%s244 + $0x180] sm:$0xff]
        %v740 = vld [vmem:[%s244 + $0x188] sm:$0xff]
        %v741 = vld [vmem:[%s244 + $0x190] sm:$0xff]
        %v742 = vld [vmem:[%s244 + $0x198] sm:$0xff]
        %v743 = vld [vmem:[%s244 + $0x1a0] sm:$0xff]
        %v744 = vld [vmem:[%s244 + $0x1a8] sm:$0xff]
        %v745 = vld [vmem:[%s244 + $0x1b0] sm:$0xff]
        %v746 = vld [vmem:[%s244 + $0x1b8] sm:$0xff]
        %v747 = vld [vmem:[%s244 + $0x1c0] sm:$0xff]
        %v748 = vld [vmem:[%s244 + $0x1c8] sm:$0xff]
        %v749 = vld [vmem:[%s244 + $0x1d0] sm:$0xff]
        %v750 = vld [vmem:[%s244 + $0x1d8] sm:$0xff]
        %v751 = vld [vmem:[%s244 + $0x1e0] sm:$0xff]
        %v752 = vld [vmem:[%s244 + $0x1e8] sm:$0xff]
        %v753 = vld [vmem:[%s244 + $0x1f0] sm:$0xff]
        %v754 = vld [vmem:[%s244 + $0x1f8] sm:$0xff]
        %v755 = vld [vmem:[%s244 + $0x200] sm:$0xff]
        %v756 = vld [vmem:[%s244 + $0x208] sm:$0xff]
        %v757 = vld [vmem:[%s244 + $0x210] sm:$0xff]
        %v758 = vld [vmem:[%s244 + $0x218] sm:$0xff]
        %v759 = vld [vmem:[%s244 + $0x220] sm:$0xff]
        %v760 = vld [vmem:[%s244 + $0x228] sm:$0xff]
        %v761 = vld [vmem:[%s244 + $0x230] sm:$0xff]
        %v762 = vld [vmem:[%s244 + $0x238] sm:$0xff]
        %v763 = vld [vmem:[%s244 + $0x240] sm:$0xff]
        %v764 = vld [vmem:[%s244 + $0x248] sm:$0xff]
        %v765 = vld [vmem:[%s244 + $0x250] sm:$0xff]
        %v766 = vld [vmem:[%s244 + $0x258] sm:$0xff]
        %v767 = vld [vmem:[%s244 + $0x260] sm:$0xff]
        %v768 = vld [vmem:[%s244 + $0x268] sm:$0xff]
        %v769 = vld [vmem:[%s244 + $0x270] sm:$0xff]
        %v770 = vld [vmem:[%s244 + $0x278] sm:$0xff]
        %v771 = vld [vmem:[%s244 + $0x280] sm:$0xff]
        %v772 = vld [vmem:[%s244 + $0x288] sm:$0xff]
        %v773 = vld [vmem:[%s244 + $0x290] sm:$0xff]
        %v774 = vld [vmem:[%s244 + $0x298] sm:$0xff]
        %v775 = vld [vmem:[%s244 + $0x2a0] sm:$0xff]
        %v776 = vld [vmem:[%s244 + $0x2a8] sm:$0xff]
        %v777 = vld [vmem:[%s244 + $0x2b0] sm:$0xff]
        %v778 = vld [vmem:[%s244 + $0x2b8] sm:$0xff]
        %v779 = vld [vmem:[%s244 + $0x2c0] sm:$0xff]
        %v780 = vld [vmem:[%s244 + $0x2c8] sm:$0xff]
        %v781 = vld [vmem:[%s244 + $0x2d0] sm:$0xff]
        %v782 = vld [vmem:[%s244 + $0x2d8] sm:$0xff]
        %v783 = vld [vmem:[%s244 + $0x2e0] sm:$0xff]
        %v784 = vld [vmem:[%s244 + $0x2e8] sm:$0xff]
        %v785 = vld [vmem:[%s244 + $0x2f0] sm:$0xff]
        %v786 = vld [vmem:[%s244 + $0x2f8] sm:$0xff]
        %v787 = vld [vmem:[%s244 + $0x300] sm:$0xff]
        %v788 = vld [vmem:[%s244 + $0x308] sm:$0xff]
        %v789 = vld [vmem:[%s244 + $0x310] sm:$0xff]
        %v790 = vld [vmem:[%s244 + $0x318] sm:$0xff]
        %v791 = vld [vmem:[%s244 + $0x320] sm:$0xff]
        %v792 = vld [vmem:[%s244 + $0x328] sm:$0xff]
        %v793 = vld [vmem:[%s244 + $0x330] sm:$0xff]
        %v794 = vld [vmem:[%s244 + $0x338] sm:$0xff]
        %v795 = vld [vmem:[%s244 + $0x340] sm:$0xff]
        %v796 = vld [vmem:[%s244 + $0x348] sm:$0xff]
        %v797 = vld [vmem:[%s244 + $0x350] sm:$0xff]
        %v798 = vld [vmem:[%s244 + $0x358] sm:$0xff]
        %v799 = vld [vmem:[%s244 + $0x360] sm:$0xff]
        %v800 = vld [vmem:[%s244 + $0x368] sm:$0xff]
        %v801 = vld [vmem:[%s244 + $0x370] sm:$0xff]
        %v802 = vld [vmem:[%s244 + $0x378] sm:$0xff]
        %v803 = vld [vmem:[%s244 + $0x380] sm:$0xff]
        %v804 = vld [vmem:[%s244 + $0x388] sm:$0xff]
        %v805 = vld [vmem:[%s244 + $0x390] sm:$0xff]
        %v806 = vld [vmem:[%s244 + $0x398] sm:$0xff]
        %v807 = vld [vmem:[%s244 + $0x3a0] sm:$0xff]
        %v808 = vld [vmem:[%s244 + $0x3a8] sm:$0xff]
        %v809 = vld [vmem:[%s244 + $0x3b0] sm:$0xff]
        %v810 = vld [vmem:[%s244 + $0x3b8] sm:$0xff]
        %v811 = vld [vmem:[%s244 + $0x3c0] sm:$0xff]
        %v812 = vld [vmem:[%s244 + $0x3c8] sm:$0xff]
        %v813 = vld [vmem:[%s244 + $0x3d0] sm:$0xff]
        %v814 = vld [vmem:[%s244 + $0x3d8] sm:$0xff]
        %v815 = vld [vmem:[%s244 + $0x3e0] sm:$0xff]
        %v816 = vld [vmem:[%s244 + $0x3e8] sm:$0xff]
        %v817 = vld [vmem:[%s244 + $0x3f0] sm:$0xff]
        %v818 = vld [vmem:[%s244 + $0x3f8] sm:$0xff]
        %v819 = vpack.c.bf16 %v693, %v691
        %v820 = vpack.c.bf16 %v694, %v692
        %v821 = vpack.c.bf16 %v697, %v695
        %v822 = vpack.c.bf16 %v698, %v696
        %v823 = vpack.c.bf16 %v701, %v699
        %v824 = vpack.c.bf16 %v702, %v700
        %v825 = vpack.c.bf16 %v705, %v703
        %v826 = vpack.c.bf16 %v706, %v704
        %v827 = vpack.c.bf16 %v709, %v707
        %v828 = vpack.c.bf16 %v710, %v708
        %v829 = vpack.c.bf16 %v713, %v711
        %v830 = vpack.c.bf16 %v714, %v712
        %v831 = vpack.c.bf16 %v717, %v715
        %v832 = vpack.c.bf16 %v718, %v716
        %v833 = vpack.c.bf16 %v721, %v719
        %v834 = vpack.c.bf16 %v722, %v720
        %v835 = vpack.c.bf16 %v725, %v723
        %v836 = vpack.c.bf16 %v726, %v724
        %v837 = vpack.c.bf16 %v729, %v727
        %v838 = vpack.c.bf16 %v730, %v728
        %v839 = vpack.c.bf16 %v733, %v731
        %v840 = vpack.c.bf16 %v734, %v732
        %v841 = vpack.c.bf16 %v737, %v735
        %v842 = vpack.c.bf16 %v738, %v736
        %v843 = vpack.c.bf16 %v741, %v739
        %v844 = vpack.c.bf16 %v742, %v740
        %v845 = vpack.c.bf16 %v745, %v743
        %v846 = vpack.c.bf16 %v746, %v744
        %v847 = vpack.c.bf16 %v749, %v747
        %v848 = vpack.c.bf16 %v750, %v748
        %v849 = vpack.c.bf16 %v753, %v751
        %v850 = vpack.c.bf16 %v754, %v752
        %v851 = vpack.c.bf16 %v757, %v755
        %v852 = vpack.c.bf16 %v758, %v756
        %v853 = vpack.c.bf16 %v761, %v759
        %v854 = vpack.c.bf16 %v762, %v760
        %v855 = vpack.c.bf16 %v765, %v763
        %v856 = vpack.c.bf16 %v766, %v764
        %v857 = vpack.c.bf16 %v769, %v767
        %v858 = vpack.c.bf16 %v770, %v768
        %v859 = vpack.c.bf16 %v773, %v771
        %v860 = vpack.c.bf16 %v774, %v772
        %v861 = vpack.c.bf16 %v777, %v775
        %v862 = vpack.c.bf16 %v778, %v776
        %v863 = vpack.c.bf16 %v781, %v779
        %v864 = vpack.c.bf16 %v782, %v780
        %v865 = vpack.c.bf16 %v785, %v783
        %v866 = vpack.c.bf16 %v786, %v784
        %v867 = vpack.c.bf16 %v789, %v787
        %v868 = vpack.c.bf16 %v790, %v788
        %v869 = vpack.c.bf16 %v793, %v791
        %v870 = vpack.c.bf16 %v794, %v792
        %v871 = vpack.c.bf16 %v797, %v795
        %v872 = vpack.c.bf16 %v798, %v796
        %v873 = vpack.c.bf16 %v801, %v799
        %v874 = vpack.c.bf16 %v802, %v800
        %v875 = vpack.c.bf16 %v805, %v803
        %v876 = vpack.c.bf16 %v806, %v804
        %v877 = vpack.c.bf16 %v809, %v807
        %v878 = vpack.c.bf16 %v810, %v808
        %v879 = vpack.c.bf16 %v813, %v811
        %v880 = vpack.c.bf16 %v814, %v812
        %v881 = vpack.c.bf16 %v817, %v815
        %v882 = vpack.c.bf16 %v818, %v816
        %v883 = vld [vmem:[%s253] sm:$0xff]
        %v884 = vld [vmem:[%s253 + $0x8] sm:$0xf]
        %v885 = vld [vmem:[%s253 + $0xc] sm:$0xff]
        %v886 = vld [vmem:[%s253 + $0x14] sm:$0xf]
        %v887 = vld [vmem:[%s253 + $0x18] sm:$0xff]
        %v888 = vld [vmem:[%s253 + $0x20] sm:$0xf]
        %v889 = vld [vmem:[%s253 + $0x24] sm:$0xff]
        %v890 = vld [vmem:[%s253 + $0x2c] sm:$0xf]
        %v891 = vld [vmem:[%s253 + $0x30] sm:$0xff]
        %v892 = vld [vmem:[%s253 + $0x38] sm:$0xf]
        %v893 = vld [vmem:[%s253 + $0x3c] sm:$0xff]
        %v894 = vld [vmem:[%s253 + $0x44] sm:$0xf]
        %v895 = vld [vmem:[%s253 + $0x48] sm:$0xff]
        %v896 = vld [vmem:[%s253 + $0x50] sm:$0xf]
        %v897 = vld [vmem:[%s253 + $0x54] sm:$0xff]
        %v898 = vld [vmem:[%s253 + $0x5c] sm:$0xf]
        %v899 = vld [vmem:[%s253 + $0x60] sm:$0xff]
        %v900 = vld [vmem:[%s253 + $0x68] sm:$0xf]
        %v901 = vld [vmem:[%s253 + $0x6c] sm:$0xff]
        %v902 = vld [vmem:[%s253 + $0x74] sm:$0xf]
        %v903 = vld [vmem:[%s253 + $0x78] sm:$0xff]
        %v904 = vld [vmem:[%s253 + $0x80] sm:$0xf]
        %v905 = vld [vmem:[%s253 + $0x84] sm:$0xff]
        %v906 = vld [vmem:[%s253 + $0x8c] sm:$0xf]
        %v907 = vld [vmem:[%s253 + $0x90] sm:$0xff]
        %v908 = vld [vmem:[%s253 + $0x98] sm:$0xf]
        %v909 = vld [vmem:[%s253 + $0x9c] sm:$0xff]
        %v910 = vld [vmem:[%s253 + $0xa4] sm:$0xf]
        %v911 = vld [vmem:[%s253 + $0xa8] sm:$0xff]
        %v912 = vld [vmem:[%s253 + $0xb0] sm:$0xf]
        %v913 = vld [vmem:[%s253 + $0xb4] sm:$0xff]
        %v914 = vld [vmem:[%s253 + $0xbc] sm:$0xf]
        %v915 = vld [vmem:[%s253 + $0xc0] sm:$0xff]
        %v916 = vld [vmem:[%s253 + $0xc8] sm:$0xf]
        %v917 = vld [vmem:[%s253 + $0xcc] sm:$0xff]
        %v918 = vld [vmem:[%s253 + $0xd4] sm:$0xf]
        %v919 = vld [vmem:[%s253 + $0xd8] sm:$0xff]
        %v920 = vld [vmem:[%s253 + $0xe0] sm:$0xf]
        %v921 = vld [vmem:[%s253 + $0xe4] sm:$0xff]
        %v922 = vld [vmem:[%s253 + $0xec] sm:$0xf]
        %v923 = vld [vmem:[%s253 + $0xf0] sm:$0xff]
        %v924 = vld [vmem:[%s253 + $0xf8] sm:$0xf]
        %v925 = vld [vmem:[%s253 + $0xfc] sm:$0xff]
        %v926 = vld [vmem:[%s253 + $0x104] sm:$0xf]
        %v927 = vld [vmem:[%s253 + $0x108] sm:$0xff]
        %v928 = vld [vmem:[%s253 + $0x110] sm:$0xf]
        %v929 = vld [vmem:[%s253 + $0x114] sm:$0xff]
        %v930 = vld [vmem:[%s253 + $0x11c] sm:$0xf]
        %v931 = vld [vmem:[%s253 + $0x120] sm:$0xff]
        %v932 = vld [vmem:[%s253 + $0x128] sm:$0xf]
        %v933 = vld [vmem:[%s253 + $0x12c] sm:$0xff]
        %v934 = vld [vmem:[%s253 + $0x134] sm:$0xf]
        %v935 = vld [vmem:[%s253 + $0x138] sm:$0xff]
        %v936 = vld [vmem:[%s253 + $0x140] sm:$0xf]
        %v937 = vld [vmem:[%s253 + $0x144] sm:$0xff]
        %v938 = vld [vmem:[%s253 + $0x14c] sm:$0xf]
        %v939 = vld [vmem:[%s253 + $0x150] sm:$0xff]
        %v940 = vld [vmem:[%s253 + $0x158] sm:$0xf]
        %v941 = vld [vmem:[%s253 + $0x15c] sm:$0xff]
        %v942 = vld [vmem:[%s253 + $0x164] sm:$0xf]
        %v943 = vld [vmem:[%s253 + $0x168] sm:$0xff]
        %v944 = vld [vmem:[%s253 + $0x170] sm:$0xf]
        %v945 = vld [vmem:[%s253 + $0x174] sm:$0xff]
        %v946 = vld [vmem:[%s253 + $0x17c] sm:$0xf]
        %v1011 = vunpack.c.l.b16 %v883
        %v1012 = vunpack.c.h.b16 %v883
        %v1013 = vunpack.c.l.b16 %v884
        %v1014 = vunpack.c.l.b16 %v885
        %v1015 = vunpack.c.h.b16 %v885
        %v1016 = vunpack.c.l.b16 %v886
        %v1017 = vunpack.c.l.b16 %v887
        %v1018 = vunpack.c.h.b16 %v887
        %v1019 = vunpack.c.l.b16 %v888
        %v1020 = vunpack.c.l.b16 %v889
        %v1021 = vunpack.c.h.b16 %v889
        %v1022 = vunpack.c.l.b16 %v890
        %v1023 = vunpack.c.l.b16 %v891
        %v1024 = vunpack.c.h.b16 %v891
        %v1025 = vunpack.c.l.b16 %v892
        %v1026 = vunpack.c.l.b16 %v893
        %v1027 = vunpack.c.h.b16 %v893
        %v1028 = vunpack.c.l.b16 %v894
        %v1029 = vunpack.c.l.b16 %v895
        %v1030 = vunpack.c.h.b16 %v895
        %v1031 = vunpack.c.l.b16 %v896
        %v1032 = vunpack.c.l.b16 %v897
        %v1033 = vunpack.c.h.b16 %v897
        %v1034 = vunpack.c.l.b16 %v898
        %v1035 = vunpack.c.l.b16 %v899
        %v1036 = vunpack.c.h.b16 %v899
        %v1037 = vunpack.c.l.b16 %v900
        %v1038 = vunpack.c.l.b16 %v901
        %v1039 = vunpack.c.h.b16 %v901
        %v1040 = vunpack.c.l.b16 %v902
        %v1041 = vunpack.c.l.b16 %v903
        %v1042 = vunpack.c.h.b16 %v903
        %v1043 = vunpack.c.l.b16 %v904
        %v1044 = vunpack.c.l.b16 %v905
        %v1045 = vunpack.c.h.b16 %v905
        %v1046 = vunpack.c.l.b16 %v906
        %v1047 = vunpack.c.l.b16 %v907
        %v1048 = vunpack.c.h.b16 %v907
        %v1049 = vunpack.c.l.b16 %v908
        %v1050 = vunpack.c.l.b16 %v909
        %v1051 = vunpack.c.h.b16 %v909
        %v1052 = vunpack.c.l.b16 %v910
        %v1053 = vunpack.c.l.b16 %v911
        %v1054 = vunpack.c.h.b16 %v911
        %v1055 = vunpack.c.l.b16 %v912
        %v1056 = vunpack.c.l.b16 %v913
        %v1057 = vunpack.c.h.b16 %v913
        %v1058 = vunpack.c.l.b16 %v914
        %v1059 = vunpack.c.l.b16 %v915
        %v1060 = vunpack.c.h.b16 %v915
        %v1061 = vunpack.c.l.b16 %v916
        %v1062 = vunpack.c.l.b16 %v917
        %v1063 = vunpack.c.h.b16 %v917
        %v1064 = vunpack.c.l.b16 %v918
        %v1065 = vunpack.c.l.b16 %v919
        %v1066 = vunpack.c.h.b16 %v919
        %v1067 = vunpack.c.l.b16 %v920
        %v1068 = vunpack.c.l.b16 %v921
        %v1069 = vunpack.c.h.b16 %v921
        %v1070 = vunpack.c.l.b16 %v922
        %v1071 = vunpack.c.l.b16 %v923
        %v1072 = vunpack.c.h.b16 %v923
        %v1073 = vunpack.c.l.b16 %v924
        %v1074 = vunpack.c.l.b16 %v925
        %v1075 = vunpack.c.h.b16 %v925
        %v1076 = vunpack.c.l.b16 %v926
        %v1077 = vunpack.c.l.b16 %v927
        %v1078 = vunpack.c.h.b16 %v927
        %v1079 = vunpack.c.l.b16 %v928
        %v1080 = vunpack.c.l.b16 %v929
        %v1081 = vunpack.c.h.b16 %v929
        %v1082 = vunpack.c.l.b16 %v930
        %v1083 = vunpack.c.l.b16 %v931
        %v1084 = vunpack.c.h.b16 %v931
        %v1085 = vunpack.c.l.b16 %v932
        %v1086 = vunpack.c.l.b16 %v933
        %v1087 = vunpack.c.h.b16 %v933
        %v1088 = vunpack.c.l.b16 %v934
        %v1089 = vunpack.c.l.b16 %v935
        %v1090 = vunpack.c.h.b16 %v935
        %v1091 = vunpack.c.l.b16 %v936
        %v1092 = vunpack.c.l.b16 %v937
        %v1093 = vunpack.c.h.b16 %v937
        %v1094 = vunpack.c.l.b16 %v938
        %v1095 = vunpack.c.l.b16 %v939
        %v1096 = vunpack.c.h.b16 %v939
        %v1097 = vunpack.c.l.b16 %v940
        %v1098 = vunpack.c.l.b16 %v941
        %v1099 = vunpack.c.h.b16 %v941
        %v1100 = vunpack.c.l.b16 %v942
        %v1101 = vunpack.c.l.b16 %v943
        %v1102 = vunpack.c.h.b16 %v943
        %v1103 = vunpack.c.l.b16 %v944
        %v1104 = vunpack.c.l.b16 %v945
        %v1105 = vunpack.c.h.b16 %v945
        %v1106 = vunpack.c.l.b16 %v946
        %v1107 = vpack.c.b16 %v1014, %v1011
        %v1108 = vpack.c.b16 %v1015, %v1012
        %v1109 = vpack.c.b16 %v1016, %v1013
        %v1110 = vpack.c.b16 %v1020, %v1017
        %v1111 = vpack.c.b16 %v1021, %v1018
        %v1112 = vpack.c.b16 %v1022, %v1019
        %v1113 = vpack.c.b16 %v1026, %v1023
        %v1114 = vpack.c.b16 %v1027, %v1024
        %v1115 = vpack.c.b16 %v1028, %v1025
        %v1116 = vpack.c.b16 %v1032, %v1029
        %v1117 = vpack.c.b16 %v1033, %v1030
        %v1118 = vpack.c.b16 %v1034, %v1031
        %v1119 = vpack.c.b16 %v1038, %v1035
        %v1120 = vpack.c.b16 %v1039, %v1036
        %v1121 = vpack.c.b16 %v1040, %v1037
        %v1122 = vpack.c.b16 %v1044, %v1041
        %v1123 = vpack.c.b16 %v1045, %v1042
        %v1124 = vpack.c.b16 %v1046, %v1043
        %v1125 = vpack.c.b16 %v1050, %v1047
        %v1126 = vpack.c.b16 %v1051, %v1048
        %v1127 = vpack.c.b16 %v1052, %v1049
        %v1128 = vpack.c.b16 %v1056, %v1053
        %v1129 = vpack.c.b16 %v1057, %v1054
        %v1130 = vpack.c.b16 %v1058, %v1055
        %v1131 = vpack.c.b16 %v1062, %v1059
        %v1132 = vpack.c.b16 %v1063, %v1060
        %v1133 = vpack.c.b16 %v1064, %v1061
        %v1134 = vpack.c.b16 %v1068, %v1065
        %v1135 = vpack.c.b16 %v1069, %v1066
        %v1136 = vpack.c.b16 %v1070, %v1067
        %v1137 = vpack.c.b16 %v1074, %v1071
        %v1138 = vpack.c.b16 %v1075, %v1072
        %v1139 = vpack.c.b16 %v1076, %v1073
        %v1140 = vpack.c.b16 %v1080, %v1077
        %v1141 = vpack.c.b16 %v1081, %v1078
        %v1142 = vpack.c.b16 %v1082, %v1079
        %v1143 = vpack.c.b16 %v1086, %v1083
        %v1144 = vpack.c.b16 %v1087, %v1084
        %v1145 = vpack.c.b16 %v1088, %v1085
        %v1146 = vpack.c.b16 %v1092, %v1089
        %v1147 = vpack.c.b16 %v1093, %v1090
        %v1148 = vpack.c.b16 %v1094, %v1091
        %v1149 = vpack.c.b16 %v1098, %v1095
        %v1150 = vpack.c.b16 %v1099, %v1096
        %v1151 = vpack.c.b16 %v1100, %v1097
        %v1152 = vpack.c.b16 %v1104, %v1101
        %v1153 = vpack.c.b16 %v1105, %v1102
        %v1154 = vpack.c.b16 %v1106, %v1103
        %1203 = vmatprep.subr.bf16.mxu0 %v1108
        %1204 = vmatpush1.bf16.msra.mxu0 %v1107
        %1205 = vmatprep.subr.bf16.mxu0 %v1111
        %1206 = vmatpush1.bf16.msra.mxu0 %v1110
        %1207 = vmatprep.subr.bf16.mxu0 %v1114
        %1208 = vmatpush1.bf16.msra.mxu0 %v1113
        %1209 = vmatprep.subr.bf16.mxu0 %v1117
        %1210 = vmatpush1.bf16.msra.mxu0 %v1116
        %1211 = vmatprep.subr.bf16.mxu0 %v1120
        %1212 = vmatpush1.bf16.msra.mxu0 %v1119
        %1213 = vmatprep.subr.bf16.mxu0 %v1123
        %1214 = vmatpush1.bf16.msra.mxu0 %v1122
        %1215 = vmatprep.subr.bf16.mxu0 %v1126
        %1216 = vmatpush1.bf16.msra.mxu0 %v1125
        %1217 = vmatprep.subr.bf16.mxu0 %v1129
        %1218 = vmatpush1.bf16.msra.mxu0 %v1128
        %1219 = vmatprep.subr.bf16.mxu0 %v1132
        %1220 = vmatpush1.bf16.msra.mxu0 %v1131
        %1221 = vmatprep.subr.bf16.mxu0 %v1135
        %1222 = vmatpush1.bf16.msra.mxu0 %v1134
        %1223 = vmatprep.subr.bf16.mxu0 %v1138
        %1224 = vmatpush1.bf16.msra.mxu0 %v1137
        %1225 = vmatprep.subr.bf16.mxu0 %v1141
        %1226 = vmatpush1.bf16.msra.mxu0 %v1140
        %1227 = vmatprep.subr.bf16.mxu0 %v1144
        %1228 = vmatpush1.bf16.msra.mxu0 %v1143
        %1229 = vmatprep.subr.bf16.mxu0 %v1147
        %1230 = vmatpush1.bf16.msra.mxu0 %v1146
        %1231 = vmatprep.subr.bf16.mxu0 %v1150
        %1232 = vmatpush1.bf16.msra.mxu0 %v1149
        %1233 = vmatprep.subr.bf16.mxu0 %v1153
        %1234 = vmatpush1.bf16.msra.mxu0 %v1152
        %1235 = vmatprep.mubr.bf16.mxu0 %v820
        %1236 = vmatmul.mubr.bf16.gmra.mrb[0].mxu0 %v819
        %v1237 = vpop.f32.mrb[0].mxu0
        %v1238 = vadd.f32 0.0, %v1237
        %v1239 = vpop.f32.mrb[0].mxu0
        %v1240 = vadd.f32 0.0, %v1239
        %v1241 = vpop.f32.mrb[0].mxu0
        %v1242 = vadd.f32 0.0, %v1241
        %v1243 = vpop.f32.mrb[0].mxu0
        %v1244 = vadd.f32 0.0, %v1243
        %1245 = vmatprep.mubr.bf16.mxu0 %v822
        %1246 = vmatmul.mubr.bf16.gmra.mrb[0].mxu0 %v821
        %v1247 = vpop.f32.mrb[0].mxu0
        %v1248 = vadd.f32 0.0, %v1247
        %v1249 = vpop.f32.mrb[0].mxu0
        %v1250 = vadd.f32 0.0, %v1249
        %v1251 = vpop.f32.mrb[0].mxu0
        %v1252 = vadd.f32 0.0, %v1251
        %v1253 = vpop.f32.mrb[0].mxu0
        %v1254 = vadd.f32 0.0, %v1253
        %1255 = vmatprep.mubr.bf16.mxu0 %v824
        %1256 = vmatmul.mubr.bf16.gmra.mrb[0].mxu0 %v823
        %v1257 = vpop.f32.mrb[0].mxu0
        %v1258 = vadd.f32 0.0, %v1257
        %v1259 = vpop.f32.mrb[0].mxu0
        %v1260 = vadd.f32 0.0, %v1259
        %v1261 = vpop.f32.mrb[0].mxu0
        %v1262 = vadd.f32 0.0, %v1261
        %v1263 = vpop.f32.mrb[0].mxu0
        %v1264 = vadd.f32 0.0, %v1263
        %1265 = vmatprep.mubr.bf16.mxu0 %v826
        %1266 = vmatmul.mubr.bf16.gmra.mrb[0].mxu0 %v825
        %v1267 = vpop.f32.mrb[0].mxu0
        %v1268 = vadd.f32 0.0, %v1267
        %v1269 = vpop.f32.mrb[0].mxu0
        %v1270 = vadd.f32 0.0, %v1269
        %v1271 = vpop.f32.mrb[0].mxu0
        %v1272 = vadd.f32 0.0, %v1271
        %v1273 = vpop.f32.mrb[0].mxu0
        %v1274 = vadd.f32 0.0, %v1273
        %1275 = vmatprep.mubr.bf16.mxu0 %v828
        %1276 = vmatmul.mubr.bf16.gmra.mrb[0].mxu0 %v827
        %v1277 = vpop.f32.mrb[0].mxu0
        %v1278 = vadd.f32 0.0, %v1277
        %v1279 = vpop.f32.mrb[0].mxu0
        %v1280 = vadd.f32 0.0, %v1279
        %v1281 = vpop.f32.mrb[0].mxu0
        %v1282 = vadd.f32 0.0, %v1281
        %v1283 = vpop.f32.mrb[0].mxu0
        %v1284 = vadd.f32 0.0, %v1283
        %1285 = vmatprep.mubr.bf16.mxu0 %v830
        %1286 = vmatmul.mubr.bf16.gmra.mrb[0].mxu0 %v829
        %v1287 = vpop.f32.mrb[0].mxu0
        %v1288 = vadd.f32 0.0, %v1287
        %v1289 = vpop.f32.mrb[0].mxu0
        %v1290 = vadd.f32 0.0, %v1289
        %v1291 = vpop.f32.mrb[0].mxu0
        %v1292 = vadd.f32 0.0, %v1291
        %v1293 = vpop.f32.mrb[0].mxu0
        %v1294 = vadd.f32 0.0, %v1293
        %1295 = vmatprep.mubr.bf16.mxu0 %v832
        %1296 = vmatmul.mubr.bf16.gmra.mrb[0].mxu0 %v831
        %v1297 = vpop.f32.mrb[0].mxu0
        %v1298 = vadd.f32 0.0, %v1297
        %v1299 = vpop.f32.mrb[0].mxu0
        %v1300 = vadd.f32 0.0, %v1299
        %v1301 = vpop.f32.mrb[0].mxu0
        %v1302 = vadd.f32 0.0, %v1301
        %v1303 = vpop.f32.mrb[0].mxu0
        %v1304 = vadd.f32 0.0, %v1303
        %1305 = vmatprep.mubr.bf16.mxu0 %v834
        %1306 = vmatmul.mubr.bf16.gmra.mrb[0].mxu0 %v833
        %v1307 = vpop.f32.mrb[0].mxu0
        %v1308 = vadd.f32 0.0, %v1307
        %v1309 = vpop.f32.mrb[0].mxu0
        %v1310 = vadd.f32 0.0, %v1309
        %v1311 = vpop.f32.mrb[0].mxu0
        %v1312 = vadd.f32 0.0, %v1311
        %v1313 = vpop.f32.mrb[0].mxu0
        %v1314 = vadd.f32 0.0, %v1313
        %1315 = vmatprep.mubr.bf16.mxu0 %v836
        %1316 = vmatmul.mubr.bf16.gmra.mrb[0].mxu0 %v835
        %v1317 = vpop.f32.mrb[0].mxu0
        %v1318 = vadd.f32 0.0, %v1317
        %v1319 = vpop.f32.mrb[0].mxu0
        %v1320 = vadd.f32 0.0, %v1319
        %v1321 = vpop.f32.mrb[0].mxu0
        %v1322 = vadd.f32 0.0, %v1321
        %v1323 = vpop.f32.mrb[0].mxu0
        %v1324 = vadd.f32 0.0, %v1323
        %1325 = vmatprep.mubr.bf16.mxu0 %v838
        %1326 = vmatmul.mubr.bf16.gmra.mrb[0].mxu0 %v837
        %v1327 = vpop.f32.mrb[0].mxu0
        %v1328 = vadd.f32 0.0, %v1327
        %v1329 = vpop.f32.mrb[0].mxu0
        %v1330 = vadd.f32 0.0, %v1329
        %v1331 = vpop.f32.mrb[0].mxu0
        %v1332 = vadd.f32 0.0, %v1331
        %v1333 = vpop.f32.mrb[0].mxu0
        %v1334 = vadd.f32 0.0, %v1333
        %1335 = vmatprep.mubr.bf16.mxu0 %v840
        %1336 = vmatmul.mubr.bf16.gmra.mrb[0].mxu0 %v839
        %v1337 = vpop.f32.mrb[0].mxu0
        %v1338 = vadd.f32 0.0, %v1337
        %v1339 = vpop.f32.mrb[0].mxu0
        %v1340 = vadd.f32 0.0, %v1339
        %v1341 = vpop.f32.mrb[0].mxu0
        %v1342 = vadd.f32 0.0, %v1341
        %v1343 = vpop.f32.mrb[0].mxu0
        %v1344 = vadd.f32 0.0, %v1343
        %1345 = vmatprep.mubr.bf16.mxu0 %v842
        %1346 = vmatmul.mubr.bf16.gmra.mrb[0].mxu0 %v841
        %v1347 = vpop.f32.mrb[0].mxu0
        %v1348 = vadd.f32 0.0, %v1347
        %v1349 = vpop.f32.mrb[0].mxu0
        %v1350 = vadd.f32 0.0, %v1349
        %v1351 = vpop.f32.mrb[0].mxu0
        %v1352 = vadd.f32 0.0, %v1351
        %v1353 = vpop.f32.mrb[0].mxu0
        %v1354 = vadd.f32 0.0, %v1353
        %1355 = vmatprep.mubr.bf16.mxu0 %v844
        %1356 = vmatmul.mubr.bf16.gmra.mrb[0].mxu0 %v843
        %v1357 = vpop.f32.mrb[0].mxu0
        %v1358 = vadd.f32 0.0, %v1357
        %v1359 = vpop.f32.mrb[0].mxu0
        %v1360 = vadd.f32 0.0, %v1359
        %v1361 = vpop.f32.mrb[0].mxu0
        %v1362 = vadd.f32 0.0, %v1361
        %v1363 = vpop.f32.mrb[0].mxu0
        %v1364 = vadd.f32 0.0, %v1363
        %1365 = vmatprep.mubr.bf16.mxu0 %v846
        %1366 = vmatmul.mubr.bf16.gmra.mrb[0].mxu0 %v845
        %v1367 = vpop.f32.mrb[0].mxu0
        %v1368 = vadd.f32 0.0, %v1367
        %v1369 = vpop.f32.mrb[0].mxu0
        %v1370 = vadd.f32 0.0, %v1369
        %v1371 = vpop.f32.mrb[0].mxu0
        %v1372 = vadd.f32 0.0, %v1371
        %v1373 = vpop.f32.mrb[0].mxu0
        %v1374 = vadd.f32 0.0, %v1373
        %1375 = vmatprep.mubr.bf16.mxu0 %v848
        %1376 = vmatmul.mubr.bf16.gmra.mrb[0].mxu0 %v847
        %v1377 = vpop.f32.mrb[0].mxu0
        %v1378 = vadd.f32 0.0, %v1377
        %v1379 = vpop.f32.mrb[0].mxu0
        %v1380 = vadd.f32 0.0, %v1379
        %v1381 = vpop.f32.mrb[0].mxu0
        %v1382 = vadd.f32 0.0, %v1381
        %v1383 = vpop.f32.mrb[0].mxu0
        %v1384 = vadd.f32 0.0, %v1383
        %1385 = vmatprep.mubr.bf16.mxu0 %v850
        %1386 = vmatmul.mubr.bf16.gmra.mrb[0].mxu0 %v849
        %v1387 = vpop.f32.mrb[0].mxu0
        %v1388 = vadd.f32 0.0, %v1387
        %v1389 = vpop.f32.mrb[0].mxu0
        %v1390 = vadd.f32 0.0, %v1389
        %v1391 = vpop.f32.mrb[0].mxu0
        %v1392 = vadd.f32 0.0, %v1391
        %v1393 = vpop.f32.mrb[0].mxu0
        %v1394 = vadd.f32 0.0, %v1393
        %1395 = vmatprep.mubr.bf16.mxu0 %v852
        %1396 = vmatmul.mubr.bf16.gmra.mrb[0].mxu0 %v851
        %v1397 = vpop.f32.mrb[0].mxu0
        %v1398 = vadd.f32 0.0, %v1397
        %v1399 = vpop.f32.mrb[0].mxu0
        %v1400 = vadd.f32 0.0, %v1399
        %v1401 = vpop.f32.mrb[0].mxu0
        %v1402 = vadd.f32 0.0, %v1401
        %v1403 = vpop.f32.mrb[0].mxu0
        %v1404 = vadd.f32 0.0, %v1403
        %1405 = vmatprep.mubr.bf16.mxu0 %v854
        %1406 = vmatmul.mubr.bf16.gmra.mrb[0].mxu0 %v853
        %v1407 = vpop.f32.mrb[0].mxu0
        %v1408 = vadd.f32 0.0, %v1407
        %v1409 = vpop.f32.mrb[0].mxu0
        %v1410 = vadd.f32 0.0, %v1409
        %v1411 = vpop.f32.mrb[0].mxu0
        %v1412 = vadd.f32 0.0, %v1411
        %v1413 = vpop.f32.mrb[0].mxu0
        %v1414 = vadd.f32 0.0, %v1413
        %1415 = vmatprep.mubr.bf16.mxu0 %v856
        %1416 = vmatmul.mubr.bf16.gmra.mrb[0].mxu0 %v855
        %v1417 = vpop.f32.mrb[0].mxu0
        %v1418 = vadd.f32 0.0, %v1417
        %v1419 = vpop.f32.mrb[0].mxu0
        %v1420 = vadd.f32 0.0, %v1419
        %v1421 = vpop.f32.mrb[0].mxu0
        %v1422 = vadd.f32 0.0, %v1421
        %v1423 = vpop.f32.mrb[0].mxu0
        %v1424 = vadd.f32 0.0, %v1423
        %1425 = vmatprep.mubr.bf16.mxu0 %v858
        %1426 = vmatmul.mubr.bf16.gmra.mrb[0].mxu0 %v857
        %v1427 = vpop.f32.mrb[0].mxu0
        %v1428 = vadd.f32 0.0, %v1427
        %v1429 = vpop.f32.mrb[0].mxu0
        %v1430 = vadd.f32 0.0, %v1429
        %v1431 = vpop.f32.mrb[0].mxu0
        %v1432 = vadd.f32 0.0, %v1431
        %v1433 = vpop.f32.mrb[0].mxu0
        %v1434 = vadd.f32 0.0, %v1433
        %1435 = vmatprep.mubr.bf16.mxu0 %v860
        %1436 = vmatmul.mubr.bf16.gmra.mrb[0].mxu0 %v859
        %v1437 = vpop.f32.mrb[0].mxu0
        %v1438 = vadd.f32 0.0, %v1437
        %v1439 = vpop.f32.mrb[0].mxu0
        %v1440 = vadd.f32 0.0, %v1439
        %v1441 = vpop.f32.mrb[0].mxu0
        %v1442 = vadd.f32 0.0, %v1441
        %v1443 = vpop.f32.mrb[0].mxu0
        %v1444 = vadd.f32 0.0, %v1443
        %1445 = vmatprep.mubr.bf16.mxu0 %v862
        %1446 = vmatmul.mubr.bf16.gmra.mrb[0].mxu0 %v861
        %v1447 = vpop.f32.mrb[0].mxu0
        %v1448 = vadd.f32 0.0, %v1447
        %v1449 = vpop.f32.mrb[0].mxu0
        %v1450 = vadd.f32 0.0, %v1449
        %v1451 = vpop.f32.mrb[0].mxu0
        %v1452 = vadd.f32 0.0, %v1451
        %v1453 = vpop.f32.mrb[0].mxu0
        %v1454 = vadd.f32 0.0, %v1453
        %1455 = vmatprep.mubr.bf16.mxu0 %v864
        %1456 = vmatmul.mubr.bf16.gmra.mrb[0].mxu0 %v863
        %v1457 = vpop.f32.mrb[0].mxu0
        %v1458 = vadd.f32 0.0, %v1457
        %v1459 = vpop.f32.mrb[0].mxu0
        %v1460 = vadd.f32 0.0, %v1459
        %v1461 = vpop.f32.mrb[0].mxu0
        %v1462 = vadd.f32 0.0, %v1461
        %v1463 = vpop.f32.mrb[0].mxu0
        %v1464 = vadd.f32 0.0, %v1463
        %1465 = vmatprep.mubr.bf16.mxu0 %v866
        %1466 = vmatmul.mubr.bf16.gmra.mrb[0].mxu0 %v865
        %v1467 = vpop.f32.mrb[0].mxu0
        %v1468 = vadd.f32 0.0, %v1467
        %v1469 = vpop.f32.mrb[0].mxu0
        %v1470 = vadd.f32 0.0, %v1469
        %v1471 = vpop.f32.mrb[0].mxu0
        %v1472 = vadd.f32 0.0, %v1471
        %v1473 = vpop.f32.mrb[0].mxu0
        %v1474 = vadd.f32 0.0, %v1473
        %1475 = vmatprep.mubr.bf16.mxu0 %v868
        %1476 = vmatmul.mubr.bf16.gmra.mrb[0].mxu0 %v867
        %v1477 = vpop.f32.mrb[0].mxu0
        %v1478 = vadd.f32 0.0, %v1477
        %v1479 = vpop.f32.mrb[0].mxu0
        %v1480 = vadd.f32 0.0, %v1479
        %v1481 = vpop.f32.mrb[0].mxu0
        %v1482 = vadd.f32 0.0, %v1481
        %v1483 = vpop.f32.mrb[0].mxu0
        %v1484 = vadd.f32 0.0, %v1483
        %1485 = vmatprep.mubr.bf16.mxu0 %v870
        %1486 = vmatmul.mubr.bf16.gmra.mrb[0].mxu0 %v869
        %v1487 = vpop.f32.mrb[0].mxu0
        %v1488 = vadd.f32 0.0, %v1487
        %v1489 = vpop.f32.mrb[0].mxu0
        %v1490 = vadd.f32 0.0, %v1489
        %v1491 = vpop.f32.mrb[0].mxu0
        %v1492 = vadd.f32 0.0, %v1491
        %v1493 = vpop.f32.mrb[0].mxu0
        %v1494 = vadd.f32 0.0, %v1493
        %1495 = vmatprep.mubr.bf16.mxu0 %v872
        %1496 = vmatmul.mubr.bf16.gmra.mrb[0].mxu0 %v871
        %v1497 = vpop.f32.mrb[0].mxu0
        %v1498 = vadd.f32 0.0, %v1497
        %v1499 = vpop.f32.mrb[0].mxu0
        %v1500 = vadd.f32 0.0, %v1499
        %v1501 = vpop.f32.mrb[0].mxu0
        %v1502 = vadd.f32 0.0, %v1501
        %v1503 = vpop.f32.mrb[0].mxu0
        %v1504 = vadd.f32 0.0, %v1503
        %1505 = vmatprep.mubr.bf16.mxu0 %v874
        %1506 = vmatmul.mubr.bf16.gmra.mrb[0].mxu0 %v873
        %v1507 = vpop.f32.mrb[0].mxu0
        %v1508 = vadd.f32 0.0, %v1507
        %v1509 = vpop.f32.mrb[0].mxu0
        %v1510 = vadd.f32 0.0, %v1509
        %v1511 = vpop.f32.mrb[0].mxu0
        %v1512 = vadd.f32 0.0, %v1511
        %v1513 = vpop.f32.mrb[0].mxu0
        %v1514 = vadd.f32 0.0, %v1513
        %1515 = vmatprep.mubr.bf16.mxu0 %v876
        %1516 = vmatmul.mubr.bf16.gmra.mrb[0].mxu0 %v875
        %v1517 = vpop.f32.mrb[0].mxu0
        %v1518 = vadd.f32 0.0, %v1517
        %v1519 = vpop.f32.mrb[0].mxu0
        %v1520 = vadd.f32 0.0, %v1519
        %v1521 = vpop.f32.mrb[0].mxu0
        %v1522 = vadd.f32 0.0, %v1521
        %v1523 = vpop.f32.mrb[0].mxu0
        %v1524 = vadd.f32 0.0, %v1523
        %1525 = vmatprep.mubr.bf16.mxu0 %v878
        %1526 = vmatmul.mubr.bf16.gmra.mrb[0].mxu0 %v877
        %v1527 = vpop.f32.mrb[0].mxu0
        %v1528 = vadd.f32 0.0, %v1527
        %v1529 = vpop.f32.mrb[0].mxu0
        %v1530 = vadd.f32 0.0, %v1529
        %v1531 = vpop.f32.mrb[0].mxu0
        %v1532 = vadd.f32 0.0, %v1531
        %v1533 = vpop.f32.mrb[0].mxu0
        %v1534 = vadd.f32 0.0, %v1533
        %1535 = vmatprep.mubr.bf16.mxu0 %v880
        %1536 = vmatmul.mubr.bf16.gmra.mrb[0].mxu0 %v879
        %v1537 = vpop.f32.mrb[0].mxu0
        %v1538 = vadd.f32 0.0, %v1537
        %v1539 = vpop.f32.mrb[0].mxu0
        %v1540 = vadd.f32 0.0, %v1539
        %v1541 = vpop.f32.mrb[0].mxu0
        %v1542 = vadd.f32 0.0, %v1541
        %v1543 = vpop.f32.mrb[0].mxu0
        %v1544 = vadd.f32 0.0, %v1543
        %1545 = vmatprep.mubr.bf16.mxu0 %v882
        %1546 = vmatmul.mubr.bf16.gmra.mrb[0].mxu0 %v881
        %v1547 = vpop.f32.mrb[0].mxu0
        %v1548 = vadd.f32 0.0, %v1547
        %v1549 = vpop.f32.mrb[0].mxu0
        %v1550 = vadd.f32 0.0, %v1549
        %v1551 = vpop.f32.mrb[0].mxu0
        %v1552 = vadd.f32 0.0, %v1551
        %v1553 = vpop.f32.mrb[0].mxu0
        %v1554 = vadd.f32 0.0, %v1553
        %1555 = vdwg.mxu0
        %1556 = vmatprep.subr.bf16.mxu0 0
        %1557 = vmatpush1.bf16.msra.mxu0 %v1109
        %1558 = vmatprep.subr.bf16.mxu0 0
        %1559 = vmatpush1.bf16.msra.mxu0 %v1112
        %1560 = vmatprep.subr.bf16.mxu0 0
        %1561 = vmatpush1.bf16.msra.mxu0 %v1115
        %1562 = vmatprep.subr.bf16.mxu0 0
        %1563 = vmatpush1.bf16.msra.mxu0 %v1118
        %1564 = vmatprep.subr.bf16.mxu0 0
        %1565 = vmatpush1.bf16.msra.mxu0 %v1121
        %1566 = vmatprep.subr.bf16.mxu0 0
        %1567 = vmatpush1.bf16.msra.mxu0 %v1124
        %1568 = vmatprep.subr.bf16.mxu0 0
        %1569 = vmatpush1.bf16.msra.mxu0 %v1127
        %1570 = vmatprep.subr.bf16.mxu0 0
        %1571 = vmatpush1.bf16.msra.mxu0 %v1130
        %1572 = vmatprep.subr.bf16.mxu0 0
        %1573 = vmatpush1.bf16.msra.mxu0 %v1133
        %1574 = vmatprep.subr.bf16.mxu0 0
        %1575 = vmatpush1.bf16.msra.mxu0 %v1136
        %1576 = vmatprep.subr.bf16.mxu0 0
        %1577 = vmatpush1.bf16.msra.mxu0 %v1139
        %1578 = vmatprep.subr.bf16.mxu0 0
        %1579 = vmatpush1.bf16.msra.mxu0 %v1142
        %1580 = vmatprep.subr.bf16.mxu0 0
        %1581 = vmatpush1.bf16.msra.mxu0 %v1145
        %1582 = vmatprep.subr.bf16.mxu0 0
        %1583 = vmatpush1.bf16.msra.mxu0 %v1148
        %1584 = vmatprep.subr.bf16.mxu0 0
        %1585 = vmatpush1.bf16.msra.mxu0 %v1151
        %1586 = vmatprep.subr.bf16.mxu0 0
        %1587 = vmatpush1.bf16.msra.mxu0 %v1154
        %1588 = vmatprep.mubr.bf16.mxu0 %v820
        %1589 = vmatmul.mubr.bf16.gmra.mrb[0].mxu0 %v819
        %v1590 = vpop.f32.mrb[0].mxu0
        %v1591 = vadd.f32 0.0, %v1590
        %v1592 = vpop.f32.mrb[0].mxu0
        %v1593 = vpop.f32.mrb[0].mxu0
        %v1594 = vadd.f32 0.0, %v1593
        %v1595 = vpop.f32.mrb[0].mxu0
        %1596 = vmatprep.mubr.bf16.mxu0 %v822
        %1597 = vmatmul.mubr.bf16.gmra.mrb[0].mxu0 %v821
        %v1598 = vpop.f32.mrb[0].mxu0
        %v1599 = vadd.f32 0.0, %v1598
        %v1600 = vpop.f32.mrb[0].mxu0
        %v1601 = vpop.f32.mrb[0].mxu0
        %v1602 = vadd.f32 0.0, %v1601
        %v1603 = vpop.f32.mrb[0].mxu0
        %1604 = vmatprep.mubr.bf16.mxu0 %v824
        %1605 = vmatmul.mubr.bf16.gmra.mrb[0].mxu0 %v823
        %v1606 = vpop.f32.mrb[0].mxu0
        %v1607 = vadd.f32 0.0, %v1606
        %v1608 = vpop.f32.mrb[0].mxu0
        %v1609 = vpop.f32.mrb[0].mxu0
        %v1610 = vadd.f32 0.0, %v1609
        %v1611 = vpop.f32.mrb[0].mxu0
        %1612 = vmatprep.mubr.bf16.mxu0 %v826
        %1613 = vmatmul.mubr.bf16.gmra.mrb[0].mxu0 %v825
        %v1614 = vpop.f32.mrb[0].mxu0
        %v1615 = vadd.f32 0.0, %v1614
        %v1616 = vpop.f32.mrb[0].mxu0
        %v1617 = vpop.f32.mrb[0].mxu0
        %v1618 = vadd.f32 0.0, %v1617
        %v1619 = vpop.f32.mrb[0].mxu0
        %1620 = vmatprep.mubr.bf16.mxu0 %v828
        %1621 = vmatmul.mubr.bf16.gmra.mrb[0].mxu0 %v827
        %v1622 = vpop.f32.mrb[0].mxu0
        %v1623 = vadd.f32 0.0, %v1622
        %v1624 = vpop.f32.mrb[0].mxu0
        %v1625 = vpop.f32.mrb[0].mxu0
        %v1626 = vadd.f32 0.0, %v1625
        %v1627 = vpop.f32.mrb[0].mxu0
        %1628 = vmatprep.mubr.bf16.mxu0 %v830
        %1629 = vmatmul.mubr.bf16.gmra.mrb[0].mxu0 %v829
        %v1630 = vpop.f32.mrb[0].mxu0
        %v1631 = vadd.f32 0.0, %v1630
        %v1632 = vpop.f32.mrb[0].mxu0
        %v1633 = vpop.f32.mrb[0].mxu0
        %v1634 = vadd.f32 0.0, %v1633
        %v1635 = vpop.f32.mrb[0].mxu0
        %1636 = vmatprep.mubr.bf16.mxu0 %v832
        %1637 = vmatmul.mubr.bf16.gmra.mrb[0].mxu0 %v831
        %v1638 = vpop.f32.mrb[0].mxu0
        %v1639 = vadd.f32 0.0, %v1638
        %v1640 = vpop.f32.mrb[0].mxu0
        %v1641 = vpop.f32.mrb[0].mxu0
        %v1642 = vadd.f32 0.0, %v1641
        %v1643 = vpop.f32.mrb[0].mxu0
        %1644 = vmatprep.mubr.bf16.mxu0 %v834
        %1645 = vmatmul.mubr.bf16.gmra.mrb[0].mxu0 %v833
        %v1646 = vpop.f32.mrb[0].mxu0
        %v1647 = vadd.f32 0.0, %v1646
        %v1648 = vpop.f32.mrb[0].mxu0
        %v1649 = vpop.f32.mrb[0].mxu0
        %v1650 = vadd.f32 0.0, %v1649
        %v1651 = vpop.f32.mrb[0].mxu0
        %1652 = vmatprep.mubr.bf16.mxu0 %v836
        %1653 = vmatmul.mubr.bf16.gmra.mrb[0].mxu0 %v835
        %v1654 = vpop.f32.mrb[0].mxu0
        %v1655 = vadd.f32 0.0, %v1654
        %v1656 = vpop.f32.mrb[0].mxu0
        %v1657 = vpop.f32.mrb[0].mxu0
        %v1658 = vadd.f32 0.0, %v1657
        %v1659 = vpop.f32.mrb[0].mxu0
        %1660 = vmatprep.mubr.bf16.mxu0 %v838
        %1661 = vmatmul.mubr.bf16.gmra.mrb[0].mxu0 %v837
        %v1662 = vpop.f32.mrb[0].mxu0
        %v1663 = vadd.f32 0.0, %v1662
        %v1664 = vpop.f32.mrb[0].mxu0
        %v1665 = vpop.f32.mrb[0].mxu0
        %v1666 = vadd.f32 0.0, %v1665
        %v1667 = vpop.f32.mrb[0].mxu0
        %1668 = vmatprep.mubr.bf16.mxu0 %v840
        %1669 = vmatmul.mubr.bf16.gmra.mrb[0].mxu0 %v839
        %v1670 = vpop.f32.mrb[0].mxu0
        %v1671 = vadd.f32 0.0, %v1670
        %v1672 = vpop.f32.mrb[0].mxu0
        %v1673 = vpop.f32.mrb[0].mxu0
        %v1674 = vadd.f32 0.0, %v1673
        %v1675 = vpop.f32.mrb[0].mxu0
        %1676 = vmatprep.mubr.bf16.mxu0 %v842
        %1677 = vmatmul.mubr.bf16.gmra.mrb[0].mxu0 %v841
        %v1678 = vpop.f32.mrb[0].mxu0
        %v1679 = vadd.f32 0.0, %v1678
        %v1680 = vpop.f32.mrb[0].mxu0
        %v1681 = vpop.f32.mrb[0].mxu0
        %v1682 = vadd.f32 0.0, %v1681
        %v1683 = vpop.f32.mrb[0].mxu0
        %1684 = vmatprep.mubr.bf16.mxu0 %v844
        %1685 = vmatmul.mubr.bf16.gmra.mrb[0].mxu0 %v843
        %v1686 = vpop.f32.mrb[0].mxu0
        %v1687 = vadd.f32 0.0, %v1686
        %v1688 = vpop.f32.mrb[0].mxu0
        %v1689 = vpop.f32.mrb[0].mxu0
        %v1690 = vadd.f32 0.0, %v1689
        %v1691 = vpop.f32.mrb[0].mxu0
        %1692 = vmatprep.mubr.bf16.mxu0 %v846
        %1693 = vmatmul.mubr.bf16.gmra.mrb[0].mxu0 %v845
        %v1694 = vpop.f32.mrb[0].mxu0
        %v1695 = vadd.f32 0.0, %v1694
        %v1696 = vpop.f32.mrb[0].mxu0
        %v1697 = vpop.f32.mrb[0].mxu0
        %v1698 = vadd.f32 0.0, %v1697
        %v1699 = vpop.f32.mrb[0].mxu0
        %1700 = vmatprep.mubr.bf16.mxu0 %v848
        %1701 = vmatmul.mubr.bf16.gmra.mrb[0].mxu0 %v847
        %v1702 = vpop.f32.mrb[0].mxu0
        %v1703 = vadd.f32 0.0, %v1702
        %v1704 = vpop.f32.mrb[0].mxu0
        %v1705 = vpop.f32.mrb[0].mxu0
        %v1706 = vadd.f32 0.0, %v1705
        %v1707 = vpop.f32.mrb[0].mxu0
        %1708 = vmatprep.mubr.bf16.mxu0 %v850
        %1709 = vmatmul.mubr.bf16.gmra.mrb[0].mxu0 %v849
        %v1710 = vpop.f32.mrb[0].mxu0
        %v1711 = vadd.f32 0.0, %v1710
        %v1712 = vpop.f32.mrb[0].mxu0
        %v1713 = vpop.f32.mrb[0].mxu0
        %v1714 = vadd.f32 0.0, %v1713
        %v1715 = vpop.f32.mrb[0].mxu0
        %1716 = vmatprep.mubr.bf16.mxu0 %v852
        %1717 = vmatmul.mubr.bf16.gmra.mrb[0].mxu0 %v851
        %v1718 = vpop.f32.mrb[0].mxu0
        %v1719 = vadd.f32 0.0, %v1718
        %v1720 = vpop.f32.mrb[0].mxu0
        %v1721 = vpop.f32.mrb[0].mxu0
        %v1722 = vadd.f32 0.0, %v1721
        %v1723 = vpop.f32.mrb[0].mxu0
        %1724 = vmatprep.mubr.bf16.mxu0 %v854
        %1725 = vmatmul.mubr.bf16.gmra.mrb[0].mxu0 %v853
        %v1726 = vpop.f32.mrb[0].mxu0
        %v1727 = vadd.f32 0.0, %v1726
        %v1728 = vpop.f32.mrb[0].mxu0
        %v1729 = vpop.f32.mrb[0].mxu0
        %v1730 = vadd.f32 0.0, %v1729
        %v1731 = vpop.f32.mrb[0].mxu0
        %1732 = vmatprep.mubr.bf16.mxu0 %v856
        %1733 = vmatmul.mubr.bf16.gmra.mrb[0].mxu0 %v855
        %v1734 = vpop.f32.mrb[0].mxu0
        %v1735 = vadd.f32 0.0, %v1734
        %v1736 = vpop.f32.mrb[0].mxu0
        %v1737 = vpop.f32.mrb[0].mxu0
        %v1738 = vadd.f32 0.0, %v1737
        %v1739 = vpop.f32.mrb[0].mxu0
        %1740 = vmatprep.mubr.bf16.mxu0 %v858
        %1741 = vmatmul.mubr.bf16.gmra.mrb[0].mxu0 %v857
        %v1742 = vpop.f32.mrb[0].mxu0
        %v1743 = vadd.f32 0.0, %v1742
        %v1744 = vpop.f32.mrb[0].mxu0
        %v1745 = vpop.f32.mrb[0].mxu0
        %v1746 = vadd.f32 0.0, %v1745
        %v1747 = vpop.f32.mrb[0].mxu0
        %1748 = vmatprep.mubr.bf16.mxu0 %v860
        %1749 = vmatmul.mubr.bf16.gmra.mrb[0].mxu0 %v859
        %v1750 = vpop.f32.mrb[0].mxu0
        %v1751 = vadd.f32 0.0, %v1750
        %v1752 = vpop.f32.mrb[0].mxu0
        %v1753 = vpop.f32.mrb[0].mxu0
        %v1754 = vadd.f32 0.0, %v1753
        %v1755 = vpop.f32.mrb[0].mxu0
        %1756 = vmatprep.mubr.bf16.mxu0 %v862
        %1757 = vmatmul.mubr.bf16.gmra.mrb[0].mxu0 %v861
        %v1758 = vpop.f32.mrb[0].mxu0
        %v1759 = vadd.f32 0.0, %v1758
        %v1760 = vpop.f32.mrb[0].mxu0
        %v1761 = vpop.f32.mrb[0].mxu0
        %v1762 = vadd.f32 0.0, %v1761
        %v1763 = vpop.f32.mrb[0].mxu0
        %1764 = vmatprep.mubr.bf16.mxu0 %v864
        %1765 = vmatmul.mubr.bf16.gmra.mrb[0].mxu0 %v863
        %v1766 = vpop.f32.mrb[0].mxu0
        %v1767 = vadd.f32 0.0, %v1766
        %v1768 = vpop.f32.mrb[0].mxu0
        %v1769 = vpop.f32.mrb[0].mxu0
        %v1770 = vadd.f32 0.0, %v1769
        %v1771 = vpop.f32.mrb[0].mxu0
        %1772 = vmatprep.mubr.bf16.mxu0 %v866
        %1773 = vmatmul.mubr.bf16.gmra.mrb[0].mxu0 %v865
        %v1774 = vpop.f32.mrb[0].mxu0
        %v1775 = vadd.f32 0.0, %v1774
        %v1776 = vpop.f32.mrb[0].mxu0
        %v1777 = vpop.f32.mrb[0].mxu0
        %v1778 = vadd.f32 0.0, %v1777
        %v1779 = vpop.f32.mrb[0].mxu0
        %1780 = vmatprep.mubr.bf16.mxu0 %v868
        %1781 = vmatmul.mubr.bf16.gmra.mrb[0].mxu0 %v867
        %v1782 = vpop.f32.mrb[0].mxu0
        %v1783 = vadd.f32 0.0, %v1782
        %v1784 = vpop.f32.mrb[0].mxu0
        %v1785 = vpop.f32.mrb[0].mxu0
        %v1786 = vadd.f32 0.0, %v1785
        %v1787 = vpop.f32.mrb[0].mxu0
        %1788 = vmatprep.mubr.bf16.mxu0 %v870
        %1789 = vmatmul.mubr.bf16.gmra.mrb[0].mxu0 %v869
        %v1790 = vpop.f32.mrb[0].mxu0
        %v1791 = vadd.f32 0.0, %v1790
        %v1792 = vpop.f32.mrb[0].mxu0
        %v1793 = vpop.f32.mrb[0].mxu0
        %v1794 = vadd.f32 0.0, %v1793
        %v1795 = vpop.f32.mrb[0].mxu0
        %1796 = vmatprep.mubr.bf16.mxu0 %v872
        %1797 = vmatmul.mubr.bf16.gmra.mrb[0].mxu0 %v871
        %v1798 = vpop.f32.mrb[0].mxu0
        %v1799 = vadd.f32 0.0, %v1798
        %v1800 = vpop.f32.mrb[0].mxu0
        %v1801 = vpop.f32.mrb[0].mxu0
        %v1802 = vadd.f32 0.0, %v1801
        %v1803 = vpop.f32.mrb[0].mxu0
        %1804 = vmatprep.mubr.bf16.mxu0 %v874
        %1805 = vmatmul.mubr.bf16.gmra.mrb[0].mxu0 %v873
        %v1806 = vpop.f32.mrb[0].mxu0
        %v1807 = vadd.f32 0.0, %v1806
        %v1808 = vpop.f32.mrb[0].mxu0
        %v1809 = vpop.f32.mrb[0].mxu0
        %v1810 = vadd.f32 0.0, %v1809
        %v1811 = vpop.f32.mrb[0].mxu0
        %1812 = vmatprep.mubr.bf16.mxu0 %v876
        %1813 = vmatmul.mubr.bf16.gmra.mrb[0].mxu0 %v875
        %v1814 = vpop.f32.mrb[0].mxu0
        %v1815 = vadd.f32 0.0, %v1814
        %v1816 = vpop.f32.mrb[0].mxu0
        %v1817 = vpop.f32.mrb[0].mxu0
        %v1818 = vadd.f32 0.0, %v1817
        %v1819 = vpop.f32.mrb[0].mxu0
        %1820 = vmatprep.mubr.bf16.mxu0 %v878
        %1821 = vmatmul.mubr.bf16.gmra.mrb[0].mxu0 %v877
        %v1822 = vpop.f32.mrb[0].mxu0
        %v1823 = vadd.f32 0.0, %v1822
        %v1824 = vpop.f32.mrb[0].mxu0
        %v1825 = vpop.f32.mrb[0].mxu0
        %v1826 = vadd.f32 0.0, %v1825
        %v1827 = vpop.f32.mrb[0].mxu0
        %1828 = vmatprep.mubr.bf16.mxu0 %v880
        %1829 = vmatmul.mubr.bf16.gmra.mrb[0].mxu0 %v879
        %v1830 = vpop.f32.mrb[0].mxu0
        %v1831 = vadd.f32 0.0, %v1830
        %v1832 = vpop.f32.mrb[0].mxu0
        %v1833 = vpop.f32.mrb[0].mxu0
        %v1834 = vadd.f32 0.0, %v1833
        %v1835 = vpop.f32.mrb[0].mxu0
        %1836 = vmatprep.mubr.bf16.mxu0 %v882
        %1837 = vmatmul.mubr.bf16.gmra.mrb[0].mxu0 %v881
        %v1838 = vpop.f32.mrb[0].mxu0
        %v1839 = vadd.f32 0.0, %v1838
        %v1840 = vpop.f32.mrb[0].mxu0
        %v1841 = vpop.f32.mrb[0].mxu0
        %v1842 = vadd.f32 0.0, %v1841
        %v1843 = vpop.f32.mrb[0].mxu0
        %1844 = vdwg.mxu0
        %v1845 = vadd.f32 %v499, %v1238
        %v1846 = vadd.f32 %v500, %v1240
        %v1847 = vadd.f32 %v501, %v1591
        %v1848 = vadd.f32 %v502, %v1242
        %v1849 = vadd.f32 %v503, %v1244
        %v1850 = vadd.f32 %v504, %v1594
        %v1851 = vadd.f32 %v505, %v1248
        %v1852 = vadd.f32 %v506, %v1250
        %v1853 = vadd.f32 %v507, %v1599
        %v1854 = vadd.f32 %v508, %v1252
        %v1855 = vadd.f32 %v509, %v1254
        %v1856 = vadd.f32 %v510, %v1602
        %v1857 = vadd.f32 %v511, %v1258
        %v1858 = vadd.f32 %v512, %v1260
        %v1859 = vadd.f32 %v513, %v1607
        %v1860 = vadd.f32 %v514, %v1262
        %v1861 = vadd.f32 %v515, %v1264
        %v1862 = vadd.f32 %v516, %v1610
        %v1863 = vadd.f32 %v517, %v1268
        %v1864 = vadd.f32 %v518, %v1270
        %v1865 = vadd.f32 %v519, %v1615
        %v1866 = vadd.f32 %v520, %v1272
        %v1867 = vadd.f32 %v521, %v1274
        %v1868 = vadd.f32 %v522, %v1618
        %v1869 = vadd.f32 %v523, %v1278
        %v1870 = vadd.f32 %v524, %v1280
        %v1871 = vadd.f32 %v525, %v1623
        %v1872 = vadd.f32 %v526, %v1282
        %v1873 = vadd.f32 %v527, %v1284
        %v1874 = vadd.f32 %v528, %v1626
        %v1875 = vadd.f32 %v529, %v1288
        %v1876 = vadd.f32 %v530, %v1290
        %v1877 = vadd.f32 %v531, %v1631
        %v1878 = vadd.f32 %v532, %v1292
        %v1879 = vadd.f32 %v533, %v1294
        %v1880 = vadd.f32 %v534, %v1634
        %v1881 = vadd.f32 %v535, %v1298
        %v1882 = vadd.f32 %v536, %v1300
        %v1883 = vadd.f32 %v537, %v1639
        %v1884 = vadd.f32 %v538, %v1302
        %v1885 = vadd.f32 %v539, %v1304
        %v1886 = vadd.f32 %v540, %v1642
        %v1887 = vadd.f32 %v541, %v1308
        %v1888 = vadd.f32 %v542, %v1310
        %v1889 = vadd.f32 %v543, %v1647
        %v1890 = vadd.f32 %v544, %v1312
        %v1891 = vadd.f32 %v545, %v1314
        %v1892 = vadd.f32 %v546, %v1650
        %v1893 = vadd.f32 %v547, %v1318
        %v1894 = vadd.f32 %v548, %v1320
        %v1895 = vadd.f32 %v549, %v1655
        %v1896 = vadd.f32 %v550, %v1322
        %v1897 = vadd.f32 %v551, %v1324
        %v1898 = vadd.f32 %v552, %v1658
        %v1899 = vadd.f32 %v553, %v1328
        %v1900 = vadd.f32 %v554, %v1330
        %v1901 = vadd.f32 %v555, %v1663
        %v1902 = vadd.f32 %v556, %v1332
        %v1903 = vadd.f32 %v557, %v1334
        %v1904 = vadd.f32 %v558, %v1666
        %v1905 = vadd.f32 %v559, %v1338
        %v1906 = vadd.f32 %v560, %v1340
        %v1907 = vadd.f32 %v561, %v1671
        %v1908 = vadd.f32 %v562, %v1342
        %v1909 = vadd.f32 %v563, %v1344
        %v1910 = vadd.f32 %v564, %v1674
        %v1911 = vadd.f32 %v565, %v1348
        %v1912 = vadd.f32 %v566, %v1350
        %v1913 = vadd.f32 %v567, %v1679
        %v1914 = vadd.f32 %v568, %v1352
        %v1915 = vadd.f32 %v569, %v1354
        %v1916 = vadd.f32 %v570, %v1682
        %v1917 = vadd.f32 %v571, %v1358
        %v1918 = vadd.f32 %v572, %v1360
        %v1919 = vadd.f32 %v573, %v1687
        %v1920 = vadd.f32 %v574, %v1362
        %v1921 = vadd.f32 %v575, %v1364
        %v1922 = vadd.f32 %v576, %v1690
        %v1923 = vadd.f32 %v577, %v1368
        %v1924 = vadd.f32 %v578, %v1370
        %v1925 = vadd.f32 %v579, %v1695
        %v1926 = vadd.f32 %v580, %v1372
        %v1927 = vadd.f32 %v581, %v1374
        %v1928 = vadd.f32 %v582, %v1698
        %v1929 = vadd.f32 %v583, %v1378
        %v1930 = vadd.f32 %v584, %v1380
        %v1931 = vadd.f32 %v585, %v1703
        %v1932 = vadd.f32 %v586, %v1382
        %v1933 = vadd.f32 %v587, %v1384
        %v1934 = vadd.f32 %v588, %v1706
        %v1935 = vadd.f32 %v589, %v1388
        %v1936 = vadd.f32 %v590, %v1390
        %v1937 = vadd.f32 %v591, %v1711
        %v1938 = vadd.f32 %v592, %v1392
        %v1939 = vadd.f32 %v593, %v1394
        %v1940 = vadd.f32 %v594, %v1714
        %v1941 = vadd.f32 %v595, %v1398
        %v1942 = vadd.f32 %v596, %v1400
        %v1943 = vadd.f32 %v597, %v1719
        %v1944 = vadd.f32 %v598, %v1402
        %v1945 = vadd.f32 %v599, %v1404
        %v1946 = vadd.f32 %v600, %v1722
        %v1947 = vadd.f32 %v601, %v1408
        %v1948 = vadd.f32 %v602, %v1410
        %v1949 = vadd.f32 %v603, %v1727
        %v1950 = vadd.f32 %v604, %v1412
        %v1951 = vadd.f32 %v605, %v1414
        %v1952 = vadd.f32 %v606, %v1730
        %v1953 = vadd.f32 %v607, %v1418
        %v1954 = vadd.f32 %v608, %v1420
        %v1955 = vadd.f32 %v609, %v1735
        %v1956 = vadd.f32 %v610, %v1422
        %v1957 = vadd.f32 %v611, %v1424
        %v1958 = vadd.f32 %v612, %v1738
        %v1959 = vadd.f32 %v613, %v1428
        %v1960 = vadd.f32 %v614, %v1430
        %v1961 = vadd.f32 %v615, %v1743
        %v1962 = vadd.f32 %v616, %v1432
        %v1963 = vadd.f32 %v617, %v1434
        %v1964 = vadd.f32 %v618, %v1746
        %v1965 = vadd.f32 %v619, %v1438
        %v1966 = vadd.f32 %v620, %v1440
        %v1967 = vadd.f32 %v621, %v1751
        %v1968 = vadd.f32 %v622, %v1442
        %v1969 = vadd.f32 %v623, %v1444
        %v1970 = vadd.f32 %v624, %v1754
        %v1971 = vadd.f32 %v625, %v1448
        %v1972 = vadd.f32 %v626, %v1450
        %v1973 = vadd.f32 %v627, %v1759
        %v1974 = vadd.f32 %v628, %v1452
        %v1975 = vadd.f32 %v629, %v1454
        %v1976 = vadd.f32 %v630, %v1762
        %v1977 = vadd.f32 %v631, %v1458
        %v1978 = vadd.f32 %v632, %v1460
        %v1979 = vadd.f32 %v633, %v1767
        %v1980 = vadd.f32 %v634, %v1462
        %v1981 = vadd.f32 %v635, %v1464
        %v1982 = vadd.f32 %v636, %v1770
        %v1983 = vadd.f32 %v637, %v1468
        %v1984 = vadd.f32 %v638, %v1470
        %v1985 = vadd.f32 %v639, %v1775
        %v1986 = vadd.f32 %v640, %v1472
        %v1987 = vadd.f32 %v641, %v1474
        %v1988 = vadd.f32 %v642, %v1778
        %v1989 = vadd.f32 %v643, %v1478
        %v1990 = vadd.f32 %v644, %v1480
        %v1991 = vadd.f32 %v645, %v1783
        %v1992 = vadd.f32 %v646, %v1482
        %v1993 = vadd.f32 %v647, %v1484
        %v1994 = vadd.f32 %v648, %v1786
        %v1995 = vadd.f32 %v649, %v1488
        %v1996 = vadd.f32 %v650, %v1490
        %v1997 = vadd.f32 %v651, %v1791
        %v1998 = vadd.f32 %v652, %v1492
        %v1999 = vadd.f32 %v653, %v1494
        %v2000 = vadd.f32 %v654, %v1794
        %v2001 = vadd.f32 %v655, %v1498
        %v2002 = vadd.f32 %v656, %v1500
        %v2003 = vadd.f32 %v657, %v1799
        %v2004 = vadd.f32 %v658, %v1502
        %v2005 = vadd.f32 %v659, %v1504
        %v2006 = vadd.f32 %v660, %v1802
        %v2007 = vadd.f32 %v661, %v1508
        %v2008 = vadd.f32 %v662, %v1510
        %v2009 = vadd.f32 %v663, %v1807
        %v2010 = vadd.f32 %v664, %v1512
        %v2011 = vadd.f32 %v665, %v1514
        %v2012 = vadd.f32 %v666, %v1810
        %v2013 = vadd.f32 %v667, %v1518
        %v2014 = vadd.f32 %v668, %v1520
        %v2015 = vadd.f32 %v669, %v1815
        %v2016 = vadd.f32 %v670, %v1522
        %v2017 = vadd.f32 %v671, %v1524
        %v2018 = vadd.f32 %v672, %v1818
        %v2019 = vadd.f32 %v673, %v1528
        %v2020 = vadd.f32 %v674, %v1530
        %v2021 = vadd.f32 %v675, %v1823
        %v2022 = vadd.f32 %v676, %v1532
        %v2023 = vadd.f32 %v677, %v1534
        %v2024 = vadd.f32 %v678, %v1826
        %v2025 = vadd.f32 %v679, %v1538
        %v2026 = vadd.f32 %v680, %v1540
        %v2027 = vadd.f32 %v681, %v1831
        %v2028 = vadd.f32 %v682, %v1542
        %v2029 = vadd.f32 %v683, %v1544
        %v2030 = vadd.f32 %v684, %v1834
        %v2031 = vadd.f32 %v685, %v1548
        %v2032 = vadd.f32 %v686, %v1550
        %v2033 = vadd.f32 %v687, %v1839
        %v2034 = vadd.f32 %v688, %v1552
        %v2035 = vadd.f32 %v689, %v1554
        %v2036 = vadd.f32 %v690, %v1842
        %2037 = vst [vmem:[#allocation2] sm:$0xff] %v1845
        %2038 = vst [vmem:[#allocation2 + $0x8] sm:$0xff] %v1846
        %2039 = vst [vmem:[#allocation2 + $0x10] sm:$0xff] %v1847
        %2040 = vst [vmem:[#allocation2 + $0x18] sm:$0xff] %v1848
        %2041 = vst [vmem:[#allocation2 + $0x20] sm:$0xff] %v1849
        %2042 = vst [vmem:[#allocation2 + $0x28] sm:$0xff] %v1850
        %2043 = vst [vmem:[#allocation2 + $0x30] sm:$0xff] %v1851
        %2044 = vst [vmem:[#allocation2 + $0x38] sm:$0xff] %v1852
        %2045 = vst [vmem:[#allocation2 + $0x40] sm:$0xff] %v1853
        %2046 = vst [vmem:[#allocation2 + $0x48] sm:$0xff] %v1854
        %2047 = vst [vmem:[#allocation2 + $0x50] sm:$0xff] %v1855
        %2048 = vst [vmem:[#allocation2 + $0x58] sm:$0xff] %v1856
        %2049 = vst [vmem:[#allocation2 + $0x60] sm:$0xff] %v1857
        %2050 = vst [vmem:[#allocation2 + $0x68] sm:$0xff] %v1858
        %2051 = vst [vmem:[#allocation2 + $0x70] sm:$0xff] %v1859
        %2052 = vst [vmem:[#allocation2 + $0x78] sm:$0xff] %v1860
        %2053 = vst [vmem:[#allocation2 + $0x80] sm:$0xff] %v1861
        %2054 = vst [vmem:[#allocation2 + $0x88] sm:$0xff] %v1862
        %2055 = vst [vmem:[#allocation2 + $0x90] sm:$0xff] %v1863
        %2056 = vst [vmem:[#allocation2 + $0x98] sm:$0xff] %v1864
        %2057 = vst [vmem:[#allocation2 + $0xa0] sm:$0xff] %v1865
        %2058 = vst [vmem:[#allocation2 + $0xa8] sm:$0xff] %v1866
        %2059 = vst [vmem:[#allocation2 + $0xb0] sm:$0xff] %v1867
        %2060 = vst [vmem:[#allocation2 + $0xb8] sm:$0xff] %v1868
        %2061 = vst [vmem:[#allocation2 + $0xc0] sm:$0xff] %v1869
        %2062 = vst [vmem:[#allocation2 + $0xc8] sm:$0xff] %v1870
        %2063 = vst [vmem:[#allocation2 + $0xd0] sm:$0xff] %v1871
        %2064 = vst [vmem:[#allocation2 + $0xd8] sm:$0xff] %v1872
        %2065 = vst [vmem:[#allocation2 + $0xe0] sm:$0xff] %v1873
        %2066 = vst [vmem:[#allocation2 + $0xe8] sm:$0xff] %v1874
        %2067 = vst [vmem:[#allocation2 + $0xf0] sm:$0xff] %v1875
        %2068 = vst [vmem:[#allocation2 + $0xf8] sm:$0xff] %v1876
        %2069 = vst [vmem:[#allocation2 + $0x100] sm:$0xff] %v1877
        %2070 = vst [vmem:[#allocation2 + $0x108] sm:$0xff] %v1878
        %2071 = vst [vmem:[#allocation2 + $0x110] sm:$0xff] %v1879
        %2072 = vst [vmem:[#allocation2 + $0x118] sm:$0xff] %v1880
        %2073 = vst [vmem:[#allocation2 + $0x120] sm:$0xff] %v1881
        %2074 = vst [vmem:[#allocation2 + $0x128] sm:$0xff] %v1882
        %2075 = vst [vmem:[#allocation2 + $0x130] sm:$0xff] %v1883
        %2076 = vst [vmem:[#allocation2 + $0x138] sm:$0xff] %v1884
        %2077 = vst [vmem:[#allocation2 + $0x140] sm:$0xff] %v1885
        %2078 = vst [vmem:[#allocation2 + $0x148] sm:$0xff] %v1886
        %2079 = vst [vmem:[#allocation2 + $0x150] sm:$0xff] %v1887
        %2080 = vst [vmem:[#allocation2 + $0x158] sm:$0xff] %v1888
        %2081 = vst [vmem:[#allocation2 + $0x160] sm:$0xff] %v1889
        %2082 = vst [vmem:[#allocation2 + $0x168] sm:$0xff] %v1890
        %2083 = vst [vmem:[#allocation2 + $0x170] sm:$0xff] %v1891
        %2084 = vst [vmem:[#allocation2 + $0x178] sm:$0xff] %v1892
        %2085 = vst [vmem:[#allocation2 + $0x180] sm:$0xff] %v1893
        %2086 = vst [vmem:[#allocation2 + $0x188] sm:$0xff] %v1894
        %2087 = vst [vmem:[#allocation2 + $0x190] sm:$0xff] %v1895
        %2088 = vst [vmem:[#allocation2 + $0x198] sm:$0xff] %v1896
        %2089 = vst [vmem:[#allocation2 + $0x1a0] sm:$0xff] %v1897
        %2090 = vst [vmem:[#allocation2 + $0x1a8] sm:$0xff] %v1898
        %2091 = vst [vmem:[#allocation2 + $0x1b0] sm:$0xff] %v1899
        %2092 = vst [vmem:[#allocation2 + $0x1b8] sm:$0xff] %v1900
        %2093 = vst [vmem:[#allocation2 + $0x1c0] sm:$0xff] %v1901
        %2094 = vst [vmem:[#allocation2 + $0x1c8] sm:$0xff] %v1902
        %2095 = vst [vmem:[#allocation2 + $0x1d0] sm:$0xff] %v1903
        %2096 = vst [vmem:[#allocation2 + $0x1d8] sm:$0xff] %v1904
        %2097 = vst [vmem:[#allocation2 + $0x1e0] sm:$0xff] %v1905
        %2098 = vst [vmem:[#allocation2 + $0x1e8] sm:$0xff] %v1906
        %2099 = vst [vmem:[#allocation2 + $0x1f0] sm:$0xff] %v1907
        %2100 = vst [vmem:[#allocation2 + $0x1f8] sm:$0xff] %v1908
        %2101 = vst [vmem:[#allocation2 + $0x200] sm:$0xff] %v1909
        %2102 = vst [vmem:[#allocation2 + $0x208] sm:$0xff] %v1910
        %2103 = vst [vmem:[#allocation2 + $0x210] sm:$0xff] %v1911
        %2104 = vst [vmem:[#allocation2 + $0x218] sm:$0xff] %v1912
        %2105 = vst [vmem:[#allocation2 + $0x220] sm:$0xff] %v1913
        %2106 = vst [vmem:[#allocation2 + $0x228] sm:$0xff] %v1914
        %2107 = vst [vmem:[#allocation2 + $0x230] sm:$0xff] %v1915
        %2108 = vst [vmem:[#allocation2 + $0x238] sm:$0xff] %v1916
        %2109 = vst [vmem:[#allocation2 + $0x240] sm:$0xff] %v1917
        %2110 = vst [vmem:[#allocation2 + $0x248] sm:$0xff] %v1918
        %2111 = vst [vmem:[#allocation2 + $0x250] sm:$0xff] %v1919
        %2112 = vst [vmem:[#allocation2 + $0x258] sm:$0xff] %v1920
        %2113 = vst [vmem:[#allocation2 + $0x260] sm:$0xff] %v1921
        %2114 = vst [vmem:[#allocation2 + $0x268] sm:$0xff] %v1922
        %2115 = vst [vmem:[#allocation2 + $0x270] sm:$0xff] %v1923
        %2116 = vst [vmem:[#allocation2 + $0x278] sm:$0xff] %v1924
        %2117 = vst [vmem:[#allocation2 + $0x280] sm:$0xff] %v1925
        %2118 = vst [vmem:[#allocation2 + $0x288] sm:$0xff] %v1926
        %2119 = vst [vmem:[#allocation2 + $0x290] sm:$0xff] %v1927
        %2120 = vst [vmem:[#allocation2 + $0x298] sm:$0xff] %v1928
        %2121 = vst [vmem:[#allocation2 + $0x2a0] sm:$0xff] %v1929
        %2122 = vst [vmem:[#allocation2 + $0x2a8] sm:$0xff] %v1930
        %2123 = vst [vmem:[#allocation2 + $0x2b0] sm:$0xff] %v1931
        %2124 = vst [vmem:[#allocation2 + $0x2b8] sm:$0xff] %v1932
        %2125 = vst [vmem:[#allocation2 + $0x2c0] sm:$0xff] %v1933
        %2126 = vst [vmem:[#allocation2 + $0x2c8] sm:$0xff] %v1934
        %2127 = vst [vmem:[#allocation2 + $0x2d0] sm:$0xff] %v1935
        %2128 = vst [vmem:[#allocation2 + $0x2d8] sm:$0xff] %v1936
        %2129 = vst [vmem:[#allocation2 + $0x2e0] sm:$0xff] %v1937
        %2130 = vst [vmem:[#allocation2 + $0x2e8] sm:$0xff] %v1938
        %2131 = vst [vmem:[#allocation2 + $0x2f0] sm:$0xff] %v1939
        %2132 = vst [vmem:[#allocation2 + $0x2f8] sm:$0xff] %v1940
        %2133 = vst [vmem:[#allocation2 + $0x300] sm:$0xff] %v1941
        %2134 = vst [vmem:[#allocation2 + $0x308] sm:$0xff] %v1942
        %2135 = vst [vmem:[#allocation2 + $0x310] sm:$0xff] %v1943
        %2136 = vst [vmem:[#allocation2 + $0x318] sm:$0xff] %v1944
        %2137 = vst [vmem:[#allocation2 + $0x320] sm:$0xff] %v1945
        %2138 = vst [vmem:[#allocation2 + $0x328] sm:$0xff] %v1946
        %2139 = vst [vmem:[#allocation2 + $0x330] sm:$0xff] %v1947
        %2140 = vst [vmem:[#allocation2 + $0x338] sm:$0xff] %v1948
        %2141 = vst [vmem:[#allocation2 + $0x340] sm:$0xff] %v1949
        %2142 = vst [vmem:[#allocation2 + $0x348] sm:$0xff] %v1950
        %2143 = vst [vmem:[#allocation2 + $0x350] sm:$0xff] %v1951
        %2144 = vst [vmem:[#allocation2 + $0x358] sm:$0xff] %v1952
        %2145 = vst [vmem:[#allocation2 + $0x360] sm:$0xff] %v1953
        %2146 = vst [vmem:[#allocation2 + $0x368] sm:$0xff] %v1954
        %2147 = vst [vmem:[#allocation2 + $0x370] sm:$0xff] %v1955
        %2148 = vst [vmem:[#allocation2 + $0x378] sm:$0xff] %v1956
        %2149 = vst [vmem:[#allocation2 + $0x380] sm:$0xff] %v1957
        %2150 = vst [vmem:[#allocation2 + $0x388] sm:$0xff] %v1958
        %2151 = vst [vmem:[#allocation2 + $0x390] sm:$0xff] %v1959
        %2152 = vst [vmem:[#allocation2 + $0x398] sm:$0xff] %v1960
        %2153 = vst [vmem:[#allocation2 + $0x3a0] sm:$0xff] %v1961
        %2154 = vst [vmem:[#allocation2 + $0x3a8] sm:$0xff] %v1962
        %2155 = vst [vmem:[#allocation2 + $0x3b0] sm:$0xff] %v1963
        %2156 = vst [vmem:[#allocation2 + $0x3b8] sm:$0xff] %v1964
        %2157 = vst [vmem:[#allocation2 + $0x3c0] sm:$0xff] %v1965
        %2158 = vst [vmem:[#allocation2 + $0x3c8] sm:$0xff] %v1966
        %2159 = vst [vmem:[#allocation2 + $0x3d0] sm:$0xff] %v1967
        %2160 = vst [vmem:[#allocation2 + $0x3d8] sm:$0xff] %v1968
        %2161 = vst [vmem:[#allocation2 + $0x3e0] sm:$0xff] %v1969
        %2162 = vst [vmem:[#allocation2 + $0x3e8] sm:$0xff] %v1970
        %2163 = vst [vmem:[#allocation2 + $0x3f0] sm:$0xff] %v1971
        %2164 = vst [vmem:[#allocation2 + $0x3f8] sm:$0xff] %v1972
        %2165 = vst [vmem:[#allocation2 + $0x400] sm:$0xff] %v1973
        %2166 = vst [vmem:[#allocation2 + $0x408] sm:$0xff] %v1974
        %2167 = vst [vmem:[#allocation2 + $0x410] sm:$0xff] %v1975
        %2168 = vst [vmem:[#allocation2 + $0x418] sm:$0xff] %v1976
        %2169 = vst [vmem:[#allocation2 + $0x420] sm:$0xff] %v1977
        %2170 = vst [vmem:[#allocation2 + $0x428] sm:$0xff] %v1978
        %2171 = vst [vmem:[#allocation2 + $0x430] sm:$0xff] %v1979
        %2172 = vst [vmem:[#allocation2 + $0x438] sm:$0xff] %v1980
        %2173 = vst [vmem:[#allocation2 + $0x440] sm:$0xff] %v1981
        %2174 = vst [vmem:[#allocation2 + $0x448] sm:$0xff] %v1982
        %2175 = vst [vmem:[#allocation2 + $0x450] sm:$0xff] %v1983
        %2176 = vst [vmem:[#allocation2 + $0x458] sm:$0xff] %v1984
        %2177 = vst [vmem:[#allocation2 + $0x460] sm:$0xff] %v1985
        %2178 = vst [vmem:[#allocation2 + $0x468] sm:$0xff] %v1986
        %2179 = vst [vmem:[#allocation2 + $0x470] sm:$0xff] %v1987
        %2180 = vst [vmem:[#allocation2 + $0x478] sm:$0xff] %v1988
        %2181 = vst [vmem:[#allocation2 + $0x480] sm:$0xff] %v1989
        %2182 = vst [vmem:[#allocation2 + $0x488] sm:$0xff] %v1990
        %2183 = vst [vmem:[#allocation2 + $0x490] sm:$0xff] %v1991
        %2184 = vst [vmem:[#allocation2 + $0x498] sm:$0xff] %v1992
        %2185 = vst [vmem:[#allocation2 + $0x4a0] sm:$0xff] %v1993
        %2186 = vst [vmem:[#allocation2 + $0x4a8] sm:$0xff] %v1994
        %2187 = vst [vmem:[#allocation2 + $0x4b0] sm:$0xff] %v1995
        %2188 = vst [vmem:[#allocation2 + $0x4b8] sm:$0xff] %v1996
        %2189 = vst [vmem:[#allocation2 + $0x4c0] sm:$0xff] %v1997
        %2190 = vst [vmem:[#allocation2 + $0x4c8] sm:$0xff] %v1998
        %2191 = vst [vmem:[#allocation2 + $0x4d0] sm:$0xff] %v1999
        %2192 = vst [vmem:[#allocation2 + $0x4d8] sm:$0xff] %v2000
        %2193 = vst [vmem:[#allocation2 + $0x4e0] sm:$0xff] %v2001
        %2194 = vst [vmem:[#allocation2 + $0x4e8] sm:$0xff] %v2002
        %2195 = vst [vmem:[#allocation2 + $0x4f0] sm:$0xff] %v2003
        %2196 = vst [vmem:[#allocation2 + $0x4f8] sm:$0xff] %v2004
        %2197 = vst [vmem:[#allocation2 + $0x500] sm:$0xff] %v2005
        %2198 = vst [vmem:[#allocation2 + $0x508] sm:$0xff] %v2006
        %2199 = vst [vmem:[#allocation2 + $0x510] sm:$0xff] %v2007
        %2200 = vst [vmem:[#allocation2 + $0x518] sm:$0xff] %v2008
        %2201 = vst [vmem:[#allocation2 + $0x520] sm:$0xff] %v2009
        %2202 = vst [vmem:[#allocation2 + $0x528] sm:$0xff] %v2010
        %2203 = vst [vmem:[#allocation2 + $0x530] sm:$0xff] %v2011
        %2204 = vst [vmem:[#allocation2 + $0x538] sm:$0xff] %v2012
        %2205 = vst [vmem:[#allocation2 + $0x540] sm:$0xff] %v2013
        %2206 = vst [vmem:[#allocation2 + $0x548] sm:$0xff] %v2014
        %2207 = vst [vmem:[#allocation2 + $0x550] sm:$0xff] %v2015
        %2208 = vst [vmem:[#allocation2 + $0x558] sm:$0xff] %v2016
        %2209 = vst [vmem:[#allocation2 + $0x560] sm:$0xff] %v2017
        %2210 = vst [vmem:[#allocation2 + $0x568] sm:$0xff] %v2018
        %2211 = vst [vmem:[#allocation2 + $0x570] sm:$0xff] %v2019
        %2212 = vst [vmem:[#allocation2 + $0x578] sm:$0xff] %v2020
        %2213 = vst [vmem:[#allocation2 + $0x580] sm:$0xff] %v2021
        %2214 = vst [vmem:[#allocation2 + $0x588] sm:$0xff] %v2022
        %2215 = vst [vmem:[#allocation2 + $0x590] sm:$0xff] %v2023
        %2216 = vst [vmem:[#allocation2 + $0x598] sm:$0xff] %v2024
        %2217 = vst [vmem:[#allocation2 + $0x5a0] sm:$0xff] %v2025
        %2218 = vst [vmem:[#allocation2 + $0x5a8] sm:$0xff] %v2026
        %2219 = vst [vmem:[#allocation2 + $0x5b0] sm:$0xff] %v2027
        %2220 = vst [vmem:[#allocation2 + $0x5b8] sm:$0xff] %v2028
        %2221 = vst [vmem:[#allocation2 + $0x5c0] sm:$0xff] %v2029
        %2222 = vst [vmem:[#allocation2 + $0x5c8] sm:$0xff] %v2030
        %2223 = vst [vmem:[#allocation2 + $0x5d0] sm:$0xff] %v2031
        %2224 = vst [vmem:[#allocation2 + $0x5d8] sm:$0xff] %v2032
        %2225 = vst [vmem:[#allocation2 + $0x5e0] sm:$0xff] %v2033
        %2226 = vst [vmem:[#allocation2 + $0x5e8] sm:$0xff] %v2034
        %2227 = vst [vmem:[#allocation2 + $0x5f0] sm:$0xff] %v2035
        %2228 = vst [vmem:[#allocation2 + $0x5f8] sm:$0xff] %v2036
        // Predicated region
        $region49: #{tpu_custom_call.1} parent=31 // pred_check
          %p2229 = pneg %p303
        $region50: #{tpu_custom_call.1} parent=31 // pred_check_branch
          %2231 = sbr.rel (%p2229) target = $region52
        $region51: #{tpu_custom_call.1} parent=31 // pred_region
          %v2232 = vld [vmem:[#allocation2] sm:$0xff]
          %v2233 = vld [vmem:[#allocation2 + $0x8] sm:$0xff]
          %v2234 = vld [vmem:[#allocation2 + $0x10] sm:$0xff]
          %v2235 = vld [vmem:[#allocation2 + $0x18] sm:$0xff]
          %v2236 = vld [vmem:[#allocation2 + $0x20] sm:$0xff]
          %v2237 = vld [vmem:[#allocation2 + $0x28] sm:$0xff]
          %v2238 = vld [vmem:[#allocation2 + $0x30] sm:$0xff]
          %v2239 = vld [vmem:[#allocation2 + $0x38] sm:$0xff]
          %v2240 = vld [vmem:[#allocation2 + $0x40] sm:$0xff]
          %v2241 = vld [vmem:[#allocation2 + $0x48] sm:$0xff]
          %v2242 = vld [vmem:[#allocation2 + $0x50] sm:$0xff]
          %v2243 = vld [vmem:[#allocation2 + $0x58] sm:$0xff]
          %v2244 = vld [vmem:[#allocation2 + $0x60] sm:$0xff]
          %v2245 = vld [vmem:[#allocation2 + $0x68] sm:$0xff]
          %v2246 = vld [vmem:[#allocation2 + $0x70] sm:$0xff]
          %v2247 = vld [vmem:[#allocation2 + $0x78] sm:$0xff]
          %v2248 = vld [vmem:[#allocation2 + $0x80] sm:$0xff]
          %v2249 = vld [vmem:[#allocation2 + $0x88] sm:$0xff]
          %v2250 = vld [vmem:[#allocation2 + $0x90] sm:$0xff]
          %v2251 = vld [vmem:[#allocation2 + $0x98] sm:$0xff]
          %v2252 = vld [vmem:[#allocation2 + $0xa0] sm:$0xff]
          %v2253 = vld [vmem:[#allocation2 + $0xa8] sm:$0xff]
          %v2254 = vld [vmem:[#allocation2 + $0xb0] sm:$0xff]
          %v2255 = vld [vmem:[#allocation2 + $0xb8] sm:$0xff]
          %v2256 = vld [vmem:[#allocation2 + $0xc0] sm:$0xff]
          %v2257 = vld [vmem:[#allocation2 + $0xc8] sm:$0xff]
          %v2258 = vld [vmem:[#allocation2 + $0xd0] sm:$0xff]
          %v2259 = vld [vmem:[#allocation2 + $0xd8] sm:$0xff]
          %v2260 = vld [vmem:[#allocation2 + $0xe0] sm:$0xff]
          %v2261 = vld [vmem:[#allocation2 + $0xe8] sm:$0xff]
          %v2262 = vld [vmem:[#allocation2 + $0xf0] sm:$0xff]
          %v2263 = vld [vmem:[#allocation2 + $0xf8] sm:$0xff]
          %v2264 = vld [vmem:[#allocation2 + $0x100] sm:$0xff]
          %v2265 = vld [vmem:[#allocation2 + $0x108] sm:$0xff]
          %v2266 = vld [vmem:[#allocation2 + $0x110] sm:$0xff]
          %v2267 = vld [vmem:[#allocation2 + $0x118] sm:$0xff]
          %v2268 = vld [vmem:[#allocation2 + $0x120] sm:$0xff]
          %v2269 = vld [vmem:[#allocation2 + $0x128] sm:$0xff]
          %v2270 = vld [vmem:[#allocation2 + $0x130] sm:$0xff]
          %v2271 = vld [vmem:[#allocation2 + $0x138] sm:$0xff]
          %v2272 = vld [vmem:[#allocation2 + $0x140] sm:$0xff]
          %v2273 = vld [vmem:[#allocation2 + $0x148] sm:$0xff]
          %v2274 = vld [vmem:[#allocation2 + $0x150] sm:$0xff]
          %v2275 = vld [vmem:[#allocation2 + $0x158] sm:$0xff]
          %v2276 = vld [vmem:[#allocation2 + $0x160] sm:$0xff]
          %v2277 = vld [vmem:[#allocation2 + $0x168] sm:$0xff]
          %v2278 = vld [vmem:[#allocation2 + $0x170] sm:$0xff]
          %v2279 = vld [vmem:[#allocation2 + $0x178] sm:$0xff]
          %v2280 = vld [vmem:[#allocation2 + $0x180] sm:$0xff]
          %v2281 = vld [vmem:[#allocation2 + $0x188] sm:$0xff]
          %v2282 = vld [vmem:[#allocation2 + $0x190] sm:$0xff]
          %v2283 = vld [vmem:[#allocation2 + $0x198] sm:$0xff]
          %v2284 = vld [vmem:[#allocation2 + $0x1a0] sm:$0xff]
          %v2285 = vld [vmem:[#allocation2 + $0x1a8] sm:$0xff]
          %v2286 = vld [vmem:[#allocation2 + $0x1b0] sm:$0xff]
          %v2287 = vld [vmem:[#allocation2 + $0x1b8] sm:$0xff]
          %v2288 = vld [vmem:[#allocation2 + $0x1c0] sm:$0xff]
          %v2289 = vld [vmem:[#allocation2 + $0x1c8] sm:$0xff]
          %v2290 = vld [vmem:[#allocation2 + $0x1d0] sm:$0xff]
          %v2291 = vld [vmem:[#allocation2 + $0x1d8] sm:$0xff]
          %v2292 = vld [vmem:[#allocation2 + $0x1e0] sm:$0xff]
          %v2293 = vld [vmem:[#allocation2 + $0x1e8] sm:$0xff]
          %v2294 = vld [vmem:[#allocation2 + $0x1f0] sm:$0xff]
          %v2295 = vld [vmem:[#allocation2 + $0x1f8] sm:$0xff]
          %v2296 = vld [vmem:[#allocation2 + $0x200] sm:$0xff]
          %v2297 = vld [vmem:[#allocation2 + $0x208] sm:$0xff]
          %v2298 = vld [vmem:[#allocation2 + $0x210] sm:$0xff]
          %v2299 = vld [vmem:[#allocation2 + $0x218] sm:$0xff]
          %v2300 = vld [vmem:[#allocation2 + $0x220] sm:$0xff]
          %v2301 = vld [vmem:[#allocation2 + $0x228] sm:$0xff]
          %v2302 = vld [vmem:[#allocation2 + $0x230] sm:$0xff]
          %v2303 = vld [vmem:[#allocation2 + $0x238] sm:$0xff]
          %v2304 = vld [vmem:[#allocation2 + $0x240] sm:$0xff]
          %v2305 = vld [vmem:[#allocation2 + $0x248] sm:$0xff]
          %v2306 = vld [vmem:[#allocation2 + $0x250] sm:$0xff]
          %v2307 = vld [vmem:[#allocation2 + $0x258] sm:$0xff]
          %v2308 = vld [vmem:[#allocation2 + $0x260] sm:$0xff]
          %v2309 = vld [vmem:[#allocation2 + $0x268] sm:$0xff]
          %v2310 = vld [vmem:[#allocation2 + $0x270] sm:$0xff]
          %v2311 = vld [vmem:[#allocation2 + $0x278] sm:$0xff]
          %v2312 = vld [vmem:[#allocation2 + $0x280] sm:$0xff]
          %v2313 = vld [vmem:[#allocation2 + $0x288] sm:$0xff]
          %v2314 = vld [vmem:[#allocation2 + $0x290] sm:$0xff]
          %v2315 = vld [vmem:[#allocation2 + $0x298] sm:$0xff]
          %v2316 = vld [vmem:[#allocation2 + $0x2a0] sm:$0xff]
          %v2317 = vld [vmem:[#allocation2 + $0x2a8] sm:$0xff]
          %v2318 = vld [vmem:[#allocation2 + $0x2b0] sm:$0xff]
          %v2319 = vld [vmem:[#allocation2 + $0x2b8] sm:$0xff]
          %v2320 = vld [vmem:[#allocation2 + $0x2c0] sm:$0xff]
          %v2321 = vld [vmem:[#allocation2 + $0x2c8] sm:$0xff]
          %v2322 = vld [vmem:[#allocation2 + $0x2d0] sm:$0xff]
          %v2323 = vld [vmem:[#allocation2 + $0x2d8] sm:$0xff]
          %v2324 = vld [vmem:[#allocation2 + $0x2e0] sm:$0xff]
          %v2325 = vld [vmem:[#allocation2 + $0x2e8] sm:$0xff]
          %v2326 = vld [vmem:[#allocation2 + $0x2f0] sm:$0xff]
          %v2327 = vld [vmem:[#allocation2 + $0x2f8] sm:$0xff]
          %v2328 = vld [vmem:[#allocation2 + $0x300] sm:$0xff]
          %v2329 = vld [vmem:[#allocation2 + $0x308] sm:$0xff]
          %v2330 = vld [vmem:[#allocation2 + $0x310] sm:$0xff]
          %v2331 = vld [vmem:[#allocation2 + $0x318] sm:$0xff]
          %v2332 = vld [vmem:[#allocation2 + $0x320] sm:$0xff]
          %v2333 = vld [vmem:[#allocation2 + $0x328] sm:$0xff]
          %v2334 = vld [vmem:[#allocation2 + $0x330] sm:$0xff]
          %v2335 = vld [vmem:[#allocation2 + $0x338] sm:$0xff]
          %v2336 = vld [vmem:[#allocation2 + $0x340] sm:$0xff]
          %v2337 = vld [vmem:[#allocation2 + $0x348] sm:$0xff]
          %v2338 = vld [vmem:[#allocation2 + $0x350] sm:$0xff]
          %v2339 = vld [vmem:[#allocation2 + $0x358] sm:$0xff]
          %v2340 = vld [vmem:[#allocation2 + $0x360] sm:$0xff]
          %v2341 = vld [vmem:[#allocation2 + $0x368] sm:$0xff]
          %v2342 = vld [vmem:[#allocation2 + $0x370] sm:$0xff]
          %v2343 = vld [vmem:[#allocation2 + $0x378] sm:$0xff]
          %v2344 = vld [vmem:[#allocation2 + $0x380] sm:$0xff]
          %v2345 = vld [vmem:[#allocation2 + $0x388] sm:$0xff]
          %v2346 = vld [vmem:[#allocation2 + $0x390] sm:$0xff]
          %v2347 = vld [vmem:[#allocation2 + $0x398] sm:$0xff]
          %v2348 = vld [vmem:[#allocation2 + $0x3a0] sm:$0xff]
          %v2349 = vld [vmem:[#allocation2 + $0x3a8] sm:$0xff]
          %v2350 = vld [vmem:[#allocation2 + $0x3b0] sm:$0xff]
          %v2351 = vld [vmem:[#allocation2 + $0x3b8] sm:$0xff]
          %v2352 = vld [vmem:[#allocation2 + $0x3c0] sm:$0xff]
          %v2353 = vld [vmem:[#allocation2 + $0x3c8] sm:$0xff]
          %v2354 = vld [vmem:[#allocation2 + $0x3d0] sm:$0xff]
          %v2355 = vld [vmem:[#allocation2 + $0x3d8] sm:$0xff]
          %v2356 = vld [vmem:[#allocation2 + $0x3e0] sm:$0xff]
          %v2357 = vld [vmem:[#allocation2 + $0x3e8] sm:$0xff]
          %v2358 = vld [vmem:[#allocation2 + $0x3f0] sm:$0xff]
          %v2359 = vld [vmem:[#allocation2 + $0x3f8] sm:$0xff]
          %v2360 = vld [vmem:[#allocation2 + $0x400] sm:$0xff]
          %v2361 = vld [vmem:[#allocation2 + $0x408] sm:$0xff]
          %v2362 = vld [vmem:[#allocation2 + $0x410] sm:$0xff]
          %v2363 = vld [vmem:[#allocation2 + $0x418] sm:$0xff]
          %v2364 = vld [vmem:[#allocation2 + $0x420] sm:$0xff]
          %v2365 = vld [vmem:[#allocation2 + $0x428] sm:$0xff]
          %v2366 = vld [vmem:[#allocation2 + $0x430] sm:$0xff]
          %v2367 = vld [vmem:[#allocation2 + $0x438] sm:$0xff]
          %v2368 = vld [vmem:[#allocation2 + $0x440] sm:$0xff]
          %v2369 = vld [vmem:[#allocation2 + $0x448] sm:$0xff]
          %v2370 = vld [vmem:[#allocation2 + $0x450] sm:$0xff]
          %v2371 = vld [vmem:[#allocation2 + $0x458] sm:$0xff]
          %v2372 = vld [vmem:[#allocation2 + $0x460] sm:$0xff]
          %v2373 = vld [vmem:[#allocation2 + $0x468] sm:$0xff]
          %v2374 = vld [vmem:[#allocation2 + $0x470] sm:$0xff]
          %v2375 = vld [vmem:[#allocation2 + $0x478] sm:$0xff]
          %v2376 = vld [vmem:[#allocation2 + $0x480] sm:$0xff]
          %v2377 = vld [vmem:[#allocation2 + $0x488] sm:$0xff]
          %v2378 = vld [vmem:[#allocation2 + $0x490] sm:$0xff]
          %v2379 = vld [vmem:[#allocation2 + $0x498] sm:$0xff]
          %v2380 = vld [vmem:[#allocation2 + $0x4a0] sm:$0xff]
          %v2381 = vld [vmem:[#allocation2 + $0x4a8] sm:$0xff]
          %v2382 = vld [vmem:[#allocation2 + $0x4b0] sm:$0xff]
          %v2383 = vld [vmem:[#allocation2 + $0x4b8] sm:$0xff]
          %v2384 = vld [vmem:[#allocation2 + $0x4c0] sm:$0xff]
          %v2385 = vld [vmem:[#allocation2 + $0x4c8] sm:$0xff]
          %v2386 = vld [vmem:[#allocation2 + $0x4d0] sm:$0xff]
          %v2387 = vld [vmem:[#allocation2 + $0x4d8] sm:$0xff]
          %v2388 = vld [vmem:[#allocation2 + $0x4e0] sm:$0xff]
          %v2389 = vld [vmem:[#allocation2 + $0x4e8] sm:$0xff]
          %v2390 = vld [vmem:[#allocation2 + $0x4f0] sm:$0xff]
          %v2391 = vld [vmem:[#allocation2 + $0x4f8] sm:$0xff]
          %v2392 = vld [vmem:[#allocation2 + $0x500] sm:$0xff]
          %v2393 = vld [vmem:[#allocation2 + $0x508] sm:$0xff]
          %v2394 = vld [vmem:[#allocation2 + $0x510] sm:$0xff]
          %v2395 = vld [vmem:[#allocation2 + $0x518] sm:$0xff]
          %v2396 = vld [vmem:[#allocation2 + $0x520] sm:$0xff]
          %v2397 = vld [vmem:[#allocation2 + $0x528] sm:$0xff]
          %v2398 = vld [vmem:[#allocation2 + $0x530] sm:$0xff]
          %v2399 = vld [vmem:[#allocation2 + $0x538] sm:$0xff]
          %v2400 = vld [vmem:[#allocation2 + $0x540] sm:$0xff]
          %v2401 = vld [vmem:[#allocation2 + $0x548] sm:$0xff]
          %v2402 = vld [vmem:[#allocation2 + $0x550] sm:$0xff]
          %v2403 = vld [vmem:[#allocation2 + $0x558] sm:$0xff]
          %v2404 = vld [vmem:[#allocation2 + $0x560] sm:$0xff]
          %v2405 = vld [vmem:[#allocation2 + $0x568] sm:$0xff]
          %v2406 = vld [vmem:[#allocation2 + $0x570] sm:$0xff]
          %v2407 = vld [vmem:[#allocation2 + $0x578] sm:$0xff]
          %v2408 = vld [vmem:[#allocation2 + $0x580] sm:$0xff]
          %v2409 = vld [vmem:[#allocation2 + $0x588] sm:$0xff]
          %v2410 = vld [vmem:[#allocation2 + $0x590] sm:$0xff]
          %v2411 = vld [vmem:[#allocation2 + $0x598] sm:$0xff]
          %v2412 = vld [vmem:[#allocation2 + $0x5a0] sm:$0xff]
          %v2413 = vld [vmem:[#allocation2 + $0x5a8] sm:$0xff]
          %v2414 = vld [vmem:[#allocation2 + $0x5b0] sm:$0xff]
          %v2415 = vld [vmem:[#allocation2 + $0x5b8] sm:$0xff]
          %v2416 = vld [vmem:[#allocation2 + $0x5c0] sm:$0xff]
          %v2417 = vld [vmem:[#allocation2 + $0x5c8] sm:$0xff]
          %v2418 = vld [vmem:[#allocation2 + $0x5d0] sm:$0xff]
          %v2419 = vld [vmem:[#allocation2 + $0x5d8] sm:$0xff]
          %v2420 = vld [vmem:[#allocation2 + $0x5e0] sm:$0xff]
          %v2421 = vld [vmem:[#allocation2 + $0x5e8] sm:$0xff]
          %v2422 = vld [vmem:[#allocation2 + $0x5f0] sm:$0xff]
          %v2423 = vld [vmem:[#allocation2 + $0x5f8] sm:$0xff]
          %v2424 = vld [vmem:[%s262] sm:$0x7]
          %v2426 = vlaneseq
          %v2427 = vshrl.u32 %v2426, 7
          %v2428 = vsub.s32 0, %v2427
          %v2429 = vrot.slane %v2424, %v2428
          %v2430 = vlaneseq
          %v2431 = vshrl.u32 %v2430, 7
          %v2432 = vsub.s32 1, %v2431
          %v2433 = vrot.slane %v2424, %v2432
          %v2434 = vlaneseq
          %v2435 = vshrl.u32 %v2434, 7
          %v2436 = vsub.s32 2, %v2435
          %v2437 = vrot.slane %v2424, %v2436
          %v2441 = vadd.f32 %v2232, %v2429
          %v2442 = vadd.f32 %v2233, %v2433
          %v2443 = vadd.f32 %v2234, %v2437
          %v2444 = vadd.f32 %v2235, %v2429
          %v2445 = vadd.f32 %v2236, %v2433
          %v2446 = vadd.f32 %v2237, %v2437
          %v2447 = vadd.f32 %v2238, %v2429
          %v2448 = vadd.f32 %v2239, %v2433
          %v2449 = vadd.f32 %v2240, %v2437
          %v2450 = vadd.f32 %v2241, %v2429
          %v2451 = vadd.f32 %v2242, %v2433
          %v2452 = vadd.f32 %v2243, %v2437
          %v2453 = vadd.f32 %v2244, %v2429
          %v2454 = vadd.f32 %v2245, %v2433
          %v2455 = vadd.f32 %v2246, %v2437
          %v2456 = vadd.f32 %v2247, %v2429
          %v2457 = vadd.f32 %v2248, %v2433
          %v2458 = vadd.f32 %v2249, %v2437
          %v2459 = vadd.f32 %v2250, %v2429
          %v2460 = vadd.f32 %v2251, %v2433
          %v2461 = vadd.f32 %v2252, %v2437
          %v2462 = vadd.f32 %v2253, %v2429
          %v2463 = vadd.f32 %v2254, %v2433
          %v2464 = vadd.f32 %v2255, %v2437
          %v2465 = vadd.f32 %v2256, %v2429
          %v2466 = vadd.f32 %v2257, %v2433
          %v2467 = vadd.f32 %v2258, %v2437
          %v2468 = vadd.f32 %v2259, %v2429
          %v2469 = vadd.f32 %v2260, %v2433
          %v2470 = vadd.f32 %v2261, %v2437
          %v2471 = vadd.f32 %v2262, %v2429
          %v2472 = vadd.f32 %v2263, %v2433
          %v2473 = vadd.f32 %v2264, %v2437
          %v2474 = vadd.f32 %v2265, %v2429
          %v2475 = vadd.f32 %v2266, %v2433
          %v2476 = vadd.f32 %v2267, %v2437
          %v2477 = vadd.f32 %v2268, %v2429
          %v2478 = vadd.f32 %v2269, %v2433
          %v2479 = vadd.f32 %v2270, %v2437
          %v2480 = vadd.f32 %v2271, %v2429
          %v2481 = vadd.f32 %v2272, %v2433
          %v2482 = vadd.f32 %v2273, %v2437
          %v2483 = vadd.f32 %v2274, %v2429
          %v2484 = vadd.f32 %v2275, %v2433
          %v2485 = vadd.f32 %v2276, %v2437
          %v2486 = vadd.f32 %v2277, %v2429
          %v2487 = vadd.f32 %v2278, %v2433
          %v2488 = vadd.f32 %v2279, %v2437
          %v2489 = vadd.f32 %v2280, %v2429
          %v2490 = vadd.f32 %v2281, %v2433
          %v2491 = vadd.f32 %v2282, %v2437
          %v2492 = vadd.f32 %v2283, %v2429
          %v2493 = vadd.f32 %v2284, %v2433
          %v2494 = vadd.f32 %v2285, %v2437
          %v2495 = vadd.f32 %v2286, %v2429
          %v2496 = vadd.f32 %v2287, %v2433
          %v2497 = vadd.f32 %v2288, %v2437
          %v2498 = vadd.f32 %v2289, %v2429
          %v2499 = vadd.f32 %v2290, %v2433
          %v2500 = vadd.f32 %v2291, %v2437
          %v2501 = vadd.f32 %v2292, %v2429
          %v2502 = vadd.f32 %v2293, %v2433
          %v2503 = vadd.f32 %v2294, %v2437
          %v2504 = vadd.f32 %v2295, %v2429
          %v2505 = vadd.f32 %v2296, %v2433
          %v2506 = vadd.f32 %v2297, %v2437
          %v2507 = vadd.f32 %v2298, %v2429
          %v2508 = vadd.f32 %v2299, %v2433
          %v2509 = vadd.f32 %v2300, %v2437
          %v2510 = vadd.f32 %v2301, %v2429
          %v2511 = vadd.f32 %v2302, %v2433
          %v2512 = vadd.f32 %v2303, %v2437
          %v2513 = vadd.f32 %v2304, %v2429
          %v2514 = vadd.f32 %v2305, %v2433
          %v2515 = vadd.f32 %v2306, %v2437
          %v2516 = vadd.f32 %v2307, %v2429
          %v2517 = vadd.f32 %v2308, %v2433
          %v2518 = vadd.f32 %v2309, %v2437
          %v2519 = vadd.f32 %v2310, %v2429
          %v2520 = vadd.f32 %v2311, %v2433
          %v2521 = vadd.f32 %v2312, %v2437
          %v2522 = vadd.f32 %v2313, %v2429
          %v2523 = vadd.f32 %v2314, %v2433
          %v2524 = vadd.f32 %v2315, %v2437
          %v2525 = vadd.f32 %v2316, %v2429
          %v2526 = vadd.f32 %v2317, %v2433
          %v2527 = vadd.f32 %v2318, %v2437
          %v2528 = vadd.f32 %v2319, %v2429
          %v2529 = vadd.f32 %v2320, %v2433
          %v2530 = vadd.f32 %v2321, %v2437
          %v2531 = vadd.f32 %v2322, %v2429
          %v2532 = vadd.f32 %v2323, %v2433
          %v2533 = vadd.f32 %v2324, %v2437
          %v2534 = vadd.f32 %v2325, %v2429
          %v2535 = vadd.f32 %v2326, %v2433
          %v2536 = vadd.f32 %v2327, %v2437
          %v2537 = vadd.f32 %v2328, %v2429
          %v2538 = vadd.f32 %v2329, %v2433
          %v2539 = vadd.f32 %v2330, %v2437
          %v2540 = vadd.f32 %v2331, %v2429
          %v2541 = vadd.f32 %v2332, %v2433
          %v2542 = vadd.f32 %v2333, %v2437
          %v2543 = vadd.f32 %v2334, %v2429
          %v2544 = vadd.f32 %v2335, %v2433
          %v2545 = vadd.f32 %v2336, %v2437
          %v2546 = vadd.f32 %v2337, %v2429
          %v2547 = vadd.f32 %v2338, %v2433
          %v2548 = vadd.f32 %v2339, %v2437
          %v2549 = vadd.f32 %v2340, %v2429
          %v2550 = vadd.f32 %v2341, %v2433
          %v2551 = vadd.f32 %v2342, %v2437
          %v2552 = vadd.f32 %v2343, %v2429
          %v2553 = vadd.f32 %v2344, %v2433
          %v2554 = vadd.f32 %v2345, %v2437
          %v2555 = vadd.f32 %v2346, %v2429
          %v2556 = vadd.f32 %v2347, %v2433
          %v2557 = vadd.f32 %v2348, %v2437
          %v2558 = vadd.f32 %v2349, %v2429
          %v2559 = vadd.f32 %v2350, %v2433
          %v2560 = vadd.f32 %v2351, %v2437
          %v2561 = vadd.f32 %v2352, %v2429
          %v2562 = vadd.f32 %v2353, %v2433
          %v2563 = vadd.f32 %v2354, %v2437
          %v2564 = vadd.f32 %v2355, %v2429
          %v2565 = vadd.f32 %v2356, %v2433
          %v2566 = vadd.f32 %v2357, %v2437
          %v2567 = vadd.f32 %v2358, %v2429
          %v2568 = vadd.f32 %v2359, %v2433
          %v2569 = vadd.f32 %v2360, %v2437
          %v2570 = vadd.f32 %v2361, %v2429
          %v2571 = vadd.f32 %v2362, %v2433
          %v2572 = vadd.f32 %v2363, %v2437
          %v2573 = vadd.f32 %v2364, %v2429
          %v2574 = vadd.f32 %v2365, %v2433
          %v2575 = vadd.f32 %v2366, %v2437
          %v2576 = vadd.f32 %v2367, %v2429
          %v2577 = vadd.f32 %v2368, %v2433
          %v2578 = vadd.f32 %v2369, %v2437
          %v2579 = vadd.f32 %v2370, %v2429
          %v2580 = vadd.f32 %v2371, %v2433
          %v2581 = vadd.f32 %v2372, %v2437
          %v2582 = vadd.f32 %v2373, %v2429
          %v2583 = vadd.f32 %v2374, %v2433
          %v2584 = vadd.f32 %v2375, %v2437
          %v2585 = vadd.f32 %v2376, %v2429
          %v2586 = vadd.f32 %v2377, %v2433
          %v2587 = vadd.f32 %v2378, %v2437
          %v2588 = vadd.f32 %v2379, %v2429
          %v2589 = vadd.f32 %v2380, %v2433
          %v2590 = vadd.f32 %v2381, %v2437
          %v2591 = vadd.f32 %v2382, %v2429
          %v2592 = vadd.f32 %v2383, %v2433
          %v2593 = vadd.f32 %v2384, %v2437
          %v2594 = vadd.f32 %v2385, %v2429
          %v2595 = vadd.f32 %v2386, %v2433
          %v2596 = vadd.f32 %v2387, %v2437
          %v2597 = vadd.f32 %v2388, %v2429
          %v2598 = vadd.f32 %v2389, %v2433
          %v2599 = vadd.f32 %v2390, %v2437
          %v2600 = vadd.f32 %v2391, %v2429
          %v2601 = vadd.f32 %v2392, %v2433
          %v2602 = vadd.f32 %v2393, %v2437
          %v2603 = vadd.f32 %v2394, %v2429
          %v2604 = vadd.f32 %v2395, %v2433
          %v2605 = vadd.f32 %v2396, %v2437
          %v2606 = vadd.f32 %v2397, %v2429
          %v2607 = vadd.f32 %v2398, %v2433
          %v2608 = vadd.f32 %v2399, %v2437
          %v2609 = vadd.f32 %v2400, %v2429
          %v2610 = vadd.f32 %v2401, %v2433
          %v2611 = vadd.f32 %v2402, %v2437
          %v2612 = vadd.f32 %v2403, %v2429
          %v2613 = vadd.f32 %v2404, %v2433
          %v2614 = vadd.f32 %v2405, %v2437
          %v2615 = vadd.f32 %v2406, %v2429
          %v2616 = vadd.f32 %v2407, %v2433
          %v2617 = vadd.f32 %v2408, %v2437
          %v2618 = vadd.f32 %v2409, %v2429
          %v2619 = vadd.f32 %v2410, %v2433
          %v2620 = vadd.f32 %v2411, %v2437
          %v2621 = vadd.f32 %v2412, %v2429
          %v2622 = vadd.f32 %v2413, %v2433
          %v2623 = vadd.f32 %v2414, %v2437
          %v2624 = vadd.f32 %v2415, %v2429
          %v2625 = vadd.f32 %v2416, %v2433
          %v2626 = vadd.f32 %v2417, %v2437
          %v2627 = vadd.f32 %v2418, %v2429
          %v2628 = vadd.f32 %v2419, %v2433
          %v2629 = vadd.f32 %v2420, %v2437
          %v2630 = vadd.f32 %v2421, %v2429
          %v2631 = vadd.f32 %v2422, %v2433
          %v2632 = vadd.f32 %v2423, %v2437
          %v2633 = vpack.c.bf16 %v2444, %v2441
          %v2634 = vpack.c.bf16 %v2445, %v2442
          %v2635 = vpack.c.bf16 %v2446, %v2443
          %v2636 = vpack.c.bf16 %v2450, %v2447
          %v2637 = vpack.c.bf16 %v2451, %v2448
          %v2638 = vpack.c.bf16 %v2452, %v2449
          %v2639 = vpack.c.bf16 %v2456, %v2453
          %v2640 = vpack.c.bf16 %v2457, %v2454
          %v2641 = vpack.c.bf16 %v2458, %v2455
          %v2642 = vpack.c.bf16 %v2462, %v2459
          %v2643 = vpack.c.bf16 %v2463, %v2460
          %v2644 = vpack.c.bf16 %v2464, %v2461
          %v2645 = vpack.c.bf16 %v2468, %v2465
          %v2646 = vpack.c.bf16 %v2469, %v2466
          %v2647 = vpack.c.bf16 %v2470, %v2467
          %v2648 = vpack.c.bf16 %v2474, %v2471
          %v2649 = vpack.c.bf16 %v2475, %v2472
          %v2650 = vpack.c.bf16 %v2476, %v2473
          %v2651 = vpack.c.bf16 %v2480, %v2477
          %v2652 = vpack.c.bf16 %v2481, %v2478
          %v2653 = vpack.c.bf16 %v2482, %v2479
          %v2654 = vpack.c.bf16 %v2486, %v2483
          %v2655 = vpack.c.bf16 %v2487, %v2484
          %v2656 = vpack.c.bf16 %v2488, %v2485
          %v2657 = vpack.c.bf16 %v2492, %v2489
          %v2658 = vpack.c.bf16 %v2493, %v2490
          %v2659 = vpack.c.bf16 %v2494, %v2491
          %v2660 = vpack.c.bf16 %v2498, %v2495
          %v2661 = vpack.c.bf16 %v2499, %v2496
          %v2662 = vpack.c.bf16 %v2500, %v2497
          %v2663 = vpack.c.bf16 %v2504, %v2501
          %v2664 = vpack.c.bf16 %v2505, %v2502
          %v2665 = vpack.c.bf16 %v2506, %v2503
          %v2666 = vpack.c.bf16 %v2510, %v2507
          %v2667 = vpack.c.bf16 %v2511, %v2508
          %v2668 = vpack.c.bf16 %v2512, %v2509
          %v2669 = vpack.c.bf16 %v2516, %v2513
          %v2670 = vpack.c.bf16 %v2517, %v2514
          %v2671 = vpack.c.bf16 %v2518, %v2515
          %v2672 = vpack.c.bf16 %v2522, %v2519
          %v2673 = vpack.c.bf16 %v2523, %v2520
          %v2674 = vpack.c.bf16 %v2524, %v2521
          %v2675 = vpack.c.bf16 %v2528, %v2525
          %v2676 = vpack.c.bf16 %v2529, %v2526
          %v2677 = vpack.c.bf16 %v2530, %v2527
          %v2678 = vpack.c.bf16 %v2534, %v2531
          %v2679 = vpack.c.bf16 %v2535, %v2532
          %v2680 = vpack.c.bf16 %v2536, %v2533
          %v2681 = vpack.c.bf16 %v2540, %v2537
          %v2682 = vpack.c.bf16 %v2541, %v2538
          %v2683 = vpack.c.bf16 %v2542, %v2539
          %v2684 = vpack.c.bf16 %v2546, %v2543
          %v2685 = vpack.c.bf16 %v2547, %v2544
          %v2686 = vpack.c.bf16 %v2548, %v2545
          %v2687 = vpack.c.bf16 %v2552, %v2549
          %v2688 = vpack.c.bf16 %v2553, %v2550
          %v2689 = vpack.c.bf16 %v2554, %v2551
          %v2690 = vpack.c.bf16 %v2558, %v2555
          %v2691 = vpack.c.bf16 %v2559, %v2556
          %v2692 = vpack.c.bf16 %v2560, %v2557
          %v2693 = vpack.c.bf16 %v2564, %v2561
          %v2694 = vpack.c.bf16 %v2565, %v2562
          %v2695 = vpack.c.bf16 %v2566, %v2563
          %v2696 = vpack.c.bf16 %v2570, %v2567
          %v2697 = vpack.c.bf16 %v2571, %v2568
          %v2698 = vpack.c.bf16 %v2572, %v2569
          %v2699 = vpack.c.bf16 %v2576, %v2573
          %v2700 = vpack.c.bf16 %v2577, %v2574
          %v2701 = vpack.c.bf16 %v2578, %v2575
          %v2702 = vpack.c.bf16 %v2582, %v2579
          %v2703 = vpack.c.bf16 %v2583, %v2580
          %v2704 = vpack.c.bf16 %v2584, %v2581
          %v2705 = vpack.c.bf16 %v2588, %v2585
          %v2706 = vpack.c.bf16 %v2589, %v2586
          %v2707 = vpack.c.bf16 %v2590, %v2587
          %v2708 = vpack.c.bf16 %v2594, %v2591
          %v2709 = vpack.c.bf16 %v2595, %v2592
          %v2710 = vpack.c.bf16 %v2596, %v2593
          %v2711 = vpack.c.bf16 %v2600, %v2597
          %v2712 = vpack.c.bf16 %v2601, %v2598
          %v2713 = vpack.c.bf16 %v2602, %v2599
          %v2714 = vpack.c.bf16 %v2606, %v2603
          %v2715 = vpack.c.bf16 %v2607, %v2604
          %v2716 = vpack.c.bf16 %v2608, %v2605
          %v2717 = vpack.c.bf16 %v2612, %v2609
          %v2718 = vpack.c.bf16 %v2613, %v2610
          %v2719 = vpack.c.bf16 %v2614, %v2611
          %v2720 = vpack.c.bf16 %v2618, %v2615
          %v2721 = vpack.c.bf16 %v2619, %v2616
          %v2722 = vpack.c.bf16 %v2620, %v2617
          %v2723 = vpack.c.bf16 %v2624, %v2621
          %v2724 = vpack.c.bf16 %v2625, %v2622
          %v2725 = vpack.c.bf16 %v2626, %v2623
          %v2726 = vpack.c.bf16 %v2630, %v2627
          %v2727 = vpack.c.bf16 %v2631, %v2628
          %v2728 = vpack.c.bf16 %v2632, %v2629
          %v2825 = vunpack.c.l.b16 %v2633
          %v2826 = vunpack.c.l.b16 %v2634
          %v2827 = vunpack.c.l.b16 %v2635
          %v2828 = vunpack.c.h.b16 %v2633
          %v2829 = vunpack.c.h.b16 %v2634
          %v2830 = vunpack.c.h.b16 %v2635
          %v2831 = vunpack.c.l.b16 %v2636
          %v2832 = vunpack.c.l.b16 %v2637
          %v2833 = vunpack.c.l.b16 %v2638
          %v2834 = vunpack.c.h.b16 %v2636
          %v2835 = vunpack.c.h.b16 %v2637
          %v2836 = vunpack.c.h.b16 %v2638
          %v2837 = vunpack.c.l.b16 %v2639
          %v2838 = vunpack.c.l.b16 %v2640
          %v2839 = vunpack.c.l.b16 %v2641
          %v2840 = vunpack.c.h.b16 %v2639
          %v2841 = vunpack.c.h.b16 %v2640
          %v2842 = vunpack.c.h.b16 %v2641
          %v2843 = vunpack.c.l.b16 %v2642
          %v2844 = vunpack.c.l.b16 %v2643
          %v2845 = vunpack.c.l.b16 %v2644
          %v2846 = vunpack.c.h.b16 %v2642
          %v2847 = vunpack.c.h.b16 %v2643
          %v2848 = vunpack.c.h.b16 %v2644
          %v2849 = vunpack.c.l.b16 %v2645
          %v2850 = vunpack.c.l.b16 %v2646
          %v2851 = vunpack.c.l.b16 %v2647
          %v2852 = vunpack.c.h.b16 %v2645
          %v2853 = vunpack.c.h.b16 %v2646
          %v2854 = vunpack.c.h.b16 %v2647
          %v2855 = vunpack.c.l.b16 %v2648
          %v2856 = vunpack.c.l.b16 %v2649
          %v2857 = vunpack.c.l.b16 %v2650
          %v2858 = vunpack.c.h.b16 %v2648
          %v2859 = vunpack.c.h.b16 %v2649
          %v2860 = vunpack.c.h.b16 %v2650
          %v2861 = vunpack.c.l.b16 %v2651
          %v2862 = vunpack.c.l.b16 %v2652
          %v2863 = vunpack.c.l.b16 %v2653
          %v2864 = vunpack.c.h.b16 %v2651
          %v2865 = vunpack.c.h.b16 %v2652
          %v2866 = vunpack.c.h.b16 %v2653
          %v2867 = vunpack.c.l.b16 %v2654
          %v2868 = vunpack.c.l.b16 %v2655
          %v2869 = vunpack.c.l.b16 %v2656
          %v2870 = vunpack.c.h.b16 %v2654
          %v2871 = vunpack.c.h.b16 %v2655
          %v2872 = vunpack.c.h.b16 %v2656
          %v2873 = vunpack.c.l.b16 %v2657
          %v2874 = vunpack.c.l.b16 %v2658
          %v2875 = vunpack.c.l.b16 %v2659
          %v2876 = vunpack.c.h.b16 %v2657
          %v2877 = vunpack.c.h.b16 %v2658
          %v2878 = vunpack.c.h.b16 %v2659
          %v2879 = vunpack.c.l.b16 %v2660
          %v2880 = vunpack.c.l.b16 %v2661
          %v2881 = vunpack.c.l.b16 %v2662
          %v2882 = vunpack.c.h.b16 %v2660
          %v2883 = vunpack.c.h.b16 %v2661
          %v2884 = vunpack.c.h.b16 %v2662
          %v2885 = vunpack.c.l.b16 %v2663
          %v2886 = vunpack.c.l.b16 %v2664
          %v2887 = vunpack.c.l.b16 %v2665
          %v2888 = vunpack.c.h.b16 %v2663
          %v2889 = vunpack.c.h.b16 %v2664
          %v2890 = vunpack.c.h.b16 %v2665
          %v2891 = vunpack.c.l.b16 %v2666
          %v2892 = vunpack.c.l.b16 %v2667
          %v2893 = vunpack.c.l.b16 %v2668
          %v2894 = vunpack.c.h.b16 %v2666
          %v2895 = vunpack.c.h.b16 %v2667
          %v2896 = vunpack.c.h.b16 %v2668
          %v2897 = vunpack.c.l.b16 %v2669
          %v2898 = vunpack.c.l.b16 %v2670
          %v2899 = vunpack.c.l.b16 %v2671
          %v2900 = vunpack.c.h.b16 %v2669
          %v2901 = vunpack.c.h.b16 %v2670
          %v2902 = vunpack.c.h.b16 %v2671
          %v2903 = vunpack.c.l.b16 %v2672
          %v2904 = vunpack.c.l.b16 %v2673
          %v2905 = vunpack.c.l.b16 %v2674
          %v2906 = vunpack.c.h.b16 %v2672
          %v2907 = vunpack.c.h.b16 %v2673
          %v2908 = vunpack.c.h.b16 %v2674
          %v2909 = vunpack.c.l.b16 %v2675
          %v2910 = vunpack.c.l.b16 %v2676
          %v2911 = vunpack.c.l.b16 %v2677
          %v2912 = vunpack.c.h.b16 %v2675
          %v2913 = vunpack.c.h.b16 %v2676
          %v2914 = vunpack.c.h.b16 %v2677
          %v2915 = vunpack.c.l.b16 %v2678
          %v2916 = vunpack.c.l.b16 %v2679
          %v2917 = vunpack.c.l.b16 %v2680
          %v2918 = vunpack.c.h.b16 %v2678
          %v2919 = vunpack.c.h.b16 %v2679
          %v2920 = vunpack.c.h.b16 %v2680
          %v2921 = vunpack.c.l.b16 %v2681
          %v2922 = vunpack.c.l.b16 %v2682
          %v2923 = vunpack.c.l.b16 %v2683
          %v2924 = vunpack.c.h.b16 %v2681
          %v2925 = vunpack.c.h.b16 %v2682
          %v2926 = vunpack.c.h.b16 %v2683
          %v2927 = vunpack.c.l.b16 %v2684
          %v2928 = vunpack.c.l.b16 %v2685
          %v2929 = vunpack.c.l.b16 %v2686
          %v2930 = vunpack.c.h.b16 %v2684
          %v2931 = vunpack.c.h.b16 %v2685
          %v2932 = vunpack.c.h.b16 %v2686
          %v2933 = vunpack.c.l.b16 %v2687
          %v2934 = vunpack.c.l.b16 %v2688
          %v2935 = vunpack.c.l.b16 %v2689
          %v2936 = vunpack.c.h.b16 %v2687
          %v2937 = vunpack.c.h.b16 %v2688
          %v2938 = vunpack.c.h.b16 %v2689
          %v2939 = vunpack.c.l.b16 %v2690
          %v2940 = vunpack.c.l.b16 %v2691
          %v2941 = vunpack.c.l.b16 %v2692
          %v2942 = vunpack.c.h.b16 %v2690
          %v2943 = vunpack.c.h.b16 %v2691
          %v2944 = vunpack.c.h.b16 %v2692
          %v2945 = vunpack.c.l.b16 %v2693
          %v2946 = vunpack.c.l.b16 %v2694
          %v2947 = vunpack.c.l.b16 %v2695
          %v2948 = vunpack.c.h.b16 %v2693
          %v2949 = vunpack.c.h.b16 %v2694
          %v2950 = vunpack.c.h.b16 %v2695
          %v2951 = vunpack.c.l.b16 %v2696
          %v2952 = vunpack.c.l.b16 %v2697
          %v2953 = vunpack.c.l.b16 %v2698
          %v2954 = vunpack.c.h.b16 %v2696
          %v2955 = vunpack.c.h.b16 %v2697
          %v2956 = vunpack.c.h.b16 %v2698
          %v2957 = vunpack.c.l.b16 %v2699
          %v2958 = vunpack.c.l.b16 %v2700
          %v2959 = vunpack.c.l.b16 %v2701
          %v2960 = vunpack.c.h.b16 %v2699
          %v2961 = vunpack.c.h.b16 %v2700
          %v2962 = vunpack.c.h.b16 %v2701
          %v2963 = vunpack.c.l.b16 %v2702
          %v2964 = vunpack.c.l.b16 %v2703
          %v2965 = vunpack.c.l.b16 %v2704
          %v2966 = vunpack.c.h.b16 %v2702
          %v2967 = vunpack.c.h.b16 %v2703
          %v2968 = vunpack.c.h.b16 %v2704
          %v2969 = vunpack.c.l.b16 %v2705
          %v2970 = vunpack.c.l.b16 %v2706
          %v2971 = vunpack.c.l.b16 %v2707
          %v2972 = vunpack.c.h.b16 %v2705
          %v2973 = vunpack.c.h.b16 %v2706
          %v2974 = vunpack.c.h.b16 %v2707
          %v2975 = vunpack.c.l.b16 %v2708
          %v2976 = vunpack.c.l.b16 %v2709
          %v2977 = vunpack.c.l.b16 %v2710
          %v2978 = vunpack.c.h.b16 %v2708
          %v2979 = vunpack.c.h.b16 %v2709
          %v2980 = vunpack.c.h.b16 %v2710
          %v2981 = vunpack.c.l.b16 %v2711
          %v2982 = vunpack.c.l.b16 %v2712
          %v2983 = vunpack.c.l.b16 %v2713
          %v2984 = vunpack.c.h.b16 %v2711
          %v2985 = vunpack.c.h.b16 %v2712
          %v2986 = vunpack.c.h.b16 %v2713
          %v2987 = vunpack.c.l.b16 %v2714
          %v2988 = vunpack.c.l.b16 %v2715
          %v2989 = vunpack.c.l.b16 %v2716
          %v2990 = vunpack.c.h.b16 %v2714
          %v2991 = vunpack.c.h.b16 %v2715
          %v2992 = vunpack.c.h.b16 %v2716
          %v2993 = vunpack.c.l.b16 %v2717
          %v2994 = vunpack.c.l.b16 %v2718
          %v2995 = vunpack.c.l.b16 %v2719
          %v2996 = vunpack.c.h.b16 %v2717
          %v2997 = vunpack.c.h.b16 %v2718
          %v2998 = vunpack.c.h.b16 %v2719
          %v2999 = vunpack.c.l.b16 %v2720
          %v3000 = vunpack.c.l.b16 %v2721
          %v3001 = vunpack.c.l.b16 %v2722
          %v3002 = vunpack.c.h.b16 %v2720
          %v3003 = vunpack.c.h.b16 %v2721
          %v3004 = vunpack.c.h.b16 %v2722
          %v3005 = vunpack.c.l.b16 %v2723
          %v3006 = vunpack.c.l.b16 %v2724
          %v3007 = vunpack.c.l.b16 %v2725
          %v3008 = vunpack.c.h.b16 %v2723
          %v3009 = vunpack.c.h.b16 %v2724
          %v3010 = vunpack.c.h.b16 %v2725
          %v3011 = vunpack.c.l.b16 %v2726
          %v3012 = vunpack.c.l.b16 %v2727
          %v3013 = vunpack.c.l.b16 %v2728
          %v3014 = vunpack.c.h.b16 %v2726
          %v3015 = vunpack.c.h.b16 %v2727
          %v3016 = vunpack.c.h.b16 %v2728
          %v3017 = vpack.c.b16 %v2826, %v2825
          %v3018 = vpack.c.b16 %v2827, %v2827
          %v3019 = vpack.c.b16 %v2829, %v2828
          %v3020 = vpack.c.b16 %v2830, %v2830
          %v3021 = vpack.c.b16 %v2832, %v2831
          %v3022 = vpack.c.b16 %v2833, %v2833
          %v3023 = vpack.c.b16 %v2835, %v2834
          %v3024 = vpack.c.b16 %v2836, %v2836
          %v3025 = vpack.c.b16 %v2838, %v2837
          %v3026 = vpack.c.b16 %v2839, %v2839
          %v3027 = vpack.c.b16 %v2841, %v2840
          %v3028 = vpack.c.b16 %v2842, %v2842
          %v3029 = vpack.c.b16 %v2844, %v2843
          %v3030 = vpack.c.b16 %v2845, %v2845
          %v3031 = vpack.c.b16 %v2847, %v2846
          %v3032 = vpack.c.b16 %v2848, %v2848
          %v3033 = vpack.c.b16 %v2850, %v2849
          %v3034 = vpack.c.b16 %v2851, %v2851
          %v3035 = vpack.c.b16 %v2853, %v2852
          %v3036 = vpack.c.b16 %v2854, %v2854
          %v3037 = vpack.c.b16 %v2856, %v2855
          %v3038 = vpack.c.b16 %v2857, %v2857
          %v3039 = vpack.c.b16 %v2859, %v2858
          %v3040 = vpack.c.b16 %v2860, %v2860
          %v3041 = vpack.c.b16 %v2862, %v2861
          %v3042 = vpack.c.b16 %v2863, %v2863
          %v3043 = vpack.c.b16 %v2865, %v2864
          %v3044 = vpack.c.b16 %v2866, %v2866
          %v3045 = vpack.c.b16 %v2868, %v2867
          %v3046 = vpack.c.b16 %v2869, %v2869
          %v3047 = vpack.c.b16 %v2871, %v2870
          %v3048 = vpack.c.b16 %v2872, %v2872
          %v3049 = vpack.c.b16 %v2874, %v2873
          %v3050 = vpack.c.b16 %v2875, %v2875
          %v3051 = vpack.c.b16 %v2877, %v2876
          %v3052 = vpack.c.b16 %v2878, %v2878
          %v3053 = vpack.c.b16 %v2880, %v2879
          %v3054 = vpack.c.b16 %v2881, %v2881
          %v3055 = vpack.c.b16 %v2883, %v2882
          %v3056 = vpack.c.b16 %v2884, %v2884
          %v3057 = vpack.c.b16 %v2886, %v2885
          %v3058 = vpack.c.b16 %v2887, %v2887
          %v3059 = vpack.c.b16 %v2889, %v2888
          %v3060 = vpack.c.b16 %v2890, %v2890
          %v3061 = vpack.c.b16 %v2892, %v2891
          %v3062 = vpack.c.b16 %v2893, %v2893
          %v3063 = vpack.c.b16 %v2895, %v2894
          %v3064 = vpack.c.b16 %v2896, %v2896
          %v3065 = vpack.c.b16 %v2898, %v2897
          %v3066 = vpack.c.b16 %v2899, %v2899
          %v3067 = vpack.c.b16 %v2901, %v2900
          %v3068 = vpack.c.b16 %v2902, %v2902
          %v3069 = vpack.c.b16 %v2904, %v2903
          %v3070 = vpack.c.b16 %v2905, %v2905
          %v3071 = vpack.c.b16 %v2907, %v2906
          %v3072 = vpack.c.b16 %v2908, %v2908
          %v3073 = vpack.c.b16 %v2910, %v2909
          %v3074 = vpack.c.b16 %v2911, %v2911
          %v3075 = vpack.c.b16 %v2913, %v2912
          %v3076 = vpack.c.b16 %v2914, %v2914
          %v3077 = vpack.c.b16 %v2916, %v2915
          %v3078 = vpack.c.b16 %v2917, %v2917
          %v3079 = vpack.c.b16 %v2919, %v2918
          %v3080 = vpack.c.b16 %v2920, %v2920
          %v3081 = vpack.c.b16 %v2922, %v2921
          %v3082 = vpack.c.b16 %v2923, %v2923
          %v3083 = vpack.c.b16 %v2925, %v2924
          %v3084 = vpack.c.b16 %v2926, %v2926
          %v3085 = vpack.c.b16 %v2928, %v2927
          %v3086 = vpack.c.b16 %v2929, %v2929
          %v3087 = vpack.c.b16 %v2931, %v2930
          %v3088 = vpack.c.b16 %v2932, %v2932
          %v3089 = vpack.c.b16 %v2934, %v2933
          %v3090 = vpack.c.b16 %v2935, %v2935
          %v3091 = vpack.c.b16 %v2937, %v2936
          %v3092 = vpack.c.b16 %v2938, %v2938
          %v3093 = vpack.c.b16 %v2940, %v2939
          %v3094 = vpack.c.b16 %v2941, %v2941
          %v3095 = vpack.c.b16 %v2943, %v2942
          %v3096 = vpack.c.b16 %v2944, %v2944
          %v3097 = vpack.c.b16 %v2946, %v2945
          %v3098 = vpack.c.b16 %v2947, %v2947
          %v3099 = vpack.c.b16 %v2949, %v2948
          %v3100 = vpack.c.b16 %v2950, %v2950
          %v3101 = vpack.c.b16 %v2952, %v2951
          %v3102 = vpack.c.b16 %v2953, %v2953
          %v3103 = vpack.c.b16 %v2955, %v2954
          %v3104 = vpack.c.b16 %v2956, %v2956
          %v3105 = vpack.c.b16 %v2958, %v2957
          %v3106 = vpack.c.b16 %v2959, %v2959
          %v3107 = vpack.c.b16 %v2961, %v2960
          %v3108 = vpack.c.b16 %v2962, %v2962
          %v3109 = vpack.c.b16 %v2964, %v2963
          %v3110 = vpack.c.b16 %v2965, %v2965
          %v3111 = vpack.c.b16 %v2967, %v2966
          %v3112 = vpack.c.b16 %v2968, %v2968
          %v3113 = vpack.c.b16 %v2970, %v2969
          %v3114 = vpack.c.b16 %v2971, %v2971
          %v3115 = vpack.c.b16 %v2973, %v2972
          %v3116 = vpack.c.b16 %v2974, %v2974
          %v3117 = vpack.c.b16 %v2976, %v2975
          %v3118 = vpack.c.b16 %v2977, %v2977
          %v3119 = vpack.c.b16 %v2979, %v2978
          %v3120 = vpack.c.b16 %v2980, %v2980
          %v3121 = vpack.c.b16 %v2982, %v2981
          %v3122 = vpack.c.b16 %v2983, %v2983
          %v3123 = vpack.c.b16 %v2985, %v2984
          %v3124 = vpack.c.b16 %v2986, %v2986
          %v3125 = vpack.c.b16 %v2988, %v2987
          %v3126 = vpack.c.b16 %v2989, %v2989
          %v3127 = vpack.c.b16 %v2991, %v2990
          %v3128 = vpack.c.b16 %v2992, %v2992
          %v3129 = vpack.c.b16 %v2994, %v2993
          %v3130 = vpack.c.b16 %v2995, %v2995
          %v3131 = vpack.c.b16 %v2997, %v2996
          %v3132 = vpack.c.b16 %v2998, %v2998
          %v3133 = vpack.c.b16 %v3000, %v2999
          %v3134 = vpack.c.b16 %v3001, %v3001
          %v3135 = vpack.c.b16 %v3003, %v3002
          %v3136 = vpack.c.b16 %v3004, %v3004
          %v3137 = vpack.c.b16 %v3006, %v3005
          %v3138 = vpack.c.b16 %v3007, %v3007
          %v3139 = vpack.c.b16 %v3009, %v3008
          %v3140 = vpack.c.b16 %v3010, %v3010
          %v3141 = vpack.c.b16 %v3012, %v3011
          %v3142 = vpack.c.b16 %v3013, %v3013
          %v3143 = vpack.c.b16 %v3015, %v3014
          %v3144 = vpack.c.b16 %v3016, %v3016
          %3273 = vst [vmem:[%s294] sm:$0xff] %v3017
          %3274 = vst [vmem:[%s294 + $0x8] sm:$0xf] %v3018
          %3275 = vst [vmem:[%s294 + $0xc] sm:$0xff] %v3019
          %3276 = vst [vmem:[%s294 + $0x14] sm:$0xf] %v3020
          %3277 = vst [vmem:[%s294 + $0x18] sm:$0xff] %v3021
          %3278 = vst [vmem:[%s294 + $0x20] sm:$0xf] %v3022
          %3279 = vst [vmem:[%s294 + $0x24] sm:$0xff] %v3023
          %3280 = vst [vmem:[%s294 + $0x2c] sm:$0xf] %v3024
          %3281 = vst [vmem:[%s294 + $0x30] sm:$0xff] %v3025
          %3282 = vst [vmem:[%s294 + $0x38] sm:$0xf] %v3026
          %3283 = vst [vmem:[%s294 + $0x3c] sm:$0xff] %v3027
          %3284 = vst [vmem:[%s294 + $0x44] sm:$0xf] %v3028
          %3285 = vst [vmem:[%s294 + $0x48] sm:$0xff] %v3029
          %3286 = vst [vmem:[%s294 + $0x50] sm:$0xf] %v3030
          %3287 = vst [vmem:[%s294 + $0x54] sm:$0xff] %v3031
          %3288 = vst [vmem:[%s294 + $0x5c] sm:$0xf] %v3032
          %3289 = vst [vmem:[%s294 + $0x60] sm:$0xff] %v3033
          %3290 = vst [vmem:[%s294 + $0x68] sm:$0xf] %v3034
          %3291 = vst [vmem:[%s294 + $0x6c] sm:$0xff] %v3035
          %3292 = vst [vmem:[%s294 + $0x74] sm:$0xf] %v3036
          %3293 = vst [vmem:[%s294 + $0x78] sm:$0xff] %v3037
          %3294 = vst [vmem:[%s294 + $0x80] sm:$0xf] %v3038
          %3295 = vst [vmem:[%s294 + $0x84] sm:$0xff] %v3039
          %3296 = vst [vmem:[%s294 + $0x8c] sm:$0xf] %v3040
          %3297 = vst [vmem:[%s294 + $0x90] sm:$0xff] %v3041
          %3298 = vst [vmem:[%s294 + $0x98] sm:$0xf] %v3042
          %3299 = vst [vmem:[%s294 + $0x9c] sm:$0xff] %v3043
          %3300 = vst [vmem:[%s294 + $0xa4] sm:$0xf] %v3044
          %3301 = vst [vmem:[%s294 + $0xa8] sm:$0xff] %v3045
          %3302 = vst [vmem:[%s294 + $0xb0] sm:$0xf] %v3046
          %3303 = vst [vmem:[%s294 + $0xb4] sm:$0xff] %v3047
          %3304 = vst [vmem:[%s294 + $0xbc] sm:$0xf] %v3048
          %3305 = vst [vmem:[%s294 + $0xc0] sm:$0xff] %v3049
          %3306 = vst [vmem:[%s294 + $0xc8] sm:$0xf] %v3050
          %3307 = vst [vmem:[%s294 + $0xcc] sm:$0xff] %v3051
          %3308 = vst [vmem:[%s294 + $0xd4] sm:$0xf] %v3052
          %3309 = vst [vmem:[%s294 + $0xd8] sm:$0xff] %v3053
          %3310 = vst [vmem:[%s294 + $0xe0] sm:$0xf] %v3054
          %3311 = vst [vmem:[%s294 + $0xe4] sm:$0xff] %v3055
          %3312 = vst [vmem:[%s294 + $0xec] sm:$0xf] %v3056
          %3313 = vst [vmem:[%s294 + $0xf0] sm:$0xff] %v3057
          %3314 = vst [vmem:[%s294 + $0xf8] sm:$0xf] %v3058
          %3315 = vst [vmem:[%s294 + $0xfc] sm:$0xff] %v3059
          %3316 = vst [vmem:[%s294 + $0x104] sm:$0xf] %v3060
          %3317 = vst [vmem:[%s294 + $0x108] sm:$0xff] %v3061
          %3318 = vst [vmem:[%s294 + $0x110] sm:$0xf] %v3062
          %3319 = vst [vmem:[%s294 + $0x114] sm:$0xff] %v3063
          %3320 = vst [vmem:[%s294 + $0x11c] sm:$0xf] %v3064
          %3321 = vst [vmem:[%s294 + $0x120] sm:$0xff] %v3065
          %3322 = vst [vmem:[%s294 + $0x128] sm:$0xf] %v3066
          %3323 = vst [vmem:[%s294 + $0x12c] sm:$0xff] %v3067
          %3324 = vst [vmem:[%s294 + $0x134] sm:$0xf] %v3068
          %3325 = vst [vmem:[%s294 + $0x138] sm:$0xff] %v3069
          %3326 = vst [vmem:[%s294 + $0x140] sm:$0xf] %v3070
          %3327 = vst [vmem:[%s294 + $0x144] sm:$0xff] %v3071
          %3328 = vst [vmem:[%s294 + $0x14c] sm:$0xf] %v3072
          %3329 = vst [vmem:[%s294 + $0x150] sm:$0xff] %v3073
          %3330 = vst [vmem:[%s294 + $0x158] sm:$0xf] %v3074
          %3331 = vst [vmem:[%s294 + $0x15c] sm:$0xff] %v3075
          %3332 = vst [vmem:[%s294 + $0x164] sm:$0xf] %v3076
          %3333 = vst [vmem:[%s294 + $0x168] sm:$0xff] %v3077
          %3334 = vst [vmem:[%s294 + $0x170] sm:$0xf] %v3078
          %3335 = vst [vmem:[%s294 + $0x174] sm:$0xff] %v3079
          %3336 = vst [vmem:[%s294 + $0x17c] sm:$0xf] %v3080
          %3337 = vst [vmem:[%s294 + $0x180] sm:$0xff] %v3081
          %3338 = vst [vmem:[%s294 + $0x188] sm:$0xf] %v3082
          %3339 = vst [vmem:[%s294 + $0x18c] sm:$0xff] %v3083
          %3340 = vst [vmem:[%s294 + $0x194] sm:$0xf] %v3084
          %3341 = vst [vmem:[%s294 + $0x198] sm:$0xff] %v3085
          %3342 = vst [vmem:[%s294 + $0x1a0] sm:$0xf] %v3086
          %3343 = vst [vmem:[%s294 + $0x1a4] sm:$0xff] %v3087
          %3344 = vst [vmem:[%s294 + $0x1ac] sm:$0xf] %v3088
          %3345 = vst [vmem:[%s294 + $0x1b0] sm:$0xff] %v3089
          %3346 = vst [vmem:[%s294 + $0x1b8] sm:$0xf] %v3090
          %3347 = vst [vmem:[%s294 + $0x1bc] sm:$0xff] %v3091
          %3348 = vst [vmem:[%s294 + $0x1c4] sm:$0xf] %v3092
          %3349 = vst [vmem:[%s294 + $0x1c8] sm:$0xff] %v3093
          %3350 = vst [vmem:[%s294 + $0x1d0] sm:$0xf] %v3094
          %3351 = vst [vmem:[%s294 + $0x1d4] sm:$0xff] %v3095
          %3352 = vst [vmem:[%s294 + $0x1dc] sm:$0xf] %v3096
          %3353 = vst [vmem:[%s294 + $0x1e0] sm:$0xff] %v3097
          %3354 = vst [vmem:[%s294 + $0x1e8] sm:$0xf] %v3098
          %3355 = vst [vmem:[%s294 + $0x1ec] sm:$0xff] %v3099
          %3356 = vst [vmem:[%s294 + $0x1f4] sm:$0xf] %v3100
          %3357 = vst [vmem:[%s294 + $0x1f8] sm:$0xff] %v3101
          %3358 = vst [vmem:[%s294 + $0x200] sm:$0xf] %v3102
          %3359 = vst [vmem:[%s294 + $0x204] sm:$0xff] %v3103
          %3360 = vst [vmem:[%s294 + $0x20c] sm:$0xf] %v3104
          %3361 = vst [vmem:[%s294 + $0x210] sm:$0xff] %v3105
          %3362 = vst [vmem:[%s294 + $0x218] sm:$0xf] %v3106
          %3363 = vst [vmem:[%s294 + $0x21c] sm:$0xff] %v3107
          %3364 = vst [vmem:[%s294 + $0x224] sm:$0xf] %v3108
          %3365 = vst [vmem:[%s294 + $0x228] sm:$0xff] %v3109
          %3366 = vst [vmem:[%s294 + $0x230] sm:$0xf] %v3110
          %3367 = vst [vmem:[%s294 + $0x234] sm:$0xff] %v3111
          %3368 = vst [vmem:[%s294 + $0x23c] sm:$0xf] %v3112
          %3369 = vst [vmem:[%s294 + $0x240] sm:$0xff] %v3113
          %3370 = vst [vmem:[%s294 + $0x248] sm:$0xf] %v3114
          %3371 = vst [vmem:[%s294 + $0x24c] sm:$0xff] %v3115
          %3372 = vst [vmem:[%s294 + $0x254] sm:$0xf] %v3116
          %3373 = vst [vmem:[%s294 + $0x258] sm:$0xff] %v3117
          %3374 = vst [vmem:[%s294 + $0x260] sm:$0xf] %v3118
          %3375 = vst [vmem:[%s294 + $0x264] sm:$0xff] %v3119
          %3376 = vst [vmem:[%s294 + $0x26c] sm:$0xf] %v3120
          %3377 = vst [vmem:[%s294 + $0x270] sm:$0xff] %v3121
          %3378 = vst [vmem:[%s294 + $0x278] sm:$0xf] %v3122
          %3379 = vst [vmem:[%s294 + $0x27c] sm:$0xff] %v3123
          %3380 = vst [vmem:[%s294 + $0x284] sm:$0xf] %v3124
          %3381 = vst [vmem:[%s294 + $0x288] sm:$0xff] %v3125
          %3382 = vst [vmem:[%s294 + $0x290] sm:$0xf] %v3126
          %3383 = vst [vmem:[%s294 + $0x294] sm:$0xff] %v3127
          %3384 = vst [vmem:[%s294 + $0x29c] sm:$0xf] %v3128
          %3385 = vst [vmem:[%s294 + $0x2a0] sm:$0xff] %v3129
          %3386 = vst [vmem:[%s294 + $0x2a8] sm:$0xf] %v3130
          %3387 = vst [vmem:[%s294 + $0x2ac] sm:$0xff] %v3131
          %3388 = vst [vmem:[%s294 + $0x2b4] sm:$0xf] %v3132
          %3389 = vst [vmem:[%s294 + $0x2b8] sm:$0xff] %v3133
          %3390 = vst [vmem:[%s294 + $0x2c0] sm:$0xf] %v3134
          %3391 = vst [vmem:[%s294 + $0x2c4] sm:$0xff] %v3135
          %3392 = vst [vmem:[%s294 + $0x2cc] sm:$0xf] %v3136
          %3393 = vst [vmem:[%s294 + $0x2d0] sm:$0xff] %v3137
          %3394 = vst [vmem:[%s294 + $0x2d8] sm:$0xf] %v3138
          %3395 = vst [vmem:[%s294 + $0x2dc] sm:$0xff] %v3139
          %3396 = vst [vmem:[%s294 + $0x2e4] sm:$0xf] %v3140
          %3397 = vst [vmem:[%s294 + $0x2e8] sm:$0xff] %v3141
          %3398 = vst [vmem:[%s294 + $0x2f0] sm:$0xf] %v3142
          %3399 = vst [vmem:[%s294 + $0x2f4] sm:$0xff] %v3143
          %3400 = vst [vmem:[%s294 + $0x2fc] sm:$0xf] %v3144
        $region52: #{tpu_custom_call.1} parent=31 // pred_fallthru
          _
        %s3401 = sand.u32 %s134, 1
        %s3402 = scalar_lea.sflag [#allocation5], %s3401
        %s3403 = sand.u32 %s134, 1
        %s3404 = smul.addr %s3403, 768
        %s3405 = scalar_lea.vmem [#allocation9], %s3404
        // Predicated region
        $region53: #{tpu_custom_call.1} parent=31 // pred_check
          %p3406 = pneg %p144
        $region54: #{tpu_custom_call.1} parent=31 // pred_check_branch
          %3408 = sbr.rel (%p3406) target = $region56
        $region55: #{tpu_custom_call.1} parent=31 // pred_region
          %s3409 = smul.u32 64, %s28
          %s3410 = smul.u32 3, %s29
          %s3412 = ssub.s32 12288, 12288
          %3413 = vsyncadd %s3402, %s3412
          %s3414 = smul.addr %s3409, 6
          %s3415 = sadd.s32 %s3410, %s3414
          %s3416 = smul.addr %s3415, 64
          %s3417 = scalar_lea.hbm %s3, %s3416
          %s3418 = sshll.u32 %s3405, 4
          %s3419 = int_to_ptr.vmem [resolvable:$true] %s3418
          %3424 = dma.vmem_to_hbm [thread:$0]  %s3419, 12288, %s3417, %s3402, 192, 384, 12
        $region56: #{tpu_custom_call.1} parent=31 // pred_fallthru
          _
      $region32: #{tpu_custom_call.1} parent=5 // pred_fallthru
        _
      %p3425 = scmp.le.s32.totalorder 2, %s18
      // Predicated region
      $region57: #{tpu_custom_call.1} parent=5 // pred_check
        %p3426 = pneg %p3425
      $region58: #{tpu_custom_call.1} parent=5 // pred_check_branch
        %3428 = sbr.rel (%p3426) target = $region60
      $region59: #{tpu_custom_call.1} parent=5 // pred_region
        %s3429 = ssub.s32 %s18, 2
        // Predicated region
        $region61: #{tpu_custom_call.1} parent=59 // pred_check
          %p3430 = pneg %p150
        $region62: #{tpu_custom_call.1} parent=59 // pred_check_branch
          %3432 = sbr.rel (%p3430) target = $region64
        $region63: #{tpu_custom_call.1} parent=59 // pred_region
          %s3433 = sand.u32 %s135, 1
          %s3434 = scalar_lea.sflag [#allocation5], %s3433
          %s3435 = sand.u32 %s135, 1
          %s3436 = smul.addr %s3435, 768
          %s3437 = scalar_lea.vmem [#allocation9], %s3436
          %3438 = dma.done %s3434, 12288
        $region64: #{tpu_custom_call.1} parent=59 // pred_fallthru
          _
      $region60: #{tpu_custom_call.1} parent=5 // pred_fallthru
        _
    $region6: #{tpu_custom_call.1} parent=1 // loop_footer
      %s22 = sadd.s32 1, %s18
    $region7: #{tpu_custom_call.1} parent=1 // loop_footer_branch
      %17 = sbr.rel target = $region3
    $region8: #{tpu_custom_call.1} parent=1 // loop_exit
      _
    %3439 = vsyncpa [#allocation4], 1
    %s3440 = scalar_lea.sflag [#allocation4], 1
    %3441 = vsyncpa %s3440, 1
    %3442 = vsyncpa [#allocation7], 1
    %s3443 = scalar_lea.sflag [#allocation7], 1
    %3444 = vsyncpa %s3443, 1
    %3445 = vsyncpa [#allocation5], 1
    %s3446 = scalar_lea.sflag [#allocation5], 1
    %3447 = vsyncpa %s3446, 1

</llo_original>
